<compile_context>
chip_gen: v7x
topology: tpu7x:2x2x1
jax: 0.10.0
libtpu: 0.0.40
codegen_flags: <defaults>
</compile_context>

<pallas_src>
import functools

import jax
import jax.numpy as jnp
from jax import lax
from jax.experimental import pallas as pl
from jax.experimental.pallas import tpu as pltpu

EPS = 1e-5
LANE = 128


# --------------------------------------------------------------------------------------
# small helpers (wrapper-side glue)
# --------------------------------------------------------------------------------------
def _round_up(x, m):
    return (x + m - 1) // m * m


def _pick_tile_h(H, W):
    """Largest divisor of H giving <= 512 output rows per tile, preferring >= 2 strips."""
    cands = [th for th in range(1, H + 1) if H % th == 0 and th * W <= 512]
    multi = [th for th in cands if H // th >= 2]
    if multi:
        return max(multi)
    return max(cands) if cands else 1


def _pack_weight(w_hwio, cin_p, cout_p, dtype):
    """HWIO (3,3,Cin,Cout) -> im2col layout (9*Cin_p, Cout_p), cast for the MXU."""
    kh, kw, cin, cout = w_hwio.shape
    w = jnp.pad(w_hwio, ((0, 0), (0, 0), (0, cin_p - cin), (0, cout_p - cout)))
    return w.reshape(kh * kw * cin_p, cout_p).astype(dtype)


def _halo_strips(x, tile_h, pad_value=None):
    """(N,H,W,C) -> overlapping halo strips (N, S, tile_h+2, W+2, C).

    pad_value: optional per-channel (1, C) border value (defaults to zeros)."""
    N, H, W, C = x.shape
    S = H // tile_h
    if pad_value is None:
        xp = jnp.pad(x, ((0, 0), (1, 1), (1, 1), (0, 0)))
    else:
        xp = jnp.broadcast_to(pad_value.reshape(1, 1, 1, C),
                              (N, H + 2, W + 2, C)).astype(x.dtype)
        xp = lax.dynamic_update_slice(xp, x, (0, 1, 1, 0))
    rows = (jnp.arange(S) * tile_h)[:, None] + jnp.arange(tile_h + 2)[None, :]
    return xp[:, rows]                                   # (N, S, tile_h+2, W+2, C)


# --------------------------------------------------------------------------------------
# kernel 1: 3x3 conv (+ optional fused BN+ReLU of the *previous* stage) + BN partials
# --------------------------------------------------------------------------------------
def _conv_stage_kernel(*refs, fuse_input_bn_relu, compute_dtype):
    """Refs (fused):     x, w, in_scale, in_shift, y, stats
       Refs (non-fused): x, w, y, stats

         x     : (1, 1, TH+2, W+2, Cin_p)  halo strip (border pre-filled by the wrapper)
         w     : (9*Cin_p, Cout_p)         im2col weights (MXU compute dtype)
         scale : (1, Cin_p)                previous stage's folded BN scale
         shift : (1, Cin_p)                previous stage's folded BN shift
         y     : (1, TH, W, Cout_p)        pre-BN conv output (f32)
         stats : (1, 1, 2, Cout_p)         per-strip [sum, sum_of_squares]
    """
    if fuse_input_bn_relu:
        x_ref, w_ref, scale_ref, shift_ref, y_ref, stats_ref = refs
    else:
        x_ref, w_ref, y_ref, stats_ref = refs

    _, _, thp2, wp, cin_p = x_ref.shape
    th, w_out = thp2 - 2, wp - 2
    cout_p = y_ref.shape[-1]

    xs = x_ref[0, 0, :, :, :]                            # (TH+2, W+2, Cin_p), f32
    if fuse_input_bn_relu:
        # Previous stage's BatchNorm + ReLU fused into this conv's input read (f32 VPU).
        xs = jnp.maximum(xs * scale_ref[...].reshape(1, 1, cin_p)
                         + shift_ref[...].reshape(1, 1, cin_p), 0.0)
    xs = xs.astype(compute_dtype)                        # bf16 operands for the MXU

    # im2col: concatenate the 9 shifted windows along K -> ONE MXU matmul (K = 9*Cin_p).
    cols = []
    for ky in range(3):
        for kx in range(3):
            cols.append(xs[ky:ky + th, kx:kx + w_out, :].reshape(th * w_out, cin_p))
    lhs = jnp.concatenate(cols, axis=-1)                 # (TH*W, 9*Cin_p)
    acc = jnp.dot(lhs, w_ref[...], preferred_element_type=jnp.float32)

    # Per-strip partial BatchNorm statistics (reduced across strips by the wrapper).
    stats_ref[0, 0, :, :] = jnp.concatenate(
        [jnp.sum(acc, axis=0, keepdims=True),
         jnp.sum(acc * acc, axis=0, keepdims=True)], axis=0)

    y_ref[...] = acc.reshape(1, th, w_out, cout_p).astype(y_ref.dtype)


def _conv_stage(x_strips, w_flat, in_scale, in_shift, *, compute_dtype):
    N, S, thp2, wp, cin_p = x_strips.shape
    th, w_out = thp2 - 2, wp - 2
    H = S * th
    cout_p = w_flat.shape[-1]
    fused = in_scale is not None

    kernel = functools.partial(_conv_stage_kernel,
                               fuse_input_bn_relu=fused,
                               compute_dtype=compute_dtype)

    in_specs = [
        pl.BlockSpec((1, 1, thp2, wp, cin_p), lambda n, s: (n, s, 0, 0, 0)),
        pl.BlockSpec((9 * cin_p, cout_p), lambda n, s: (0, 0)),   # weights stay resident
    ]
    args = [x_strips, w_flat]
    if fused:
        in_specs += [pl.BlockSpec((1, cin_p), lambda n, s: (0, 0)),
                     pl.BlockSpec((1, cin_p), lambda n, s: (0, 0))]
        args += [in_scale, in_shift]

    y, stats = pl.pallas_call(
        kernel,
        grid=(N, S),
        in_specs=in_specs,
        out_specs=[
            pl.BlockSpec((1, th, w_out, cout_p), lambda n, s: (n, s, 0, 0)),
            pl.BlockSpec((1, 1, 2, cout_p), lambda n, s: (n, s, 0, 0)),
        ],
        out_shape=[
            jax.ShapeDtypeStruct((N, H, w_out, cout_p), jnp.float32),
            jax.ShapeDtypeStruct((N, S, 2, cout_p), jnp.float32),
        ],
        compiler_params=pltpu.CompilerParams(
            dimension_semantics=("parallel", "parallel"),
            vmem_limit_bytes=32 * 1024 * 1024,
        ),
    )(*args)
    return y, stats


# --------------------------------------------------------------------------------------
# kernel 2: folded BatchNorm (scale/shift) + ReLU epilogue for the last stage
# --------------------------------------------------------------------------------------
def _bn_relu_kernel(y_ref, scale_ref, shift_ref, o_ref):
    c = y_ref.shape[-1]
    z = y_ref[...] * scale_ref[...].reshape(1, 1, 1, c) + shift_ref[...].reshape(1, 1, 1, c)
    o_ref[...] = jnp.maximum(z, 0.0).astype(o_ref.dtype)


def _bn_relu(y, scale, shift, *, tile_h):
    N, H, W, c_pad = y.shape
    S = H // tile_h
    return pl.pallas_call(
        _bn_relu_kernel,
        grid=(N, S),
        in_specs=[
            pl.BlockSpec((1, tile_h, W, c_pad), lambda n, s: (n, s, 0, 0)),
            pl.BlockSpec((1, c_pad), lambda n, s: (0, 0)),
            pl.BlockSpec((1, c_pad), lambda n, s: (0, 0)),
        ],
        out_specs=pl.BlockSpec((1, tile_h, W, c_pad), lambda n, s: (n, s, 0, 0)),
        out_shape=jax.ShapeDtypeStruct((N, H, W, c_pad), jnp.float32),
        compiler_params=pltpu.CompilerParams(
            dimension_semantics=("parallel", "parallel"),
            vmem_limit_bytes=32 * 1024 * 1024,
        ),
    )(y, scale, shift)


# --------------------------------------------------------------------------------------
# BatchNorm fold: per-strip partials -> per-channel (scale, shift)
# --------------------------------------------------------------------------------------
def _bn_fold(stats, gamma, beta, count, c_pad):
    s = jnp.sum(stats, axis=(0, 1))                      # (2, C_pad) f32
    mean = s[0] / count
    var = jnp.maximum(s[1] / count - mean * mean, 0.0)   # biased variance (PyTorch train mode)
    g = jnp.pad(gamma.astype(jnp.float32), (0, c_pad - gamma.shape[0]))
    b = jnp.pad(beta.astype(jnp.float32), (0, c_pad - beta.shape[0]))
    scale = g * lax.rsqrt(var + EPS)
    shift = b - mean * scale
    return scale.reshape(1, c_pad), shift.reshape(1, c_pad)


# --------------------------------------------------------------------------------------
# full ConvBlock forward
# --------------------------------------------------------------------------------------
def conv_block_forward(x_nchw, params, *, compute_dtype=jnp.bfloat16):
    """conv1 -> BN1 -> ReLU -> conv2 -> BN2 -> ReLU, training-mode BatchNorm."""
    N, Cin, H, W = x_nchw.shape
    Cout = params["w1"].shape[-1]
    cin_p, cout_p = _round_up(Cin, LANE), _round_up(Cout, LANE)
    tile_h = _pick_tile_h(H, W)
    count = N * H * W

    # glue: NCHW -> NHWC, channels padded to the 128-lane width (lane-dense tiles).
    x = jnp.transpose(x_nchw, (0, 2, 3, 1)).astype(jnp.float32)
    x = jnp.pad(x, ((0, 0), (0, 0), (0, 0), (0, cin_p - Cin)))

    # Weights -> im2col layout, cast for the MXU.  Conv biases are dropped: training-mode
    # BatchNorm subtracts the batch mean, which cancels a per-channel constant exactly.
    w1 = _pack_weight(params["w1"], cin_p, cout_p, compute_dtype)
    w2 = _pack_weight(params["w2"], cout_p, cout_p, compute_dtype)

    # ---- stage 1: conv1 + per-strip BN statistics ----
    y1, st1 = _conv_stage(_halo_strips(x, tile_h), w1, None, None,
                          compute_dtype=compute_dtype)
    scale1, shift1 = _bn_fold(st1, params["g1"], params["be1"], count, cout_p)

    # ---- stage 2: (BN1 + ReLU1 fused into the input read) conv2 + BN statistics ----
    # Border value that maps to exactly 0 after the fused BN1+ReLU1 (keeps zero-padding
    # semantics); where scale1 == 0 any value works, use 0.
    safe = jnp.where(scale1 != 0.0, scale1, 1.0)
    pad1 = jnp.where(scale1 != 0.0, -shift1 / safe, 0.0)
    y2, st2 = _conv_stage(_halo_strips(y1, tile_h, pad_value=pad1), w2, scale1, shift1,
                          compute_dtype=compute_dtype)
    scale2, shift2 = _bn_fold(st2, params["g2"], params["be2"], count, cout_p)

    # ---- BN2 + ReLU2 epilogue ----
    z = _bn_relu(y2, scale2, shift2, tile_h=tile_h)

    # glue: drop channel padding, NHWC -> NCHW.
    return jnp.transpose(z[..., :Cout], (0, 3, 1, 2)).astype(x_nchw.dtype)


# --------------------------------------------------------------------------------------
# parameters + pure-JAX reference (f32, faithful to the PyTorch module)
# --------------------------------------------------------------------------------------
def init_conv_block_params(key, in_filters, out_filters):
    k1, k2, k3, k4 = jax.random.split(key, 4)
    s1 = 1.0 / jnp.sqrt(in_filters * 9.0)
    s2 = 1.0 / jnp.sqrt(out_filters * 9.0)
    return {
        "w1": jax.random.uniform(k1, (3, 3, in_filters, out_filters), jnp.float32, -s1, s1),
        "b1": jax.random.uniform(k2, (out_filters,), jnp.float32, -s1, s1),
        "w2": jax.random.uniform(k3, (3, 3, out_filters, out_filters), jnp.float32, -s2, s2),
        "b2": jax.random.uniform(k4, (out_filters,), jnp.float32, -s2, s2),
        # BatchNorm2d defaults: weight=1, bias=0
        "g1": jnp.ones((out_filters,), jnp.float32),
        "be1": jnp.zeros((out_filters,), jnp.float32),
        "g2": jnp.ones((out_filters,), jnp.float32),
        "be2": jnp.zeros((out_filters,), jnp.float32),
    }


def _ref_stage(x, w, b, gamma, beta):
    y = lax.conv_general_dilated(
        x, w, window_strides=(1, 1), padding="SAME",
        dimension_numbers=("NHWC", "HWIO", "NHWC"),
        precision=lax.Precision.HIGHEST) + b
    mean = jnp.mean(y, axis=(0, 1, 2), keepdims=True)
    var = jnp.mean((y - mean) ** 2, axis=(0, 1, 2), keepdims=True)
    return jnp.maximum((y - mean) * lax.rsqrt(var + EPS) * gamma + beta, 0.0)


def conv_block_reference(x_nchw, params):
    x = jnp.transpose(x_nchw, (0, 2, 3, 1))
    x = _ref_stage(x, params["w1"], params["b1"], params["g1"], params["be1"])
    x = _ref_stage(x, params["w2"], params["b2"], params["g2"], params["be2"])
    return jnp.transpose(x, (0, 3, 1, 2))


if __name__ == "__main__":
    key = jax.random.PRNGKey(0)
    kx, kp = jax.random.split(key)

    N, Cin, Cout, H, W = 2, 4, 8, 16, 16
    x = jax.random.normal(kx, (N, Cin, H, W), jnp.float32)     # NCHW, like PyTorch
    params = init_conv_block_params(kp, Cin, Cout)

    ref = jax.block_until_ready(conv_block_reference(x, params))

    fwd_bf16 = jax.jit(functools.partial(conv_block_forward, compute_dtype=jnp.bfloat16))
    fwd_f32 = jax.jit(functools.partial(conv_block_forward, compute_dtype=jnp.float32))

    out_bf16 = jax.block_until_ready(fwd_bf16(x, params))       # default (v6e/v7x) path
    out_f32 = jax.block_until_ready(fwd_f32(x, params))         # tight numerical check

    assert out_bf16.shape == (N, Cout, H, W), out_bf16.shape
    assert out_f32.shape == (N, Cout, H, W), out_f32.shape

    err_f32 = float(jnp.max(jnp.abs(out_f32 - ref)))
    err_bf16 = float(jnp.max(jnp.abs(out_bf16 - ref)))
    assert err_f32 < 2e-3, f"f32 path max abs error too large: {err_f32}"
    assert err_bf16 < 1e-1, f"bf16 path max abs error too large: {err_bf16}"

    print("KERNEL_OK")
</pallas_src>

<mosaic_0001>
module attributes {stable_mosaic.version = 11 : i64} {
  func.func @_conv_stage_kernel(%arg0: i32, %arg1: i32, %arg2: memref<1x1x10x18x128xf32, #tpu.memory_space<vmem>>, %arg3: memref<1152x128xbf16, #tpu.memory_space<vmem>>, %arg4: memref<1x8x16x128xf32, #tpu.memory_space<vmem>>, %arg5: memref<1x1x2x128xf32, #tpu.memory_space<vmem>>) attributes {dimension_semantics = [#tpu.dimension_semantics<parallel>, #tpu.dimension_semantics<parallel>], iteration_bounds = array<i64: 2, 2>, scalar_prefetch = 0 : i64, scratch_operands = 0 : i64, tpu.core_type = #tpu.core_type<tc>, window_params = [{transform_indices = @transform_0, window_bounds = array<i64: 1, 1, 10, 18, 128>}, {pipeline_mode = #tpu.pipeline_mode<synchronous>, transform_indices = @transform_1, window_bounds = array<i64: 1152, 128>}, {transform_indices = @transform_2, window_bounds = array<i64: 1, 8, 16, 128>}, {transform_indices = @transform_3, window_bounds = array<i64: 1, 1, 2, 128>}]} {
    %c0 = arith.constant 0 : index
    %c0_0 = arith.constant 0 : index
    %c0_1 = arith.constant 0 : index
    %c0_2 = arith.constant 0 : index
    %c0_3 = arith.constant 0 : index
    %0 = vector.load %arg2[%c0, %c0_0, %c0_1, %c0_2, %c0_3] : memref<1x1x10x18x128xf32, #tpu.memory_space<vmem>>, vector<1x1x10x18x128xf32>
    %1 = vector.shape_cast %0 : vector<1x1x10x18x128xf32> to vector<10x18x128xf32>
    %2 = arith.truncf %1 : vector<10x18x128xf32> to vector<10x18x128xbf16>
    %3 = vector.extract_strided_slice %2 {offsets = [0, 0, 0], sizes = [8, 16, 128], strides = [1, 1, 1]} : vector<10x18x128xbf16> to vector<8x16x128xbf16>
    %4 = vector.shape_cast %3 : vector<8x16x128xbf16> to vector<128x128xbf16>
    %5 = vector.extract_strided_slice %2 {offsets = [0, 1, 0], sizes = [8, 16, 128], strides = [1, 1, 1]} : vector<10x18x128xbf16> to vector<8x16x128xbf16>
    %6 = vector.shape_cast %5 : vector<8x16x128xbf16> to vector<128x128xbf16>
    %7 = vector.extract_strided_slice %2 {offsets = [0, 2, 0], sizes = [8, 16, 128], strides = [1, 1, 1]} : vector<10x18x128xbf16> to vector<8x16x128xbf16>
    %8 = vector.shape_cast %7 : vector<8x16x128xbf16> to vector<128x128xbf16>
    %9 = vector.extract_strided_slice %2 {offsets = [1, 0, 0], sizes = [8, 16, 128], strides = [1, 1, 1]} : vector<10x18x128xbf16> to vector<8x16x128xbf16>
    %10 = vector.shape_cast %9 : vector<8x16x128xbf16> to vector<128x128xbf16>
    %11 = vector.extract_strided_slice %2 {offsets = [1, 1, 0], sizes = [8, 16, 128], strides = [1, 1, 1]} : vector<10x18x128xbf16> to vector<8x16x128xbf16>
    %12 = vector.shape_cast %11 : vector<8x16x128xbf16> to vector<128x128xbf16>
    %13 = vector.extract_strided_slice %2 {offsets = [1, 2, 0], sizes = [8, 16, 128], strides = [1, 1, 1]} : vector<10x18x128xbf16> to vector<8x16x128xbf16>
    %14 = vector.shape_cast %13 : vector<8x16x128xbf16> to vector<128x128xbf16>
    %15 = vector.extract_strided_slice %2 {offsets = [2, 0, 0], sizes = [8, 16, 128], strides = [1, 1, 1]} : vector<10x18x128xbf16> to vector<8x16x128xbf16>
    %16 = vector.shape_cast %15 : vector<8x16x128xbf16> to vector<128x128xbf16>
    %17 = vector.extract_strided_slice %2 {offsets = [2, 1, 0], sizes = [8, 16, 128], strides = [1, 1, 1]} : vector<10x18x128xbf16> to vector<8x16x128xbf16>
    %18 = vector.shape_cast %17 : vector<8x16x128xbf16> to vector<128x128xbf16>
    %19 = vector.extract_strided_slice %2 {offsets = [2, 2, 0], sizes = [8, 16, 128], strides = [1, 1, 1]} : vector<10x18x128xbf16> to vector<8x16x128xbf16>
    %20 = vector.shape_cast %19 : vector<8x16x128xbf16> to vector<128x128xbf16>
    %21 = tpu.concatenate %4, %6, %8, %10, %12, %14, %16, %18, %20 in 1 : vector<128x128xbf16>, vector<128x128xbf16>, vector<128x128xbf16>, vector<128x128xbf16>, vector<128x128xbf16>, vector<128x128xbf16>, vector<128x128xbf16>, vector<128x128xbf16>, vector<128x128xbf16> -> vector<128x1152xbf16>
    %c0_4 = arith.constant 0 : index
    %c0_5 = arith.constant 0 : index
    %22 = vector.load %arg3[%c0_4, %c0_5] : memref<1152x128xbf16, #tpu.memory_space<vmem>>, vector<1152x128xbf16>
    %cst = arith.constant dense<0.000000e+00> : vector<128x128xf32>
    %23 = tpu.matmul %21, %22, %cst {dimension_numbers = #tpu.dot_dimension_numbers<[1], [0], [0], [1], [0, 0, 1, 1], [], []>} : vector<128x1152xbf16>, vector<1152x128xbf16>, vector<128x128xf32> -> vector<128x128xf32>
    %cst_6 = arith.constant dense<0.000000e+00> : vector<128xf32>
    %24 = vector.multi_reduction <add>, %23, %cst_6 [0] : vector<128x128xf32> to vector<128xf32>
    %25 = vector.shape_cast %24 : vector<128xf32> to vector<1x128xf32>
    %26 = arith.mulf %23, %23 : vector<128x128xf32>
    %cst_7 = arith.constant dense<0.000000e+00> : vector<128xf32>
    %27 = vector.multi_reduction <add>, %26, %cst_7 [0] : vector<128x128xf32> to vector<128xf32>
    %28 = vector.shape_cast %27 : vector<128xf32> to vector<1x128xf32>
    %29 = tpu.concatenate %25, %28 in 0 : vector<1x128xf32>, vector<1x128xf32> -> vector<2x128xf32>
    %c0_8 = arith.constant 0 : index
    %c0_9 = arith.constant 0 : index
    %c0_10 = arith.constant 0 : index
    %c0_11 = arith.constant 0 : index
    %30 = vector.load %arg5[%c0_8, %c0_9, %c0_10, %c0_11] : memref<1x1x2x128xf32, #tpu.memory_space<vmem>>, vector<1x1x2x128xf32>
    %31 = vector.shape_cast %30 : vector<1x1x2x128xf32> to vector<2x128xf32>
    %32 = vector.shape_cast %29 : vector<2x128xf32> to vector<1x1x2x128xf32>
    tpu.vector_store %arg5[%c0_8, %c0_9, %c0_10, %c0_11], %32 {strides = array<i32>} : memref<1x1x2x128xf32, #tpu.memory_space<vmem>>, vector<1x1x2x128xf32>,
    %33 = vector.shape_cast %23 : vector<128x128xf32> to vector<1x8x16x128xf32>
    %c0_12 = arith.constant 0 : index
    %c0_13 = arith.constant 0 : index
    %c0_14 = arith.constant 0 : index
    %c0_15 = arith.constant 0 : index
    %34 = vector.load %arg4[%c0_12, %c0_13, %c0_14, %c0_15] : memref<1x8x16x128xf32, #tpu.memory_space<vmem>>, vector<1x8x16x128xf32>
    tpu.vector_store %arg4[%c0_12, %c0_13, %c0_14, %c0_15], %33 {strides = array<i32>} : memref<1x8x16x128xf32, #tpu.memory_space<vmem>>, vector<1x8x16x128xf32>,
    return
  }
  func.func @transform_0(%arg0: i32, %arg1: i32) -> (i32, i32, i32, i32, i32) {
    %c0_i32 = arith.constant 0 : i32
    %c0_i32_0 = arith.constant 0 : i32
    %c0_i32_1 = arith.constant 0 : i32
    %c0_i32_2 = arith.constant 0 : i32
    return %arg0, %arg1, %c0_i32, %c0_i32_0, %c0_i32_1 : i32, i32, i32, i32, i32
  }
  func.func @transform_1(%arg0: i32, %arg1: i32) -> (i32, i32) {
    %c0_i32 = arith.constant 0 : i32
    %c0_i32_0 = arith.constant 0 : i32
    %c0_i32_1 = arith.constant 0 : i32
    return %c0_i32, %c0_i32_0 : i32, i32
  }
  func.func @transform_2(%arg0: i32, %arg1: i32) -> (i32, i32, i32, i32) {
    %c0_i32 = arith.constant 0 : i32
    %c0_i32_0 = arith.constant 0 : i32
    %c0_i32_1 = arith.constant 0 : i32
    return %arg0, %arg1, %c0_i32, %c0_i32_0 : i32, i32, i32, i32
  }
  func.func @transform_3(%arg0: i32, %arg1: i32) -> (i32, i32, i32, i32) {
    %c0_i32 = arith.constant 0 : i32
    %c0_i32_0 = arith.constant 0 : i32
    %c0_i32_1 = arith.constant 0 : i32
    return %arg0, %arg1, %c0_i32, %c0_i32_0 : i32, i32, i32, i32
  }
}

module attributes {stable_mosaic.version = 11 : i64} {
  func.func @_conv_stage_kernel(%arg0: i32, %arg1: i32, %arg2: memref<1x1x10x18x128xf32, #tpu.memory_space<vmem>>, %arg3: memref<1152x128xbf16, #tpu.memory_space<vmem>>, %arg4: memref<1x128xf32, #tpu.memory_space<vmem>>, %arg5: memref<1x128xf32, #tpu.memory_space<vmem>>, %arg6: memref<1x8x16x128xf32, #tpu.memory_space<vmem>>, %arg7: memref<1x1x2x128xf32, #tpu.memory_space<vmem>>) attributes {dimension_semantics = [#tpu.dimension_semantics<parallel>, #tpu.dimension_semantics<parallel>], iteration_bounds = array<i64: 2, 2>, scalar_prefetch = 0 : i64, scratch_operands = 0 : i64, tpu.core_type = #tpu.core_type<tc>, window_params = [{transform_indices = @transform_0, window_bounds = array<i64: 1, 1, 10, 18, 128>}, {pipeline_mode = #tpu.pipeline_mode<synchronous>, transform_indices = @transform_1, window_bounds = array<i64: 1152, 128>}, {pipeline_mode = #tpu.pipeline_mode<synchronous>, transform_indices = @transform_2, window_bounds = array<i64: 1, 128>}, {pipeline_mode = #tpu.pipeline_mode<synchronous>, transform_indices = @transform_3, window_bounds = array<i64: 1, 128>}, {transform_indices = @transform_4, window_bounds = array<i64: 1, 8, 16, 128>}, {transform_indices = @transform_5, window_bounds = array<i64: 1, 1, 2, 128>}]} {
    %c0 = arith.constant 0 : index
    %c0_0 = arith.constant 0 : index
    %c0_1 = arith.constant 0 : index
    %c0_2 = arith.constant 0 : index
    %c0_3 = arith.constant 0 : index
    %0 = vector.load %arg2[%c0, %c0_0, %c0_1, %c0_2, %c0_3] : memref<1x1x10x18x128xf32, #tpu.memory_space<vmem>>, vector<1x1x10x18x128xf32>
    %1 = vector.shape_cast %0 : vector<1x1x10x18x128xf32> to vector<10x18x128xf32>
    %c0_4 = arith.constant 0 : index
    %c0_5 = arith.constant 0 : index
    %2 = vector.load %arg4[%c0_4, %c0_5] : memref<1x128xf32, #tpu.memory_space<vmem>>, vector<1x128xf32>
    %3 = vector.shape_cast %2 : vector<1x128xf32> to vector<1x1x128xf32>
    %4 = vector.broadcast %3 : vector<1x1x128xf32> to vector<10x18x128xf32>
    %5 = arith.mulf %1, %4 : vector<10x18x128xf32>
    %c0_6 = arith.constant 0 : index
    %c0_7 = arith.constant 0 : index
    %6 = vector.load %arg5[%c0_6, %c0_7] : memref<1x128xf32, #tpu.memory_space<vmem>>, vector<1x128xf32>
    %7 = vector.shape_cast %6 : vector<1x128xf32> to vector<1x1x128xf32>
    %8 = vector.broadcast %7 : vector<1x1x128xf32> to vector<10x18x128xf32>
    %9 = arith.addf %5, %8 : vector<10x18x128xf32>
    %cst = arith.constant 0.000000e+00 : f32
    %10 = vector.broadcast %cst : f32 to vector<10x18x128xf32>
    %11 = arith.maximumf %9, %10 : vector<10x18x128xf32>
    %12 = arith.truncf %11 : vector<10x18x128xf32> to vector<10x18x128xbf16>
    %13 = vector.extract_strided_slice %12 {offsets = [0, 0, 0], sizes = [8, 16, 128], strides = [1, 1, 1]} : vector<10x18x128xbf16> to vector<8x16x128xbf16>
    %14 = vector.shape_cast %13 : vector<8x16x128xbf16> to vector<128x128xbf16>
    %15 = vector.extract_strided_slice %12 {offsets = [0, 1, 0], sizes = [8, 16, 128], strides = [1, 1, 1]} : vector<10x18x128xbf16> to vector<8x16x128xbf16>
    %16 = vector.shape_cast %15 : vector<8x16x128xbf16> to vector<128x128xbf16>
    %17 = vector.extract_strided_slice %12 {offsets = [0, 2, 0], sizes = [8, 16, 128], strides = [1, 1, 1]} : vector<10x18x128xbf16> to vector<8x16x128xbf16>
    %18 = vector.shape_cast %17 : vector<8x16x128xbf16> to vector<128x128xbf16>
    %19 = vector.extract_strided_slice %12 {offsets = [1, 0, 0], sizes = [8, 16, 128], strides = [1, 1, 1]} : vector<10x18x128xbf16> to vector<8x16x128xbf16>
    %20 = vector.shape_cast %19 : vector<8x16x128xbf16> to vector<128x128xbf16>
    %21 = vector.extract_strided_slice %12 {offsets = [1, 1, 0], sizes = [8, 16, 128], strides = [1, 1, 1]} : vector<10x18x128xbf16> to vector<8x16x128xbf16>
    %22 = vector.shape_cast %21 : vector<8x16x128xbf16> to vector<128x128xbf16>
    %23 = vector.extract_strided_slice %12 {offsets = [1, 2, 0], sizes = [8, 16, 128], strides = [1, 1, 1]} : vector<10x18x128xbf16> to vector<8x16x128xbf16>
    %24 = vector.shape_cast %23 : vector<8x16x128xbf16> to vector<128x128xbf16>
    %25 = vector.extract_strided_slice %12 {offsets = [2, 0, 0], sizes = [8, 16, 128], strides = [1, 1, 1]} : vector<10x18x128xbf16> to vector<8x16x128xbf16>
    %26 = vector.shape_cast %25 : vector<8x16x128xbf16> to vector<128x128xbf16>
    %27 = vector.extract_strided_slice %12 {offsets = [2, 1, 0], sizes = [8, 16, 128], strides = [1, 1, 1]} : vector<10x18x128xbf16> to vector<8x16x128xbf16>
    %28 = vector.shape_cast %27 : vector<8x16x128xbf16> to vector<128x128xbf16>
    %29 = vector.extract_strided_slice %12 {offsets = [2, 2, 0], sizes = [8, 16, 128], strides = [1, 1, 1]} : vector<10x18x128xbf16> to vector<8x16x128xbf16>
    %30 = vector.shape_cast %29 : vector<8x16x128xbf16> to vector<128x128xbf16>
    %31 = tpu.concatenate %14, %16, %18, %20, %22, %24, %26, %28, %30 in 1 : vector<128x128xbf16>, vector<128x128xbf16>, vector<128x128xbf16>, vector<128x128xbf16>, vector<128x128xbf16>, vector<128x128xbf16>, vector<128x128xbf16>, vector<128x128xbf16>, vector<128x128xbf16> -> vector<128x1152xbf16>
    %c0_8 = arith.constant 0 : index
    %c0_9 = arith.constant 0 : index
    %32 = vector.load %arg3[%c0_8, %c0_9] : memref<1152x128xbf16, #tpu.memory_space<vmem>>, vector<1152x128xbf16>
    %cst_10 = arith.constant dense<0.000000e+00> : vector<128x128xf32>
    %33 = tpu.matmul %31, %32, %cst_10 {dimension_numbers = #tpu.dot_dimension_numbers<[1], [0], [0], [1], [0, 0, 1, 1], [], []>} : vector<128x1152xbf16>, vector<1152x128xbf16>, vector<128x128xf32> -> vector<128x128xf32>
    %cst_11 = arith.constant dense<0.000000e+00> : vector<128xf32>
    %34 = vector.multi_reduction <add>, %33, %cst_11 [0] : vector<128x128xf32> to vector<128xf32>
    %35 = vector.shape_cast %34 : vector<128xf32> to vector<1x128xf32>
    %36 = arith.mulf %33, %33 : vector<128x128xf32>
    %cst_12 = arith.constant dense<0.000000e+00> : vector<128xf32>
    %37 = vector.multi_reduction <add>, %36, %cst_12 [0] : vector<128x128xf32> to vector<128xf32>
    %38 = vector.shape_cast %37 : vector<128xf32> to vector<1x128xf32>
    %39 = tpu.concatenate %35, %38 in 0 : vector<1x128xf32>, vector<1x128xf32> -> vector<2x128xf32>
    %c0_13 = arith.constant 0 : index
    %c0_14 = arith.constant 0 : index
    %c0_15 = arith.constant 0 : index
    %c0_16 = arith.constant 0 : index
    %40 = vector.load %arg7[%c0_13, %c0_14, %c0_15, %c0_16] : memref<1x1x2x128xf32, #tpu.memory_space<vmem>>, vector<1x1x2x128xf32>
    %41 = vector.shape_cast %40 : vector<1x1x2x128xf32> to vector<2x128xf32>
    %42 = vector.shape_cast %39 : vector<2x128xf32> to vector<1x1x2x128xf32>
    tpu.vector_store %arg7[%c0_13, %c0_14, %c0_15, %c0_16], %42 {strides = array<i32>} : memref<1x1x2x128xf32, #tpu.memory_space<vmem>>, vector<1x1x2x128xf32>,
    %43 = vector.shape_cast %33 : vector<128x128xf32> to vector<1x8x16x128xf32>
    %c0_17 = arith.constant 0 : index
    %c0_18 = arith.constant 0 : index
    %c0_19 = arith.constant 0 : index
    %c0_20 = arith.constant 0 : index
    %44 = vector.load %arg6[%c0_17, %c0_18, %c0_19, %c0_20] : memref<1x8x16x128xf32, #tpu.memory_space<vmem>>, vector<1x8x16x128xf32>
    tpu.vector_store %arg6[%c0_17, %c0_18, %c0_19, %c0_20], %43 {strides = array<i32>} : memref<1x8x16x128xf32, #tpu.memory_space<vmem>>, vector<1x8x16x128xf32>,
    return
  }
  func.func @transform_0(%arg0: i32, %arg1: i32) -> (i32, i32, i32, i32, i32) {
    %c0_i32 = arith.constant 0 : i32
    %c0_i32_0 = arith.constant 0 : i32
    %c0_i32_1 = arith.constant 0 : i32
    %c0_i32_2 = arith.constant 0 : i32
    return %arg0, %arg1, %c0_i32, %c0_i32_0, %c0_i32_1 : i32, i32, i32, i32, i32
  }
  func.func @transform_1(%arg0: i32, %arg1: i32) -> (i32, i32) {
    %c0_i32 = arith.constant 0 : i32
    %c0_i32_0 = arith.constant 0 : i32
    %c0_i32_1 = arith.constant 0 : i32
    return %c0_i32, %c0_i32_0 : i32, i32
  }
  func.func @transform_2(%arg0: i32, %arg1: i32) -> (i32, i32) {
    %c0_i32 = arith.constant 0 : i32
    %c0_i32_0 = arith.constant 0 : i32
    %c0_i32_1 = arith.constant 0 : i32
    return %c0_i32, %c0_i32_0 : i32, i32
  }
  func.func @transform_3(%arg0: i32, %arg1: i32) -> (i32, i32) {
    %c0_i32 = arith.constant 0 : i32
    %c0_i32_0 = arith.constant 0 : i32
    %c0_i32_1 = arith.constant 0 : i32
    return %c0_i32, %c0_i32_0 : i32, i32
  }
  func.func @transform_4(%arg0: i32, %arg1: i32) -> (i32, i32, i32, i32) {
    %c0_i32 = arith.constant 0 : i32
    %c0_i32_0 = arith.constant 0 : i32
    %c0_i32_1 = arith.constant 0 : i32
    return %arg0, %arg1, %c0_i32, %c0_i32_0 : i32, i32, i32, i32
  }
  func.func @transform_5(%arg0: i32, %arg1: i32) -> (i32, i32, i32, i32) {
    %c0_i32 = arith.constant 0 : i32
    %c0_i32_0 = arith.constant 0 : i32
    %c0_i32_1 = arith.constant 0 : i32
    return %arg0, %arg1, %c0_i32, %c0_i32_0 : i32, i32, i32, i32
  }
}

module attributes {stable_mosaic.version = 11 : i64} {
  func.func @_bn_relu_kernel(%arg0: i32, %arg1: i32, %arg2: memref<1x8x16x128xf32, #tpu.memory_space<vmem>>, %arg3: memref<1x128xf32, #tpu.memory_space<vmem>>, %arg4: memref<1x128xf32, #tpu.memory_space<vmem>>, %arg5: memref<1x8x16x128xf32, #tpu.memory_space<vmem>>) attributes {dimension_semantics = [#tpu.dimension_semantics<parallel>, #tpu.dimension_semantics<parallel>], iteration_bounds = array<i64: 2, 2>, scalar_prefetch = 0 : i64, scratch_operands = 0 : i64, tpu.core_type = #tpu.core_type<tc>, window_params = [{transform_indices = @transform_0, window_bounds = array<i64: 1, 8, 16, 128>}, {pipeline_mode = #tpu.pipeline_mode<synchronous>, transform_indices = @transform_1, window_bounds = array<i64: 1, 128>}, {pipeline_mode = #tpu.pipeline_mode<synchronous>, transform_indices = @transform_2, window_bounds = array<i64: 1, 128>}, {transform_indices = @transform_3, window_bounds = array<i64: 1, 8, 16, 128>}]} {
    %c0 = arith.constant 0 : index
    %c0_0 = arith.constant 0 : index
    %c0_1 = arith.constant 0 : index
    %c0_2 = arith.constant 0 : index
    %0 = vector.load %arg2[%c0, %c0_0, %c0_1, %c0_2] : memref<1x8x16x128xf32, #tpu.memory_space<vmem>>, vector<1x8x16x128xf32>
    %c0_3 = arith.constant 0 : index
    %c0_4 = arith.constant 0 : index
    %1 = vector.load %arg3[%c0_3, %c0_4] : memref<1x128xf32, #tpu.memory_space<vmem>>, vector<1x128xf32>
    %2 = vector.shape_cast %1 : vector<1x128xf32> to vector<1x1x1x128xf32>
    %3 = vector.broadcast %2 : vector<1x1x1x128xf32> to vector<1x8x16x128xf32>
    %4 = arith.mulf %0, %3 : vector<1x8x16x128xf32>
    %c0_5 = arith.constant 0 : index
    %c0_6 = arith.constant 0 : index
    %5 = vector.load %arg4[%c0_5, %c0_6] : memref<1x128xf32, #tpu.memory_space<vmem>>, vector<1x128xf32>
    %6 = vector.shape_cast %5 : vector<1x128xf32> to vector<1x1x1x128xf32>
    %7 = vector.broadcast %6 : vector<1x1x1x128xf32> to vector<1x8x16x128xf32>
    %8 = arith.addf %4, %7 : vector<1x8x16x128xf32>
    %cst = arith.constant 0.000000e+00 : f32
    %9 = vector.broadcast %cst : f32 to vector<1x8x16x128xf32>
    %10 = arith.maximumf %8, %9 : vector<1x8x16x128xf32>
    %c0_7 = arith.constant 0 : index
    %c0_8 = arith.constant 0 : index
    %c0_9 = arith.constant 0 : index
    %c0_10 = arith.constant 0 : index
    %11 = vector.load %arg5[%c0_7, %c0_8, %c0_9, %c0_10] : memref<1x8x16x128xf32, #tpu.memory_space<vmem>>, vector<1x8x16x128xf32>
    tpu.vector_store %arg5[%c0_7, %c0_8, %c0_9, %c0_10], %10 {strides = array<i32>} : memref<1x8x16x128xf32, #tpu.memory_space<vmem>>, vector<1x8x16x128xf32>,
    return
  }
  func.func @transform_0(%arg0: i32, %arg1: i32) -> (i32, i32, i32, i32) {
    %c0_i32 = arith.constant 0 : i32
    %c0_i32_0 = arith.constant 0 : i32
    %c0_i32_1 = arith.constant 0 : i32
    return %arg0, %arg1, %c0_i32, %c0_i32_0 : i32, i32, i32, i32
  }
  func.func @transform_1(%arg0: i32, %arg1: i32) -> (i32, i32) {
    %c0_i32 = arith.constant 0 : i32
    %c0_i32_0 = arith.constant 0 : i32
    %c0_i32_1 = arith.constant 0 : i32
    return %c0_i32, %c0_i32_0 : i32, i32
  }
  func.func @transform_2(%arg0: i32, %arg1: i32) -> (i32, i32) {
    %c0_i32 = arith.constant 0 : i32
    %c0_i32_0 = arith.constant 0 : i32
    %c0_i32_1 = arith.constant 0 : i32
    return %c0_i32, %c0_i32_0 : i32, i32
  }
  func.func @transform_3(%arg0: i32, %arg1: i32) -> (i32, i32, i32, i32) {
    %c0_i32 = arith.constant 0 : i32
    %c0_i32_0 = arith.constant 0 : i32
    %c0_i32_1 = arith.constant 0 : i32
    return %arg0, %arg1, %c0_i32, %c0_i32_0 : i32, i32, i32, i32
  }
}

</mosaic_0001>

<llo_original>
// kernel: conv_block_forward.3
$region0: #{conv_block_forward.3}
  #allocation0 [shape = 'u32[]', space=smem, size = 0x4, offset = 0x4, fixed_abs, tag = 'smem constant byte address 0x4 - core index']
  #allocation1 [shape = 'u32[144,128]{1,0:T(1,128)}', space=vmem, size = 0x12000, scoped, tag = 'internal scratch']
  %s0 = inlined_call_operand.vmem [shape: f32[2,2,10,18,128], index: 0, kind: input, shape index: {}]
  %s1 = inlined_call_operand.vmem [shape: bf16[1152,128], index: 1, kind: input, shape index: {}]
  %s2 = inlined_call_operand.vmem [shape: f32[2,16,16,128], index: 2, kind: output, shape index: {0}]
  %s3 = inlined_call_operand.vmem [shape: f32[2,2,2,128], index: 3, kind: output, shape index: {1}]
  %4 = xla_tuple %s2, %s3
  %s5 = sld [smem:[#allocation0]]
  $region49: #{conv_block_forward.3} parent=0
    _
  %s7 = ssub.s32 1, %s5
  %s8 = scalar_select 0, %s7, %s5
  loop: start=0, step=1, limit=6
  $region2: #{conv_block_forward.3} parent=0 // loop_pre_header
    _
  $region3: #{conv_block_forward.3} parent=0 // loop_header
    %s10 = sphi 0, %s14
    %p11 = scmp.ge.s32.totalorder %s10, 6
    %s17 = sphi 0, %s29
    %s18 = sphi 0, %s25
    %s19 = sphi 0, %s17
    %s20 = sphi 0, %s18
    %s21 = sphi 0, %s19
    %s22 = sphi 0, %s20
    %s34 = sphi 0, %s36
    %s37 = sphi 0, %s34
    %s38 = sphi 0, %s37
    %s54 = sphi 0, %s38
    %s58 = sphi 0, %s58
    %s60 = sphi 0, %s58
    %s61 = sphi 0, %s60
    %s75 = sphi 0, %s61
    %s83 = sphi 0, %s85
    %s86 = sphi 0, %s83
    %s87 = sphi 0, %s86
    %s103 = sphi 0, %s87
    %s111 = sphi 0, %s113
    %s114 = sphi 0, %s111
    %s115 = sphi 0, %s114
    %s131 = sphi 0, %s115
  $region4: #{conv_block_forward.3} parent=0 // loop_header_branch
    %13 = sbr.rel (%p11) target = $region8
  $region5: #{conv_block_forward.3} parent=0 // loop_body
    %s15 = ssub.s32 %s10, 1
    %s16 = ssub.s32 %s10, 2
    %s23 = sadd.s32 1, %s18
    %p24 = scmp.ge.s32.totalorder %s23, 2
    %s25 = scalar_select %p24, 0, %s23
    %s26 = sadd.s32 1, %s17
    %s27 = scalar_select %p24, %s26, %s17
    %p28 = scmp.ge.s32.totalorder %s27, 2
    %s29 = scalar_select %p28, 0, %s27
    %s30 = ssub.s32 %s17, %s29
    %s31 = ssub.s32 %s18, %s25
    %s32 = sor.u32 %s30, %s31
    %p33 = scmp.eq.s32.totalorder %s32, 0
    %s35 = sadd.s32 %s34, 1
    %s36 = scalar_select %p33, %s34, %s35
    %p39 = pneg %p33
    %p40 = scmp.eq.s32.totalorder %s10, 3
    %p41 = por %p39, %p40
    %p42 = scmp.ne.s32.totalorder %s34, %s37
    %p43 = scmp.eq.s32.totalorder %s10, 0
    %p44 = por %p42, %p43
    %p45 = scmp.ne.s32.totalorder %s34, %s37
    %p46 = scmp.eq.s32.totalorder %s15, 3
    %p47 = por %p45, %p46
    %p48 = scmp.ne.s32.totalorder %s37, %s38
    %p49 = scmp.eq.s32.totalorder %s15, 0
    %p50 = por %p48, %p49
    %p51 = scmp.ne.s32.totalorder %s37, %s38
    %p52 = scmp.eq.s32.totalorder %s16, 3
    %p53 = por %p51, %p52
    %p55 = scmp.ne.s32.totalorder %s38, %s54
    %p56 = scmp.eq.s32.totalorder %s16, 0
    %p57 = por %p55, %p56
    %s59 = sadd.s32 %s58, 1
    %p62 = scmp.eq.s32.totalorder %s10, 3
    %p63 = scmp.ne.s32.totalorder %s58, %s60
    %p64 = scmp.eq.s32.totalorder %s10, 0
    %p65 = por %p63, %p64
    %p66 = scmp.ne.s32.totalorder %s58, %s60
    %p67 = scmp.eq.s32.totalorder %s15, 3
    %p68 = por %p66, %p67
    %p69 = scmp.ne.s32.totalorder %s60, %s61
    %p70 = scmp.eq.s32.totalorder %s15, 0
    %p71 = por %p69, %p70
    %p72 = scmp.ne.s32.totalorder %s60, %s61
    %p73 = scmp.eq.s32.totalorder %s16, 3
    %p74 = por %p72, %p73
    %p76 = scmp.ne.s32.totalorder %s61, %s75
    %p77 = scmp.eq.s32.totalorder %s16, 0
    %p78 = por %p76, %p77
    %s79 = ssub.s32 %s17, %s29
    %s80 = ssub.s32 %s18, %s25
    %s81 = sor.u32 %s79, %s80
    %p82 = scmp.eq.s32.totalorder %s81, 0
    %s84 = sadd.s32 %s83, 1
    %s85 = scalar_select %p82, %s83, %s84
    %p88 = pneg %p82
    %p89 = scmp.eq.s32.totalorder %s10, 3
    %p90 = por %p88, %p89
    %p91 = scmp.ne.s32.totalorder %s83, %s86
    %p92 = scmp.eq.s32.totalorder %s10, 0
    %p93 = por %p91, %p92
    %p94 = scmp.ne.s32.totalorder %s83, %s86
    %p95 = scmp.eq.s32.totalorder %s15, 3
    %p96 = por %p94, %p95
    %p97 = scmp.ne.s32.totalorder %s86, %s87
    %p98 = scmp.eq.s32.totalorder %s15, 0
    %p99 = por %p97, %p98
    %p100 = scmp.ne.s32.totalorder %s86, %s87
    %p101 = scmp.eq.s32.totalorder %s16, 3
    %p102 = por %p100, %p101
    %p104 = scmp.ne.s32.totalorder %s87, %s103
    %p105 = scmp.eq.s32.totalorder %s16, 0
    %p106 = por %p104, %p105
    %s107 = ssub.s32 %s17, %s29
    %s108 = ssub.s32 %s18, %s25
    %s109 = sor.u32 %s107, %s108
    %p110 = scmp.eq.s32.totalorder %s109, 0
    %s112 = sadd.s32 %s111, 1
    %s113 = scalar_select %p110, %s111, %s112
    %p116 = pneg %p110
    %p117 = scmp.eq.s32.totalorder %s10, 3
    %p118 = por %p116, %p117
    %p119 = scmp.ne.s32.totalorder %s111, %s114
    %p120 = scmp.eq.s32.totalorder %s10, 0
    %p121 = por %p119, %p120
    %p122 = scmp.ne.s32.totalorder %s111, %s114
    %p123 = scmp.eq.s32.totalorder %s15, 3
    %p124 = por %p122, %p123
    %p125 = scmp.ne.s32.totalorder %s114, %s115
    %p126 = scmp.eq.s32.totalorder %s15, 0
    %p127 = por %p125, %p126
    %p128 = scmp.ne.s32.totalorder %s114, %s115
    %p129 = scmp.eq.s32.totalorder %s16, 3
    %p130 = por %p128, %p129
    %p132 = scmp.ne.s32.totalorder %s115, %s131
    %p133 = scmp.eq.s32.totalorder %s16, 0
    %p134 = por %p132, %p133
    %p135 = scmp.le.s32.totalorder 1, %s10
    %p136 = scmp.lt.s32.totalorder %s10, 5
    %p137 = pnand %p135, %p136
    %p138 = pneg %p137
    // Predicated region
    $region9: #{conv_block_forward.3} parent=5 // pred_check
      _
    $region10: #{conv_block_forward.3} parent=5 // pred_check_branch
      %140 = sbr.rel (%p137) target = $region12
    $region11: #{conv_block_forward.3} parent=5 // pred_region
      %s141 = ssub.s32 %s10, 1
      // Predicated region
      $region13: #{conv_block_forward.3} parent=11 // pred_check
        %p142 = pneg %p71
      $region14: #{conv_block_forward.3} parent=11 // pred_check_branch
        %144 = sbr.rel (%p142) target = $region16
      $region15: #{conv_block_forward.3} parent=11 // pred_region
        _
      $region16: #{conv_block_forward.3} parent=11 // pred_fallthru
        _
    $region12: #{conv_block_forward.3} parent=5 // pred_fallthru
      _
    %p145 = scmp.lt.s32.totalorder %s10, 4
    // Predicated region
    $region17: #{conv_block_forward.3} parent=5 // pred_check
      %p146 = pneg %p145
    $region18: #{conv_block_forward.3} parent=5 // pred_check_branch
      %148 = sbr.rel (%p146) target = $region20
    $region19: #{conv_block_forward.3} parent=5 // pred_region
      // Predicated region
      $region21: #{conv_block_forward.3} parent=19 // pred_check
        %p149 = pneg %p44
      $region22: #{conv_block_forward.3} parent=19 // pred_check_branch
        %151 = sbr.rel (%p149) target = $region24
      $region23: #{conv_block_forward.3} parent=19 // pred_region
        %p152 = scmp.lt.s32.totalorder %s17, 1
        %s153 = scalar_select %p152, %s17, 1
        %p154 = scmp.lt.s32.totalorder %s18, 1
        %s155 = scalar_select %p154, %s18, 1
        %s156 = smul.addr %s155, 30
        %s157 = smul.addr %s153, 60
        %s158 = sadd.s32 %s156, %s157
        %s159 = smul.addr %s158, 8
        %s160 = scalar_lea.vmem %s0, %s159
      $region24: #{conv_block_forward.3} parent=19 // pred_fallthru
        _
    $region20: #{conv_block_forward.3} parent=5 // pred_fallthru
      _
    %p161 = scmp.le.s32.totalorder 1, %s10
    %p162 = scmp.lt.s32.totalorder %s10, 5
    %p163 = pnand %p161, %p162
    %p164 = pneg %p163
    // Predicated region
    $region25: #{conv_block_forward.3} parent=5 // pred_check
      _
    $region26: #{conv_block_forward.3} parent=5 // pred_check_branch
      %166 = sbr.rel (%p163) target = $region28
    $region27: #{conv_block_forward.3} parent=5 // pred_region
      %s167 = ssub.s32 %s10, 1
      %p168 = scmp.lt.s32.totalorder %s19, 1
      %s169 = scalar_select %p168, %s19, 1
      %p170 = scmp.lt.s32.totalorder %s20, 1
      %s171 = scalar_select %p170, %s20, 1
      %s172 = smul.addr %s171, 30
      %s173 = smul.addr %s169, 60
      %s174 = sadd.s32 %s172, %s173
      %s175 = smul.addr %s174, 8
      %s176 = scalar_lea.vmem %s0, %s175
      %p177 = pneg %p50
      %p178 = pneg %p47
      %p179 = pneg %p71
      %p180 = pneg %p68
      %p181 = pneg %p99
      %p182 = pneg %p96
      %s183 = smul.u32 8, %s20
      %p184 = scmp.lt.s32.totalorder %s19, 1
      %s185 = scalar_select %p184, %s19, 1
      %p186 = scmp.lt.s32.totalorder %s183, 15
      %s187 = scalar_select %p186, %s183, 15
      %s188 = smul.addr %s187, 2
      %s189 = smul.addr %s185, 32
      %s190 = sadd.s32 %s188, %s189
      %s191 = smul.addr %s190, 8
      %s192 = scalar_lea.vmem %s2, %s191
      %p193 = pneg %p127
      %p194 = pneg %p124
      %p195 = scmp.lt.s32.totalorder %s19, 1
      %s196 = scalar_select %p195, %s19, 1
      %p197 = scmp.lt.s32.totalorder %s20, 1
      %s198 = scalar_select %p197, %s20, 1
      %s199 = smul.addr %s196, 2
      %s200 = sadd.s32 %s198, %s199
      %s201 = smul.addr %s200, 2
      %s202 = scalar_lea.vmem %s3, %s201
      %p203 = scmp.lt.s32.totalorder %s19, 1
      %s204 = scalar_select %p203, %s19, 1
      %p205 = scmp.lt.s32.totalorder %s20, 1
      %s206 = scalar_select %p205, %s20, 1
      %s207 = smul.addr %s206, 30
      %s208 = smul.addr %s204, 60
      %s209 = sadd.s32 %s207, %s208
      %s210 = smul.addr %s209, 8
      %s211 = scalar_lea.vmem %s0, %s210
      %s212 = smul.u32 8, %s20
      %p213 = scmp.lt.s32.totalorder %s19, 1
      %s214 = scalar_select %p213, %s19, 1
      %p215 = scmp.lt.s32.totalorder %s212, 15
      %s216 = scalar_select %p215, %s212, 15
      %s217 = smul.addr %s216, 2
      %s218 = smul.addr %s214, 32
      %s219 = sadd.s32 %s217, %s218
      %s220 = smul.addr %s219, 8
      %s221 = scalar_lea.vmem %s2, %s220
      %s222 = smul.u32 8, %s20
      %p223 = scmp.lt.s32.totalorder %s19, 1
      %s224 = scalar_select %p223, %s19, 1
      %p225 = scmp.lt.s32.totalorder %s20, 1
      %s226 = scalar_select %p225, %s20, 1
      %s227 = smul.addr %s224, 2
      %s228 = sadd.s32 %s226, %s227
      %s229 = smul.addr %s228, 2
      %s230 = scalar_lea.vmem %s3, %s229
      %v232 = vld [vmem:[%s211] sm:$0xff]
      %v233 = vld [vmem:[%s211 + $0x8] sm:$0xff]
      %v234 = vld [vmem:[%s211 + $0x10] sm:$0x3]
      %v235 = vld [vmem:[%s211 + $0x18] sm:$0xff]
      %v236 = vld [vmem:[%s211 + $0x20] sm:$0xff]
      %v237 = vld [vmem:[%s211 + $0x28] sm:$0x3]
      %v238 = vld [vmem:[%s211 + $0x30] sm:$0xff]
      %v239 = vld [vmem:[%s211 + $0x38] sm:$0xff]
      %v240 = vld [vmem:[%s211 + $0x40] sm:$0x3]
      %v241 = vld [vmem:[%s211 + $0x48] sm:$0xff]
      %v242 = vld [vmem:[%s211 + $0x50] sm:$0xff]
      %v243 = vld [vmem:[%s211 + $0x58] sm:$0x3]
      %v244 = vld [vmem:[%s211 + $0x60] sm:$0xff]
      %v245 = vld [vmem:[%s211 + $0x68] sm:$0xff]
      %v246 = vld [vmem:[%s211 + $0x70] sm:$0x3]
      %v247 = vld [vmem:[%s211 + $0x78] sm:$0xff]
      %v248 = vld [vmem:[%s211 + $0x80] sm:$0xff]
      %v249 = vld [vmem:[%s211 + $0x88] sm:$0x3]
      %v250 = vld [vmem:[%s211 + $0x90] sm:$0xff]
      %v251 = vld [vmem:[%s211 + $0x98] sm:$0xff]
      %v252 = vld [vmem:[%s211 + $0xa0] sm:$0x3]
      %v253 = vld [vmem:[%s211 + $0xa8] sm:$0xff]
      %v254 = vld [vmem:[%s211 + $0xb0] sm:$0xff]
      %v255 = vld [vmem:[%s211 + $0xb8] sm:$0x3]
      %v256 = vld [vmem:[%s211 + $0xc0] sm:$0xff]
      %v257 = vld [vmem:[%s211 + $0xc8] sm:$0xff]
      %v258 = vld [vmem:[%s211 + $0xd0] sm:$0x3]
      %v259 = vld [vmem:[%s211 + $0xd8] sm:$0xff]
      %v260 = vld [vmem:[%s211 + $0xe0] sm:$0xff]
      %v261 = vld [vmem:[%s211 + $0xe8] sm:$0x3]
      %v262 = vpack.c.bf16 %v233, %v232
      %v263 = vpack.c.bf16 %v234, %v234
      %v264 = vpack.c.bf16 %v236, %v235
      %v265 = vpack.c.bf16 %v237, %v237
      %v266 = vpack.c.bf16 %v239, %v238
      %v267 = vpack.c.bf16 %v240, %v240
      %v268 = vpack.c.bf16 %v242, %v241
      %v269 = vpack.c.bf16 %v243, %v243
      %v270 = vpack.c.bf16 %v245, %v244
      %v271 = vpack.c.bf16 %v246, %v246
      %v272 = vpack.c.bf16 %v248, %v247
      %v273 = vpack.c.bf16 %v249, %v249
      %v274 = vpack.c.bf16 %v251, %v250
      %v275 = vpack.c.bf16 %v252, %v252
      %v276 = vpack.c.bf16 %v254, %v253
      %v277 = vpack.c.bf16 %v255, %v255
      %v278 = vpack.c.bf16 %v257, %v256
      %v279 = vpack.c.bf16 %v258, %v258
      %v280 = vpack.c.bf16 %v260, %v259
      %v281 = vpack.c.bf16 %v261, %v261
      %vm282 = vsmask.f32 7424
      %v284 = vshrl.u32 %v262, 16
      %v286 = vshll.u32 %v262, 16
      %v288 = vrot.slane %v286, 1
      %v289 = vor.u32 %v284, %v288
      %v291 = vshll.u32 %v263, 16
      %v293 = vrot.slane %v291, 1
      %v294 = vsel %vm282, %v289, %v293
      %v296 = vshrl.u32 %v264, 16
      %v298 = vshll.u32 %v264, 16
      %v300 = vrot.slane %v298, 1
      %v301 = vor.u32 %v296, %v300
      %v303 = vshll.u32 %v265, 16
      %v305 = vrot.slane %v303, 1
      %v306 = vsel %vm282, %v301, %v305
      %v308 = vshrl.u32 %v266, 16
      %v310 = vshll.u32 %v266, 16
      %v312 = vrot.slane %v310, 1
      %v313 = vor.u32 %v308, %v312
      %v315 = vshll.u32 %v267, 16
      %v317 = vrot.slane %v315, 1
      %v318 = vsel %vm282, %v313, %v317
      %v320 = vshrl.u32 %v268, 16
      %v322 = vshll.u32 %v268, 16
      %v324 = vrot.slane %v322, 1
      %v325 = vor.u32 %v320, %v324
      %v327 = vshll.u32 %v269, 16
      %v329 = vrot.slane %v327, 1
      %v330 = vsel %vm282, %v325, %v329
      %v332 = vshrl.u32 %v270, 16
      %v334 = vshll.u32 %v270, 16
      %v336 = vrot.slane %v334, 1
      %v337 = vor.u32 %v332, %v336
      %v339 = vshll.u32 %v271, 16
      %v341 = vrot.slane %v339, 1
      %v342 = vsel %vm282, %v337, %v341
      %v344 = vshrl.u32 %v272, 16
      %v346 = vshll.u32 %v272, 16
      %v348 = vrot.slane %v346, 1
      %v349 = vor.u32 %v344, %v348
      %v351 = vshll.u32 %v273, 16
      %v353 = vrot.slane %v351, 1
      %v354 = vsel %vm282, %v349, %v353
      %v356 = vshrl.u32 %v274, 16
      %v358 = vshll.u32 %v274, 16
      %v360 = vrot.slane %v358, 1
      %v361 = vor.u32 %v356, %v360
      %v363 = vshll.u32 %v275, 16
      %v365 = vrot.slane %v363, 1
      %v366 = vsel %vm282, %v361, %v365
      %v368 = vshrl.u32 %v276, 16
      %v370 = vshll.u32 %v276, 16
      %v372 = vrot.slane %v370, 1
      %v373 = vor.u32 %v368, %v372
      %v375 = vshll.u32 %v277, 16
      %v377 = vrot.slane %v375, 1
      %v378 = vsel %vm282, %v373, %v377
      %vm403 = vcmask 1046528
      %v404 = vrot.slane %v262, 1
      %v405 = vrot.slane %v263, 1
      %v406 = vsel %vm403, %v404, %v405
      %v407 = vrot.slane %v264, 1
      %v408 = vrot.slane %v265, 1
      %v409 = vsel %vm403, %v407, %v408
      %v410 = vrot.slane %v266, 1
      %v411 = vrot.slane %v267, 1
      %v412 = vsel %vm403, %v410, %v411
      %v413 = vrot.slane %v268, 1
      %v414 = vrot.slane %v269, 1
      %v415 = vsel %vm403, %v413, %v414
      %v416 = vrot.slane %v270, 1
      %v417 = vrot.slane %v271, 1
      %v418 = vsel %vm403, %v416, %v417
      %v419 = vrot.slane %v272, 1
      %v420 = vrot.slane %v273, 1
      %v421 = vsel %vm403, %v419, %v420
      %v422 = vrot.slane %v274, 1
      %v423 = vrot.slane %v275, 1
      %v424 = vsel %vm403, %v422, %v423
      %v425 = vrot.slane %v276, 1
      %v426 = vrot.slane %v277, 1
      %v427 = vsel %vm403, %v425, %v426
      %v437 = vshrl.u32 %v278, 16
      %v439 = vshll.u32 %v278, 16
      %v441 = vrot.slane %v439, 1
      %v442 = vor.u32 %v437, %v441
      %v444 = vshll.u32 %v279, 16
      %v446 = vrot.slane %v444, 1
      %v447 = vsel %vm282, %v442, %v446
      %v451 = vrot.slane %v278, 1
      %v452 = vrot.slane %v279, 1
      %v453 = vsel %vm403, %v451, %v452
      %v456 = vshrl.u32 %v280, 16
      %v458 = vshll.u32 %v280, 16
      %v460 = vrot.slane %v458, 1
      %v461 = vor.u32 %v456, %v460
      %v463 = vshll.u32 %v281, 16
      %v465 = vrot.slane %v463, 1
      %v466 = vsel %vm282, %v461, %v465
      %v470 = vrot.slane %v280, 1
      %v471 = vrot.slane %v281, 1
      %v472 = vsel %vm403, %v470, %v471
      %v474 = vld [vmem:[%s1] sm:$0xf]
      %v475 = vld [vmem:[%s1 + $0x4] sm:$0xf]
      %v476 = vld [vmem:[%s1 + $0x8] sm:$0xf]
      %v477 = vld [vmem:[%s1 + $0xc] sm:$0xf]
      %v478 = vld [vmem:[%s1 + $0x10] sm:$0xf]
      %v479 = vld [vmem:[%s1 + $0x14] sm:$0xf]
      %v480 = vld [vmem:[%s1 + $0x18] sm:$0xf]
      %v481 = vld [vmem:[%s1 + $0x1c] sm:$0xf]
      %v482 = vld [vmem:[%s1 + $0x20] sm:$0xf]
      %v483 = vld [vmem:[%s1 + $0x24] sm:$0xf]
      %v484 = vld [vmem:[%s1 + $0x28] sm:$0xf]
      %v485 = vld [vmem:[%s1 + $0x2c] sm:$0xf]
      %v486 = vld [vmem:[%s1 + $0x30] sm:$0xf]
      %v487 = vld [vmem:[%s1 + $0x34] sm:$0xf]
      %v488 = vld [vmem:[%s1 + $0x38] sm:$0xf]
      %v489 = vld [vmem:[%s1 + $0x3c] sm:$0xf]
      %v490 = vld [vmem:[%s1 + $0x40] sm:$0xf]
      %v491 = vld [vmem:[%s1 + $0x44] sm:$0xf]
      %v492 = vld [vmem:[%s1 + $0x48] sm:$0xf]
      %v493 = vld [vmem:[%s1 + $0x4c] sm:$0xf]
      %v494 = vld [vmem:[%s1 + $0x50] sm:$0xf]
      %v495 = vld [vmem:[%s1 + $0x54] sm:$0xf]
      %v496 = vld [vmem:[%s1 + $0x58] sm:$0xf]
      %v497 = vld [vmem:[%s1 + $0x5c] sm:$0xf]
      %v498 = vld [vmem:[%s1 + $0x60] sm:$0xf]
      %v499 = vld [vmem:[%s1 + $0x64] sm:$0xf]
      %v500 = vld [vmem:[%s1 + $0x68] sm:$0xf]
      %v501 = vld [vmem:[%s1 + $0x6c] sm:$0xf]
      %v502 = vld [vmem:[%s1 + $0x70] sm:$0xf]
      %v503 = vld [vmem:[%s1 + $0x74] sm:$0xf]
      %v504 = vld [vmem:[%s1 + $0x78] sm:$0xf]
      %v505 = vld [vmem:[%s1 + $0x7c] sm:$0xf]
      %v506 = vld [vmem:[%s1 + $0x80] sm:$0xf]
      %v507 = vld [vmem:[%s1 + $0x84] sm:$0xf]
      %v508 = vld [vmem:[%s1 + $0x88] sm:$0xf]
      %v509 = vld [vmem:[%s1 + $0x8c] sm:$0xf]
      %v510 = vld [vmem:[%s1 + $0x90] sm:$0xf]
      %v511 = vld [vmem:[%s1 + $0x94] sm:$0xf]
      %v512 = vld [vmem:[%s1 + $0x98] sm:$0xf]
      %v513 = vld [vmem:[%s1 + $0x9c] sm:$0xf]
      %v514 = vld [vmem:[%s1 + $0xa0] sm:$0xf]
      %v515 = vld [vmem:[%s1 + $0xa4] sm:$0xf]
      %v516 = vld [vmem:[%s1 + $0xa8] sm:$0xf]
      %v517 = vld [vmem:[%s1 + $0xac] sm:$0xf]
      %v518 = vld [vmem:[%s1 + $0xb0] sm:$0xf]
      %v519 = vld [vmem:[%s1 + $0xb4] sm:$0xf]
      %v520 = vld [vmem:[%s1 + $0xb8] sm:$0xf]
      %v521 = vld [vmem:[%s1 + $0xbc] sm:$0xf]
      %v522 = vld [vmem:[%s1 + $0xc0] sm:$0xf]
      %v523 = vld [vmem:[%s1 + $0xc4] sm:$0xf]
      %v524 = vld [vmem:[%s1 + $0xc8] sm:$0xf]
      %v525 = vld [vmem:[%s1 + $0xcc] sm:$0xf]
      %v526 = vld [vmem:[%s1 + $0xd0] sm:$0xf]
      %v527 = vld [vmem:[%s1 + $0xd4] sm:$0xf]
      %v528 = vld [vmem:[%s1 + $0xd8] sm:$0xf]
      %v529 = vld [vmem:[%s1 + $0xdc] sm:$0xf]
      %v530 = vld [vmem:[%s1 + $0xe0] sm:$0xf]
      %v531 = vld [vmem:[%s1 + $0xe4] sm:$0xf]
      %v532 = vld [vmem:[%s1 + $0xe8] sm:$0xf]
      %v533 = vld [vmem:[%s1 + $0xec] sm:$0xf]
      %v534 = vld [vmem:[%s1 + $0xf0] sm:$0xf]
      %v535 = vld [vmem:[%s1 + $0xf4] sm:$0xf]
      %v536 = vld [vmem:[%s1 + $0xf8] sm:$0xf]
      %v537 = vld [vmem:[%s1 + $0xfc] sm:$0xf]
      %v538 = vld [vmem:[%s1 + $0x100] sm:$0xf]
      %v539 = vld [vmem:[%s1 + $0x104] sm:$0xf]
      %v540 = vld [vmem:[%s1 + $0x108] sm:$0xf]
      %v541 = vld [vmem:[%s1 + $0x10c] sm:$0xf]
      %v542 = vld [vmem:[%s1 + $0x110] sm:$0xf]
      %v543 = vld [vmem:[%s1 + $0x114] sm:$0xf]
      %v544 = vld [vmem:[%s1 + $0x118] sm:$0xf]
      %v545 = vld [vmem:[%s1 + $0x11c] sm:$0xf]
      %v546 = vld [vmem:[%s1 + $0x120] sm:$0xf]
      %v547 = vld [vmem:[%s1 + $0x124] sm:$0xf]
      %v548 = vld [vmem:[%s1 + $0x128] sm:$0xf]
      %v549 = vld [vmem:[%s1 + $0x12c] sm:$0xf]
      %v550 = vld [vmem:[%s1 + $0x130] sm:$0xf]
      %v551 = vld [vmem:[%s1 + $0x134] sm:$0xf]
      %v552 = vld [vmem:[%s1 + $0x138] sm:$0xf]
      %v553 = vld [vmem:[%s1 + $0x13c] sm:$0xf]
      %v554 = vld [vmem:[%s1 + $0x140] sm:$0xf]
      %v555 = vld [vmem:[%s1 + $0x144] sm:$0xf]
      %v556 = vld [vmem:[%s1 + $0x148] sm:$0xf]
      %v557 = vld [vmem:[%s1 + $0x14c] sm:$0xf]
      %v558 = vld [vmem:[%s1 + $0x150] sm:$0xf]
      %v559 = vld [vmem:[%s1 + $0x154] sm:$0xf]
      %v560 = vld [vmem:[%s1 + $0x158] sm:$0xf]
      %v561 = vld [vmem:[%s1 + $0x15c] sm:$0xf]
      %v562 = vld [vmem:[%s1 + $0x160] sm:$0xf]
      %v563 = vld [vmem:[%s1 + $0x164] sm:$0xf]
      %v564 = vld [vmem:[%s1 + $0x168] sm:$0xf]
      %v565 = vld [vmem:[%s1 + $0x16c] sm:$0xf]
      %v566 = vld [vmem:[%s1 + $0x170] sm:$0xf]
      %v567 = vld [vmem:[%s1 + $0x174] sm:$0xf]
      %v568 = vld [vmem:[%s1 + $0x178] sm:$0xf]
      %v569 = vld [vmem:[%s1 + $0x17c] sm:$0xf]
      %v570 = vld [vmem:[%s1 + $0x180] sm:$0xf]
      %v571 = vld [vmem:[%s1 + $0x184] sm:$0xf]
      %v572 = vld [vmem:[%s1 + $0x188] sm:$0xf]
      %v573 = vld [vmem:[%s1 + $0x18c] sm:$0xf]
      %v574 = vld [vmem:[%s1 + $0x190] sm:$0xf]
      %v575 = vld [vmem:[%s1 + $0x194] sm:$0xf]
      %v576 = vld [vmem:[%s1 + $0x198] sm:$0xf]
      %v577 = vld [vmem:[%s1 + $0x19c] sm:$0xf]
      %v578 = vld [vmem:[%s1 + $0x1a0] sm:$0xf]
      %v579 = vld [vmem:[%s1 + $0x1a4] sm:$0xf]
      %v580 = vld [vmem:[%s1 + $0x1a8] sm:$0xf]
      %v581 = vld [vmem:[%s1 + $0x1ac] sm:$0xf]
      %v582 = vld [vmem:[%s1 + $0x1b0] sm:$0xf]
      %v583 = vld [vmem:[%s1 + $0x1b4] sm:$0xf]
      %v584 = vld [vmem:[%s1 + $0x1b8] sm:$0xf]
      %v585 = vld [vmem:[%s1 + $0x1bc] sm:$0xf]
      %v586 = vld [vmem:[%s1 + $0x1c0] sm:$0xf]
      %v587 = vld [vmem:[%s1 + $0x1c4] sm:$0xf]
      %v588 = vld [vmem:[%s1 + $0x1c8] sm:$0xf]
      %v589 = vld [vmem:[%s1 + $0x1cc] sm:$0xf]
      %v590 = vld [vmem:[%s1 + $0x1d0] sm:$0xf]
      %v591 = vld [vmem:[%s1 + $0x1d4] sm:$0xf]
      %v592 = vld [vmem:[%s1 + $0x1d8] sm:$0xf]
      %v593 = vld [vmem:[%s1 + $0x1dc] sm:$0xf]
      %v594 = vld [vmem:[%s1 + $0x1e0] sm:$0xf]
      %v595 = vld [vmem:[%s1 + $0x1e4] sm:$0xf]
      %v596 = vld [vmem:[%s1 + $0x1e8] sm:$0xf]
      %v597 = vld [vmem:[%s1 + $0x1ec] sm:$0xf]
      %v598 = vld [vmem:[%s1 + $0x1f0] sm:$0xf]
      %v599 = vld [vmem:[%s1 + $0x1f4] sm:$0xf]
      %v600 = vld [vmem:[%s1 + $0x1f8] sm:$0xf]
      %v601 = vld [vmem:[%s1 + $0x1fc] sm:$0xf]
      %v602 = vld [vmem:[%s1 + $0x200] sm:$0xf]
      %v603 = vld [vmem:[%s1 + $0x204] sm:$0xf]
      %v604 = vld [vmem:[%s1 + $0x208] sm:$0xf]
      %v605 = vld [vmem:[%s1 + $0x20c] sm:$0xf]
      %v606 = vld [vmem:[%s1 + $0x210] sm:$0xf]
      %v607 = vld [vmem:[%s1 + $0x214] sm:$0xf]
      %v608 = vld [vmem:[%s1 + $0x218] sm:$0xf]
      %v609 = vld [vmem:[%s1 + $0x21c] sm:$0xf]
      %v610 = vld [vmem:[%s1 + $0x220] sm:$0xf]
      %v611 = vld [vmem:[%s1 + $0x224] sm:$0xf]
      %v612 = vld [vmem:[%s1 + $0x228] sm:$0xf]
      %v613 = vld [vmem:[%s1 + $0x22c] sm:$0xf]
      %v614 = vld [vmem:[%s1 + $0x230] sm:$0xf]
      %v615 = vld [vmem:[%s1 + $0x234] sm:$0xf]
      %v616 = vld [vmem:[%s1 + $0x238] sm:$0xf]
      %v617 = vld [vmem:[%s1 + $0x23c] sm:$0xf]
      %v762 = vunpack.c.l.b16 %v474
      %v763 = vunpack.c.l.b16 %v475
      %v764 = vunpack.c.l.b16 %v476
      %v765 = vunpack.c.l.b16 %v477
      %v766 = vunpack.c.l.b16 %v478
      %v767 = vunpack.c.l.b16 %v479
      %v768 = vunpack.c.l.b16 %v480
      %v769 = vunpack.c.l.b16 %v481
      %v770 = vunpack.c.l.b16 %v482
      %v771 = vunpack.c.l.b16 %v483
      %v772 = vunpack.c.l.b16 %v484
      %v773 = vunpack.c.l.b16 %v485
      %v774 = vunpack.c.l.b16 %v486
      %v775 = vunpack.c.l.b16 %v487
      %v776 = vunpack.c.l.b16 %v488
      %v777 = vunpack.c.l.b16 %v489
      %v778 = vunpack.c.l.b16 %v490
      %v779 = vunpack.c.l.b16 %v491
      %v780 = vunpack.c.l.b16 %v492
      %v781 = vunpack.c.l.b16 %v493
      %v782 = vunpack.c.l.b16 %v494
      %v783 = vunpack.c.l.b16 %v495
      %v784 = vunpack.c.l.b16 %v496
      %v785 = vunpack.c.l.b16 %v497
      %v786 = vunpack.c.l.b16 %v498
      %v787 = vunpack.c.l.b16 %v499
      %v788 = vunpack.c.l.b16 %v500
      %v789 = vunpack.c.l.b16 %v501
      %v790 = vunpack.c.l.b16 %v502
      %v791 = vunpack.c.l.b16 %v503
      %v792 = vunpack.c.l.b16 %v504
      %v793 = vunpack.c.l.b16 %v505
      %v794 = vunpack.c.l.b16 %v506
      %v795 = vunpack.c.l.b16 %v507
      %v796 = vunpack.c.l.b16 %v508
      %v797 = vunpack.c.l.b16 %v509
      %v798 = vunpack.c.l.b16 %v510
      %v799 = vunpack.c.l.b16 %v511
      %v800 = vunpack.c.l.b16 %v512
      %v801 = vunpack.c.l.b16 %v513
      %v802 = vunpack.c.l.b16 %v514
      %v803 = vunpack.c.l.b16 %v515
      %v804 = vunpack.c.l.b16 %v516
      %v805 = vunpack.c.l.b16 %v517
      %v806 = vunpack.c.l.b16 %v518
      %v807 = vunpack.c.l.b16 %v519
      %v808 = vunpack.c.l.b16 %v520
      %v809 = vunpack.c.l.b16 %v521
      %v810 = vunpack.c.l.b16 %v522
      %v811 = vunpack.c.l.b16 %v523
      %v812 = vunpack.c.l.b16 %v524
      %v813 = vunpack.c.l.b16 %v525
      %v814 = vunpack.c.l.b16 %v526
      %v815 = vunpack.c.l.b16 %v527
      %v816 = vunpack.c.l.b16 %v528
      %v817 = vunpack.c.l.b16 %v529
      %v818 = vunpack.c.l.b16 %v530
      %v819 = vunpack.c.l.b16 %v531
      %v820 = vunpack.c.l.b16 %v532
      %v821 = vunpack.c.l.b16 %v533
      %v822 = vunpack.c.l.b16 %v534
      %v823 = vunpack.c.l.b16 %v535
      %v824 = vunpack.c.l.b16 %v536
      %v825 = vunpack.c.l.b16 %v537
      %v826 = vunpack.c.l.b16 %v538
      %v827 = vunpack.c.l.b16 %v539
      %v828 = vunpack.c.l.b16 %v540
      %v829 = vunpack.c.l.b16 %v541
      %v830 = vunpack.c.l.b16 %v542
      %v831 = vunpack.c.l.b16 %v543
      %v832 = vunpack.c.l.b16 %v544
      %v833 = vunpack.c.l.b16 %v545
      %v834 = vunpack.c.l.b16 %v546
      %v835 = vunpack.c.l.b16 %v547
      %v836 = vunpack.c.l.b16 %v548
      %v837 = vunpack.c.l.b16 %v549
      %v838 = vunpack.c.l.b16 %v550
      %v839 = vunpack.c.l.b16 %v551
      %v840 = vunpack.c.l.b16 %v552
      %v841 = vunpack.c.l.b16 %v553
      %v842 = vunpack.c.l.b16 %v554
      %v843 = vunpack.c.l.b16 %v555
      %v844 = vunpack.c.l.b16 %v556
      %v845 = vunpack.c.l.b16 %v557
      %v846 = vunpack.c.l.b16 %v558
      %v847 = vunpack.c.l.b16 %v559
      %v848 = vunpack.c.l.b16 %v560
      %v849 = vunpack.c.l.b16 %v561
      %v850 = vunpack.c.l.b16 %v562
      %v851 = vunpack.c.l.b16 %v563
      %v852 = vunpack.c.l.b16 %v564
      %v853 = vunpack.c.l.b16 %v565
      %v854 = vunpack.c.l.b16 %v566
      %v855 = vunpack.c.l.b16 %v567
      %v856 = vunpack.c.l.b16 %v568
      %v857 = vunpack.c.l.b16 %v569
      %v858 = vunpack.c.l.b16 %v570
      %v859 = vunpack.c.l.b16 %v571
      %v860 = vunpack.c.l.b16 %v572
      %v861 = vunpack.c.l.b16 %v573
      %v862 = vunpack.c.l.b16 %v574
      %v863 = vunpack.c.l.b16 %v575
      %v864 = vunpack.c.l.b16 %v576
      %v865 = vunpack.c.l.b16 %v577
      %v866 = vunpack.c.l.b16 %v578
      %v867 = vunpack.c.l.b16 %v579
      %v868 = vunpack.c.l.b16 %v580
      %v869 = vunpack.c.l.b16 %v581
      %v870 = vunpack.c.l.b16 %v582
      %v871 = vunpack.c.l.b16 %v583
      %v872 = vunpack.c.l.b16 %v584
      %v873 = vunpack.c.l.b16 %v585
      %v874 = vunpack.c.l.b16 %v586
      %v875 = vunpack.c.l.b16 %v587
      %v876 = vunpack.c.l.b16 %v588
      %v877 = vunpack.c.l.b16 %v589
      %v878 = vunpack.c.l.b16 %v590
      %v879 = vunpack.c.l.b16 %v591
      %v880 = vunpack.c.l.b16 %v592
      %v881 = vunpack.c.l.b16 %v593
      %v882 = vunpack.c.l.b16 %v594
      %v883 = vunpack.c.l.b16 %v595
      %v884 = vunpack.c.l.b16 %v596
      %v885 = vunpack.c.l.b16 %v597
      %v886 = vunpack.c.l.b16 %v598
      %v887 = vunpack.c.l.b16 %v599
      %v888 = vunpack.c.l.b16 %v600
      %v889 = vunpack.c.l.b16 %v601
      %v890 = vunpack.c.l.b16 %v602
      %v891 = vunpack.c.l.b16 %v603
      %v892 = vunpack.c.l.b16 %v604
      %v893 = vunpack.c.l.b16 %v605
      %v894 = vunpack.c.l.b16 %v606
      %v895 = vunpack.c.l.b16 %v607
      %v896 = vunpack.c.l.b16 %v608
      %v897 = vunpack.c.l.b16 %v609
      %v898 = vunpack.c.l.b16 %v610
      %v899 = vunpack.c.l.b16 %v611
      %v900 = vunpack.c.l.b16 %v612
      %v901 = vunpack.c.l.b16 %v613
      %v902 = vunpack.c.l.b16 %v614
      %v903 = vunpack.c.l.b16 %v615
      %v904 = vunpack.c.l.b16 %v616
      %v905 = vunpack.c.l.b16 %v617
      %v906 = vpack.c.b16 %v763, %v762
      %v907 = vpack.c.b16 %v765, %v764
      %v908 = vpack.c.b16 %v767, %v766
      %v909 = vpack.c.b16 %v769, %v768
      %v910 = vpack.c.b16 %v771, %v770
      %v911 = vpack.c.b16 %v773, %v772
      %v912 = vpack.c.b16 %v775, %v774
      %v913 = vpack.c.b16 %v777, %v776
      %v914 = vpack.c.b16 %v779, %v778
      %v915 = vpack.c.b16 %v781, %v780
      %v916 = vpack.c.b16 %v783, %v782
      %v917 = vpack.c.b16 %v785, %v784
      %v918 = vpack.c.b16 %v787, %v786
      %v919 = vpack.c.b16 %v789, %v788
      %v920 = vpack.c.b16 %v791, %v790
      %v921 = vpack.c.b16 %v793, %v792
      %v922 = vpack.c.b16 %v795, %v794
      %v923 = vpack.c.b16 %v797, %v796
      %v924 = vpack.c.b16 %v799, %v798
      %v925 = vpack.c.b16 %v801, %v800
      %v926 = vpack.c.b16 %v803, %v802
      %v927 = vpack.c.b16 %v805, %v804
      %v928 = vpack.c.b16 %v807, %v806
      %v929 = vpack.c.b16 %v809, %v808
      %v930 = vpack.c.b16 %v811, %v810
      %v931 = vpack.c.b16 %v813, %v812
      %v932 = vpack.c.b16 %v815, %v814
      %v933 = vpack.c.b16 %v817, %v816
      %v934 = vpack.c.b16 %v819, %v818
      %v935 = vpack.c.b16 %v821, %v820
      %v936 = vpack.c.b16 %v823, %v822
      %v937 = vpack.c.b16 %v825, %v824
      %v938 = vpack.c.b16 %v827, %v826
      %v939 = vpack.c.b16 %v829, %v828
      %v940 = vpack.c.b16 %v831, %v830
      %v941 = vpack.c.b16 %v833, %v832
      %v942 = vpack.c.b16 %v835, %v834
      %v943 = vpack.c.b16 %v837, %v836
      %v944 = vpack.c.b16 %v839, %v838
      %v945 = vpack.c.b16 %v841, %v840
      %v946 = vpack.c.b16 %v843, %v842
      %v947 = vpack.c.b16 %v845, %v844
      %v948 = vpack.c.b16 %v847, %v846
      %v949 = vpack.c.b16 %v849, %v848
      %v950 = vpack.c.b16 %v851, %v850
      %v951 = vpack.c.b16 %v853, %v852
      %v952 = vpack.c.b16 %v855, %v854
      %v953 = vpack.c.b16 %v857, %v856
      %v954 = vpack.c.b16 %v859, %v858
      %v955 = vpack.c.b16 %v861, %v860
      %v956 = vpack.c.b16 %v863, %v862
      %v957 = vpack.c.b16 %v865, %v864
      %v958 = vpack.c.b16 %v867, %v866
      %v959 = vpack.c.b16 %v869, %v868
      %v960 = vpack.c.b16 %v871, %v870
      %v961 = vpack.c.b16 %v873, %v872
      %v962 = vpack.c.b16 %v875, %v874
      %v963 = vpack.c.b16 %v877, %v876
      %v964 = vpack.c.b16 %v879, %v878
      %v965 = vpack.c.b16 %v881, %v880
      %v966 = vpack.c.b16 %v883, %v882
      %v967 = vpack.c.b16 %v885, %v884
      %v968 = vpack.c.b16 %v887, %v886
      %v969 = vpack.c.b16 %v889, %v888
      %v970 = vpack.c.b16 %v891, %v890
      %v971 = vpack.c.b16 %v893, %v892
      %v972 = vpack.c.b16 %v895, %v894
      %v973 = vpack.c.b16 %v897, %v896
      %v974 = vpack.c.b16 %v899, %v898
      %v975 = vpack.c.b16 %v901, %v900
      %v976 = vpack.c.b16 %v903, %v902
      %v977 = vpack.c.b16 %v905, %v904
      %1050 = vmatprep.subr.bf16.mxu0 0
      %1051 = vmatpush1.bf16.msra.mxu0 %v906
      %1052 = vmatprep.subr.bf16.mxu0 0
      %1053 = vmatpush1.bf16.msra.mxu0 %v907
      %1054 = vmatprep.subr.bf16.mxu0 0
      %1055 = vmatpush1.bf16.msra.mxu0 %v908
      %1056 = vmatprep.subr.bf16.mxu0 0
      %1057 = vmatpush1.bf16.msra.mxu0 %v909
      %1058 = vmatprep.subr.bf16.mxu0 0
      %1059 = vmatpush1.bf16.msra.mxu0 %v910
      %1060 = vmatprep.subr.bf16.mxu0 0
      %1061 = vmatpush1.bf16.msra.mxu0 %v911
      %1062 = vmatprep.subr.bf16.mxu0 0
      %1063 = vmatpush1.bf16.msra.mxu0 %v912
      %1064 = vmatprep.subr.bf16.mxu0 0
      %1065 = vmatpush1.bf16.msra.mxu0 %v913
      %1066 = vmatprep.subr.bf16.mxu0 0
      %1067 = vmatpush1.bf16.msra.mxu0 %v914
      %1068 = vmatprep.subr.bf16.mxu0 0
      %1069 = vmatpush1.bf16.msra.mxu0 %v915
      %1070 = vmatprep.subr.bf16.mxu0 0
      %1071 = vmatpush1.bf16.msra.mxu0 %v916
      %1072 = vmatprep.subr.bf16.mxu0 0
      %1073 = vmatpush1.bf16.msra.mxu0 %v917
      %1074 = vmatprep.subr.bf16.mxu0 0
      %1075 = vmatpush1.bf16.msra.mxu0 %v918
      %1076 = vmatprep.subr.bf16.mxu0 0
      %1077 = vmatpush1.bf16.msra.mxu0 %v919
      %1078 = vmatprep.subr.bf16.mxu0 0
      %1079 = vmatpush1.bf16.msra.mxu0 %v920
      %1080 = vmatprep.subr.bf16.mxu0 0
      %1081 = vmatpush1.bf16.msra.mxu0 %v921
      %1082 = vmatprep.mubr.bf16.mxu0 %v294
      %1083 = vmatmul.mubr.bf16.gmra.mrb[0].mxu0 %v262
      %v1084 = vpop.f32.mrb[0].mxu0
      %v1085 = vadd.f32 0.0, %v1084
      %v1086 = vpop.f32.mrb[0].mxu0
      %v1087 = vpop.f32.mrb[0].mxu0
      %v1088 = vadd.f32 0.0, %v1087
      %v1089 = vpop.f32.mrb[0].mxu0
      %1090 = vmatprep.mubr.bf16.mxu0 %v306
      %1091 = vmatmul.mubr.bf16.gmra.mrb[0].mxu0 %v264
      %v1092 = vpop.f32.mrb[0].mxu0
      %v1093 = vadd.f32 0.0, %v1092
      %v1094 = vpop.f32.mrb[0].mxu0
      %v1095 = vpop.f32.mrb[0].mxu0
      %v1096 = vadd.f32 0.0, %v1095
      %v1097 = vpop.f32.mrb[0].mxu0
      %1098 = vmatprep.mubr.bf16.mxu0 %v318
      %1099 = vmatmul.mubr.bf16.gmra.mrb[0].mxu0 %v266
      %v1100 = vpop.f32.mrb[0].mxu0
      %v1101 = vadd.f32 0.0, %v1100
      %v1102 = vpop.f32.mrb[0].mxu0
      %v1103 = vpop.f32.mrb[0].mxu0
      %v1104 = vadd.f32 0.0, %v1103
      %v1105 = vpop.f32.mrb[0].mxu0
      %1106 = vmatprep.mubr.bf16.mxu0 %v330
      %1107 = vmatmul.mubr.bf16.gmra.mrb[0].mxu0 %v268
      %v1108 = vpop.f32.mrb[0].mxu0
      %v1109 = vadd.f32 0.0, %v1108
      %v1110 = vpop.f32.mrb[0].mxu0
      %v1111 = vpop.f32.mrb[0].mxu0
      %v1112 = vadd.f32 0.0, %v1111
      %v1113 = vpop.f32.mrb[0].mxu0
      %1114 = vmatprep.mubr.bf16.mxu0 %v342
      %1115 = vmatmul.mubr.bf16.gmra.mrb[0].mxu0 %v270
      %v1116 = vpop.f32.mrb[0].mxu0
      %v1117 = vadd.f32 0.0, %v1116
      %v1118 = vpop.f32.mrb[0].mxu0
      %v1119 = vpop.f32.mrb[0].mxu0
      %v1120 = vadd.f32 0.0, %v1119
      %v1121 = vpop.f32.mrb[0].mxu0
      %1122 = vmatprep.mubr.bf16.mxu0 %v354
      %1123 = vmatmul.mubr.bf16.gmra.mrb[0].mxu0 %v272
      %v1124 = vpop.f32.mrb[0].mxu0
      %v1125 = vadd.f32 0.0, %v1124
      %v1126 = vpop.f32.mrb[0].mxu0
      %v1127 = vpop.f32.mrb[0].mxu0
      %v1128 = vadd.f32 0.0, %v1127
      %v1129 = vpop.f32.mrb[0].mxu0
      %1130 = vmatprep.mubr.bf16.mxu0 %v366
      %1131 = vmatmul.mubr.bf16.gmra.mrb[0].mxu0 %v274
      %v1132 = vpop.f32.mrb[0].mxu0
      %v1133 = vadd.f32 0.0, %v1132
      %v1134 = vpop.f32.mrb[0].mxu0
      %v1135 = vpop.f32.mrb[0].mxu0
      %v1136 = vadd.f32 0.0, %v1135
      %v1137 = vpop.f32.mrb[0].mxu0
      %1138 = vmatprep.mubr.bf16.mxu0 %v378
      %1139 = vmatmul.mubr.bf16.gmra.mrb[0].mxu0 %v276
      %v1140 = vpop.f32.mrb[0].mxu0
      %v1141 = vadd.f32 0.0, %v1140
      %v1142 = vpop.f32.mrb[0].mxu0
      %v1143 = vpop.f32.mrb[0].mxu0
      %v1144 = vadd.f32 0.0, %v1143
      %v1145 = vpop.f32.mrb[0].mxu0
      %1146 = vdwg.mxu0
      %1147 = vmatprep.subr.bf16.mxu0 0
      %1148 = vmatpush1.bf16.msra.mxu0 %v922
      %1149 = vmatprep.subr.bf16.mxu0 0
      %1150 = vmatpush1.bf16.msra.mxu0 %v923
      %1151 = vmatprep.subr.bf16.mxu0 0
      %1152 = vmatpush1.bf16.msra.mxu0 %v924
      %1153 = vmatprep.subr.bf16.mxu0 0
      %1154 = vmatpush1.bf16.msra.mxu0 %v925
      %1155 = vmatprep.subr.bf16.mxu0 0
      %1156 = vmatpush1.bf16.msra.mxu0 %v926
      %1157 = vmatprep.subr.bf16.mxu0 0
      %1158 = vmatpush1.bf16.msra.mxu0 %v927
      %1159 = vmatprep.subr.bf16.mxu0 0
      %1160 = vmatpush1.bf16.msra.mxu0 %v928
      %1161 = vmatprep.subr.bf16.mxu0 0
      %1162 = vmatpush1.bf16.msra.mxu0 %v929
      %1163 = vmatprep.subr.bf16.mxu0 0
      %1164 = vmatpush1.bf16.msra.mxu0 %v930
      %1165 = vmatprep.subr.bf16.mxu0 0
      %1166 = vmatpush1.bf16.msra.mxu0 %v931
      %1167 = vmatprep.subr.bf16.mxu0 0
      %1168 = vmatpush1.bf16.msra.mxu0 %v932
      %1169 = vmatprep.subr.bf16.mxu0 0
      %1170 = vmatpush1.bf16.msra.mxu0 %v933
      %1171 = vmatprep.subr.bf16.mxu0 0
      %1172 = vmatpush1.bf16.msra.mxu0 %v934
      %1173 = vmatprep.subr.bf16.mxu0 0
      %1174 = vmatpush1.bf16.msra.mxu0 %v935
      %1175 = vmatprep.subr.bf16.mxu0 0
      %1176 = vmatpush1.bf16.msra.mxu0 %v936
      %1177 = vmatprep.subr.bf16.mxu0 0
      %1178 = vmatpush1.bf16.msra.mxu0 %v937
      %1179 = vmatprep.mubr.bf16.mxu0 %v264
      %1180 = vmatmul.mubr.bf16.gmra.mrb[0].mxu0 %v406
      %v1181 = vpop.f32.mrb[0].mxu0
      %v1182 = vadd.f32 %v1085, %v1181
      %v1183 = vpop.f32.mrb[0].mxu0
      %v1184 = vpop.f32.mrb[0].mxu0
      %v1185 = vadd.f32 %v1088, %v1184
      %v1186 = vpop.f32.mrb[0].mxu0
      %1187 = vmatprep.mubr.bf16.mxu0 %v266
      %1188 = vmatmul.mubr.bf16.gmra.mrb[0].mxu0 %v409
      %v1189 = vpop.f32.mrb[0].mxu0
      %v1190 = vadd.f32 %v1093, %v1189
      %v1191 = vpop.f32.mrb[0].mxu0
      %v1192 = vpop.f32.mrb[0].mxu0
      %v1193 = vadd.f32 %v1096, %v1192
      %v1194 = vpop.f32.mrb[0].mxu0
      %1195 = vmatprep.mubr.bf16.mxu0 %v268
      %1196 = vmatmul.mubr.bf16.gmra.mrb[0].mxu0 %v412
      %v1197 = vpop.f32.mrb[0].mxu0
      %v1198 = vadd.f32 %v1101, %v1197
      %v1199 = vpop.f32.mrb[0].mxu0
      %v1200 = vpop.f32.mrb[0].mxu0
      %v1201 = vadd.f32 %v1104, %v1200
      %v1202 = vpop.f32.mrb[0].mxu0
      %1203 = vmatprep.mubr.bf16.mxu0 %v270
      %1204 = vmatmul.mubr.bf16.gmra.mrb[0].mxu0 %v415
      %v1205 = vpop.f32.mrb[0].mxu0
      %v1206 = vadd.f32 %v1109, %v1205
      %v1207 = vpop.f32.mrb[0].mxu0
      %v1208 = vpop.f32.mrb[0].mxu0
      %v1209 = vadd.f32 %v1112, %v1208
      %v1210 = vpop.f32.mrb[0].mxu0
      %1211 = vmatprep.mubr.bf16.mxu0 %v272
      %1212 = vmatmul.mubr.bf16.gmra.mrb[0].mxu0 %v418
      %v1213 = vpop.f32.mrb[0].mxu0
      %v1214 = vadd.f32 %v1117, %v1213
      %v1215 = vpop.f32.mrb[0].mxu0
      %v1216 = vpop.f32.mrb[0].mxu0
      %v1217 = vadd.f32 %v1120, %v1216
      %v1218 = vpop.f32.mrb[0].mxu0
      %1219 = vmatprep.mubr.bf16.mxu0 %v274
      %1220 = vmatmul.mubr.bf16.gmra.mrb[0].mxu0 %v421
      %v1221 = vpop.f32.mrb[0].mxu0
      %v1222 = vadd.f32 %v1125, %v1221
      %v1223 = vpop.f32.mrb[0].mxu0
      %v1224 = vpop.f32.mrb[0].mxu0
      %v1225 = vadd.f32 %v1128, %v1224
      %v1226 = vpop.f32.mrb[0].mxu0
      %1227 = vmatprep.mubr.bf16.mxu0 %v276
      %1228 = vmatmul.mubr.bf16.gmra.mrb[0].mxu0 %v424
      %v1229 = vpop.f32.mrb[0].mxu0
      %v1230 = vadd.f32 %v1133, %v1229
      %v1231 = vpop.f32.mrb[0].mxu0
      %v1232 = vpop.f32.mrb[0].mxu0
      %v1233 = vadd.f32 %v1136, %v1232
      %v1234 = vpop.f32.mrb[0].mxu0
      %1235 = vmatprep.mubr.bf16.mxu0 %v278
      %1236 = vmatmul.mubr.bf16.gmra.mrb[0].mxu0 %v427
      %v1237 = vpop.f32.mrb[0].mxu0
      %v1238 = vadd.f32 %v1141, %v1237
      %v1239 = vpop.f32.mrb[0].mxu0
      %v1240 = vpop.f32.mrb[0].mxu0
      %v1241 = vadd.f32 %v1144, %v1240
      %v1242 = vpop.f32.mrb[0].mxu0
      %1243 = vdwg.mxu0
      %1244 = vmatprep.subr.bf16.mxu0 0
      %1245 = vmatpush1.bf16.msra.mxu0 %v938
      %1246 = vmatprep.subr.bf16.mxu0 0
      %1247 = vmatpush1.bf16.msra.mxu0 %v939
      %1248 = vmatprep.subr.bf16.mxu0 0
      %1249 = vmatpush1.bf16.msra.mxu0 %v940
      %1250 = vmatprep.subr.bf16.mxu0 0
      %1251 = vmatpush1.bf16.msra.mxu0 %v941
      %1252 = vmatprep.subr.bf16.mxu0 0
      %1253 = vmatpush1.bf16.msra.mxu0 %v942
      %1254 = vmatprep.subr.bf16.mxu0 0
      %1255 = vmatpush1.bf16.msra.mxu0 %v943
      %1256 = vmatprep.subr.bf16.mxu0 0
      %1257 = vmatpush1.bf16.msra.mxu0 %v944
      %1258 = vmatprep.subr.bf16.mxu0 0
      %1259 = vmatpush1.bf16.msra.mxu0 %v945
      %1260 = vmatprep.subr.bf16.mxu0 0
      %1261 = vmatpush1.bf16.msra.mxu0 %v946
      %1262 = vmatprep.subr.bf16.mxu0 0
      %1263 = vmatpush1.bf16.msra.mxu0 %v947
      %1264 = vmatprep.subr.bf16.mxu0 0
      %1265 = vmatpush1.bf16.msra.mxu0 %v948
      %1266 = vmatprep.subr.bf16.mxu0 0
      %1267 = vmatpush1.bf16.msra.mxu0 %v949
      %1268 = vmatprep.subr.bf16.mxu0 0
      %1269 = vmatpush1.bf16.msra.mxu0 %v950
      %1270 = vmatprep.subr.bf16.mxu0 0
      %1271 = vmatpush1.bf16.msra.mxu0 %v951
      %1272 = vmatprep.subr.bf16.mxu0 0
      %1273 = vmatpush1.bf16.msra.mxu0 %v952
      %1274 = vmatprep.subr.bf16.mxu0 0
      %1275 = vmatpush1.bf16.msra.mxu0 %v953
      %1276 = vmatprep.mubr.bf16.mxu0 %v409
      %1277 = vmatmul.mubr.bf16.gmra.mrb[0].mxu0 %v306
      %v1278 = vpop.f32.mrb[0].mxu0
      %v1279 = vadd.f32 %v1182, %v1278
      %v1280 = vpop.f32.mrb[0].mxu0
      %v1281 = vpop.f32.mrb[0].mxu0
      %v1282 = vadd.f32 %v1185, %v1281
      %v1283 = vpop.f32.mrb[0].mxu0
      %1284 = vmatprep.mubr.bf16.mxu0 %v412
      %1285 = vmatmul.mubr.bf16.gmra.mrb[0].mxu0 %v318
      %v1286 = vpop.f32.mrb[0].mxu0
      %v1287 = vadd.f32 %v1190, %v1286
      %v1288 = vpop.f32.mrb[0].mxu0
      %v1289 = vpop.f32.mrb[0].mxu0
      %v1290 = vadd.f32 %v1193, %v1289
      %v1291 = vpop.f32.mrb[0].mxu0
      %1292 = vmatprep.mubr.bf16.mxu0 %v415
      %1293 = vmatmul.mubr.bf16.gmra.mrb[0].mxu0 %v330
      %v1294 = vpop.f32.mrb[0].mxu0
      %v1295 = vadd.f32 %v1198, %v1294
      %v1296 = vpop.f32.mrb[0].mxu0
      %v1297 = vpop.f32.mrb[0].mxu0
      %v1298 = vadd.f32 %v1201, %v1297
      %v1299 = vpop.f32.mrb[0].mxu0
      %1300 = vmatprep.mubr.bf16.mxu0 %v418
      %1301 = vmatmul.mubr.bf16.gmra.mrb[0].mxu0 %v342
      %v1302 = vpop.f32.mrb[0].mxu0
      %v1303 = vadd.f32 %v1206, %v1302
      %v1304 = vpop.f32.mrb[0].mxu0
      %v1305 = vpop.f32.mrb[0].mxu0
      %v1306 = vadd.f32 %v1209, %v1305
      %v1307 = vpop.f32.mrb[0].mxu0
      %1308 = vmatprep.mubr.bf16.mxu0 %v421
      %1309 = vmatmul.mubr.bf16.gmra.mrb[0].mxu0 %v354
      %v1310 = vpop.f32.mrb[0].mxu0
      %v1311 = vadd.f32 %v1214, %v1310
      %v1312 = vpop.f32.mrb[0].mxu0
      %v1313 = vpop.f32.mrb[0].mxu0
      %v1314 = vadd.f32 %v1217, %v1313
      %v1315 = vpop.f32.mrb[0].mxu0
      %1316 = vmatprep.mubr.bf16.mxu0 %v424
      %1317 = vmatmul.mubr.bf16.gmra.mrb[0].mxu0 %v366
      %v1318 = vpop.f32.mrb[0].mxu0
      %v1319 = vadd.f32 %v1222, %v1318
      %v1320 = vpop.f32.mrb[0].mxu0
      %v1321 = vpop.f32.mrb[0].mxu0
      %v1322 = vadd.f32 %v1225, %v1321
      %v1323 = vpop.f32.mrb[0].mxu0
      %1324 = vmatprep.mubr.bf16.mxu0 %v427
      %1325 = vmatmul.mubr.bf16.gmra.mrb[0].mxu0 %v378
      %v1326 = vpop.f32.mrb[0].mxu0
      %v1327 = vadd.f32 %v1230, %v1326
      %v1328 = vpop.f32.mrb[0].mxu0
      %v1329 = vpop.f32.mrb[0].mxu0
      %v1330 = vadd.f32 %v1233, %v1329
      %v1331 = vpop.f32.mrb[0].mxu0
      %1332 = vmatprep.mubr.bf16.mxu0 %v453
      %1333 = vmatmul.mubr.bf16.gmra.mrb[0].mxu0 %v447
      %v1334 = vpop.f32.mrb[0].mxu0
      %v1335 = vadd.f32 %v1238, %v1334
      %v1336 = vpop.f32.mrb[0].mxu0
      %v1337 = vpop.f32.mrb[0].mxu0
      %v1338 = vadd.f32 %v1241, %v1337
      %v1339 = vpop.f32.mrb[0].mxu0
      %1340 = vdwg.mxu0
      %1341 = vmatprep.subr.bf16.mxu0 0
      %1342 = vmatpush1.bf16.msra.mxu0 %v954
      %1343 = vmatprep.subr.bf16.mxu0 0
      %1344 = vmatpush1.bf16.msra.mxu0 %v955
      %1345 = vmatprep.subr.bf16.mxu0 0
      %1346 = vmatpush1.bf16.msra.mxu0 %v956
      %1347 = vmatprep.subr.bf16.mxu0 0
      %1348 = vmatpush1.bf16.msra.mxu0 %v957
      %1349 = vmatprep.subr.bf16.mxu0 0
      %1350 = vmatpush1.bf16.msra.mxu0 %v958
      %1351 = vmatprep.subr.bf16.mxu0 0
      %1352 = vmatpush1.bf16.msra.mxu0 %v959
      %1353 = vmatprep.subr.bf16.mxu0 0
      %1354 = vmatpush1.bf16.msra.mxu0 %v960
      %1355 = vmatprep.subr.bf16.mxu0 0
      %1356 = vmatpush1.bf16.msra.mxu0 %v961
      %1357 = vmatprep.subr.bf16.mxu0 0
      %1358 = vmatpush1.bf16.msra.mxu0 %v962
      %1359 = vmatprep.subr.bf16.mxu0 0
      %1360 = vmatpush1.bf16.msra.mxu0 %v963
      %1361 = vmatprep.subr.bf16.mxu0 0
      %1362 = vmatpush1.bf16.msra.mxu0 %v964
      %1363 = vmatprep.subr.bf16.mxu0 0
      %1364 = vmatpush1.bf16.msra.mxu0 %v965
      %1365 = vmatprep.subr.bf16.mxu0 0
      %1366 = vmatpush1.bf16.msra.mxu0 %v966
      %1367 = vmatprep.subr.bf16.mxu0 0
      %1368 = vmatpush1.bf16.msra.mxu0 %v967
      %1369 = vmatprep.subr.bf16.mxu0 0
      %1370 = vmatpush1.bf16.msra.mxu0 %v968
      %1371 = vmatprep.subr.bf16.mxu0 0
      %1372 = vmatpush1.bf16.msra.mxu0 %v969
      %1373 = vmatprep.mubr.bf16.mxu0 %v318
      %1374 = vmatmul.mubr.bf16.gmra.mrb[0].mxu0 %v266
      %v1375 = vpop.f32.mrb[0].mxu0
      %v1376 = vadd.f32 %v1279, %v1375
      %v1377 = vpop.f32.mrb[0].mxu0
      %v1378 = vpop.f32.mrb[0].mxu0
      %v1379 = vadd.f32 %v1282, %v1378
      %v1380 = vpop.f32.mrb[0].mxu0
      %1381 = vmatprep.mubr.bf16.mxu0 %v330
      %1382 = vmatmul.mubr.bf16.gmra.mrb[0].mxu0 %v268
      %v1383 = vpop.f32.mrb[0].mxu0
      %v1384 = vadd.f32 %v1287, %v1383
      %v1385 = vpop.f32.mrb[0].mxu0
      %v1386 = vpop.f32.mrb[0].mxu0
      %v1387 = vadd.f32 %v1290, %v1386
      %v1388 = vpop.f32.mrb[0].mxu0
      %1389 = vmatprep.mubr.bf16.mxu0 %v342
      %1390 = vmatmul.mubr.bf16.gmra.mrb[0].mxu0 %v270
      %v1391 = vpop.f32.mrb[0].mxu0
      %v1392 = vadd.f32 %v1295, %v1391
      %v1393 = vpop.f32.mrb[0].mxu0
      %v1394 = vpop.f32.mrb[0].mxu0
      %v1395 = vadd.f32 %v1298, %v1394
      %v1396 = vpop.f32.mrb[0].mxu0
      %1397 = vmatprep.mubr.bf16.mxu0 %v354
      %1398 = vmatmul.mubr.bf16.gmra.mrb[0].mxu0 %v272
      %v1399 = vpop.f32.mrb[0].mxu0
      %v1400 = vadd.f32 %v1303, %v1399
      %v1401 = vpop.f32.mrb[0].mxu0
      %v1402 = vpop.f32.mrb[0].mxu0
      %v1403 = vadd.f32 %v1306, %v1402
      %v1404 = vpop.f32.mrb[0].mxu0
      %1405 = vmatprep.mubr.bf16.mxu0 %v366
      %1406 = vmatmul.mubr.bf16.gmra.mrb[0].mxu0 %v274
      %v1407 = vpop.f32.mrb[0].mxu0
      %v1408 = vadd.f32 %v1311, %v1407
      %v1409 = vpop.f32.mrb[0].mxu0
      %v1410 = vpop.f32.mrb[0].mxu0
      %v1411 = vadd.f32 %v1314, %v1410
      %v1412 = vpop.f32.mrb[0].mxu0
      %1413 = vmatprep.mubr.bf16.mxu0 %v378
      %1414 = vmatmul.mubr.bf16.gmra.mrb[0].mxu0 %v276
      %v1415 = vpop.f32.mrb[0].mxu0
      %v1416 = vadd.f32 %v1319, %v1415
      %v1417 = vpop.f32.mrb[0].mxu0
      %v1418 = vpop.f32.mrb[0].mxu0
      %v1419 = vadd.f32 %v1322, %v1418
      %v1420 = vpop.f32.mrb[0].mxu0
      %1421 = vmatprep.mubr.bf16.mxu0 %v447
      %1422 = vmatmul.mubr.bf16.gmra.mrb[0].mxu0 %v278
      %v1423 = vpop.f32.mrb[0].mxu0
      %v1424 = vadd.f32 %v1327, %v1423
      %v1425 = vpop.f32.mrb[0].mxu0
      %v1426 = vpop.f32.mrb[0].mxu0
      %v1427 = vadd.f32 %v1330, %v1426
      %v1428 = vpop.f32.mrb[0].mxu0
      %1429 = vmatprep.mubr.bf16.mxu0 %v466
      %1430 = vmatmul.mubr.bf16.gmra.mrb[0].mxu0 %v280
      %v1431 = vpop.f32.mrb[0].mxu0
      %v1432 = vadd.f32 %v1335, %v1431
      %v1433 = vpop.f32.mrb[0].mxu0
      %v1434 = vpop.f32.mrb[0].mxu0
      %v1435 = vadd.f32 %v1338, %v1434
      %v1436 = vpop.f32.mrb[0].mxu0
      %1437 = vdwg.mxu0
      %1438 = vmatprep.subr.bf16.mxu0 0
      %1439 = vmatpush1.bf16.msra.mxu0 %v970
      %1440 = vmatprep.subr.bf16.mxu0 0
      %1441 = vmatpush1.bf16.msra.mxu0 %v971
      %1442 = vmatprep.subr.bf16.mxu0 0
      %1443 = vmatpush1.bf16.msra.mxu0 %v972
      %1444 = vmatprep.subr.bf16.mxu0 0
      %1445 = vmatpush1.bf16.msra.mxu0 %v973
      %1446 = vmatprep.subr.bf16.mxu0 0
      %1447 = vmatpush1.bf16.msra.mxu0 %v974
      %1448 = vmatprep.subr.bf16.mxu0 0
      %1449 = vmatpush1.bf16.msra.mxu0 %v975
      %1450 = vmatprep.subr.bf16.mxu0 0
      %1451 = vmatpush1.bf16.msra.mxu0 %v976
      %1452 = vmatprep.subr.bf16.mxu0 0
      %1453 = vmatpush1.bf16.msra.mxu0 %v977
      %1454 = vmatprep.subr.bf16.mxu0 0
      %1455 = vmatpush1.bf16.msra.mxu0 0
      %1456 = vmatprep.subr.bf16.mxu0 0
      %1457 = vmatpush1.bf16.msra.mxu0 0
      %1458 = vmatprep.subr.bf16.mxu0 0
      %1459 = vmatpush1.bf16.msra.mxu0 0
      %1460 = vmatprep.subr.bf16.mxu0 0
      %1461 = vmatpush1.bf16.msra.mxu0 0
      %1462 = vmatprep.subr.bf16.mxu0 0
      %1463 = vmatpush1.bf16.msra.mxu0 0
      %1464 = vmatprep.subr.bf16.mxu0 0
      %1465 = vmatpush1.bf16.msra.mxu0 0
      %1466 = vmatprep.subr.bf16.mxu0 0
      %1467 = vmatpush1.bf16.msra.mxu0 0
      %1468 = vmatprep.subr.bf16.mxu0 0
      %1469 = vmatpush1.bf16.msra.mxu0 0
      %1470 = vmatprep.mubr.bf16.mxu0 0
      %1471 = vmatmul.mubr.bf16.gmra.mrb[0].mxu0 %v412
      %v1472 = vpop.f32.mrb[0].mxu0
      %v1473 = vadd.f32 %v1376, %v1472
      %v1474 = vpop.f32.mrb[0].mxu0
      %v1475 = vpop.f32.mrb[0].mxu0
      %v1476 = vadd.f32 %v1379, %v1475
      %v1477 = vpop.f32.mrb[0].mxu0
      %1478 = vmatprep.mubr.bf16.mxu0 0
      %1479 = vmatmul.mubr.bf16.gmra.mrb[0].mxu0 %v415
      %v1480 = vpop.f32.mrb[0].mxu0
      %v1481 = vadd.f32 %v1384, %v1480
      %v1482 = vpop.f32.mrb[0].mxu0
      %v1483 = vpop.f32.mrb[0].mxu0
      %v1484 = vadd.f32 %v1387, %v1483
      %v1485 = vpop.f32.mrb[0].mxu0
      %1486 = vmatprep.mubr.bf16.mxu0 0
      %1487 = vmatmul.mubr.bf16.gmra.mrb[0].mxu0 %v418
      %v1488 = vpop.f32.mrb[0].mxu0
      %v1489 = vadd.f32 %v1392, %v1488
      %v1490 = vpop.f32.mrb[0].mxu0
      %v1491 = vpop.f32.mrb[0].mxu0
      %v1492 = vadd.f32 %v1395, %v1491
      %v1493 = vpop.f32.mrb[0].mxu0
      %1494 = vmatprep.mubr.bf16.mxu0 0
      %1495 = vmatmul.mubr.bf16.gmra.mrb[0].mxu0 %v421
      %v1496 = vpop.f32.mrb[0].mxu0
      %v1497 = vadd.f32 %v1400, %v1496
      %v1498 = vpop.f32.mrb[0].mxu0
      %v1499 = vpop.f32.mrb[0].mxu0
      %v1500 = vadd.f32 %v1403, %v1499
      %v1501 = vpop.f32.mrb[0].mxu0
      %1502 = vmatprep.mubr.bf16.mxu0 0
      %1503 = vmatmul.mubr.bf16.gmra.mrb[0].mxu0 %v424
      %v1504 = vpop.f32.mrb[0].mxu0
      %v1505 = vadd.f32 %v1408, %v1504
      %v1506 = vpop.f32.mrb[0].mxu0
      %v1507 = vpop.f32.mrb[0].mxu0
      %v1508 = vadd.f32 %v1411, %v1507
      %v1509 = vpop.f32.mrb[0].mxu0
      %1510 = vmatprep.mubr.bf16.mxu0 0
      %1511 = vmatmul.mubr.bf16.gmra.mrb[0].mxu0 %v427
      %v1512 = vpop.f32.mrb[0].mxu0
      %v1513 = vadd.f32 %v1416, %v1512
      %v1514 = vpop.f32.mrb[0].mxu0
      %v1515 = vpop.f32.mrb[0].mxu0
      %v1516 = vadd.f32 %v1419, %v1515
      %v1517 = vpop.f32.mrb[0].mxu0
      %1518 = vmatprep.mubr.bf16.mxu0 0
      %1519 = vmatmul.mubr.bf16.gmra.mrb[0].mxu0 %v453
      %v1520 = vpop.f32.mrb[0].mxu0
      %v1521 = vadd.f32 %v1424, %v1520
      %v1522 = vpop.f32.mrb[0].mxu0
      %v1523 = vpop.f32.mrb[0].mxu0
      %v1524 = vadd.f32 %v1427, %v1523
      %v1525 = vpop.f32.mrb[0].mxu0
      %1526 = vmatprep.mubr.bf16.mxu0 0
      %1527 = vmatmul.mubr.bf16.gmra.mrb[0].mxu0 %v472
      %v1528 = vpop.f32.mrb[0].mxu0
      %v1529 = vadd.f32 %v1432, %v1528
      %v1530 = vpop.f32.mrb[0].mxu0
      %v1531 = vpop.f32.mrb[0].mxu0
      %v1532 = vadd.f32 %v1435, %v1531
      %v1533 = vpop.f32.mrb[0].mxu0
      %1534 = vdwg.mxu0
      %v1535 = vadd.f32 %v1473, %v1476
      %v1536 = vadd.f32 %v1535, %v1481
      %v1537 = vadd.f32 %v1536, %v1484
      %v1538 = vadd.f32 %v1537, %v1489
      %v1539 = vadd.f32 %v1538, %v1492
      %v1540 = vadd.f32 %v1539, %v1497
      %v1541 = vadd.f32 %v1540, %v1500
      %v1542 = vadd.f32 %v1541, %v1505
      %v1543 = vadd.f32 %v1542, %v1508
      %v1544 = vadd.f32 %v1543, %v1513
      %v1545 = vadd.f32 %v1544, %v1516
      %v1546 = vadd.f32 %v1545, %v1521
      %v1547 = vadd.f32 %v1546, %v1524
      %v1548 = vadd.f32 %v1547, %v1529
      %v1549 = vadd.f32 %v1548, %v1532
      %v1550 = vrot.slane %v1549, 4
      %v1551 = vadd.f32 %v1549, %v1550
      %v1552 = vrot.slane %v1551, 2
      %v1553 = vadd.f32 %v1551, %v1552
      %v1554 = vrot.slane %v1553, 1
      %v1555 = vadd.f32 %v1553, %v1554
      %v1556 = vmul.f32 %v1473, %v1473
      %v1557 = vmul.f32 %v1476, %v1476
      %v1558 = vmul.f32 %v1481, %v1481
      %v1559 = vmul.f32 %v1484, %v1484
      %v1560 = vmul.f32 %v1489, %v1489
      %v1561 = vmul.f32 %v1492, %v1492
      %v1562 = vmul.f32 %v1497, %v1497
      %v1563 = vmul.f32 %v1500, %v1500
      %v1564 = vmul.f32 %v1505, %v1505
      %v1565 = vmul.f32 %v1508, %v1508
      %v1566 = vmul.f32 %v1513, %v1513
      %v1567 = vmul.f32 %v1516, %v1516
      %v1568 = vmul.f32 %v1521, %v1521
      %v1569 = vmul.f32 %v1524, %v1524
      %v1570 = vmul.f32 %v1529, %v1529
      %v1571 = vmul.f32 %v1532, %v1532
      %v1572 = vadd.f32 %v1556, %v1557
      %v1573 = vadd.f32 %v1572, %v1558
      %v1574 = vadd.f32 %v1573, %v1559
      %v1575 = vadd.f32 %v1574, %v1560
      %v1576 = vadd.f32 %v1575, %v1561
      %v1577 = vadd.f32 %v1576, %v1562
      %v1578 = vadd.f32 %v1577, %v1563
      %v1579 = vadd.f32 %v1578, %v1564
      %v1580 = vadd.f32 %v1579, %v1565
      %v1581 = vadd.f32 %v1580, %v1566
      %v1582 = vadd.f32 %v1581, %v1567
      %v1583 = vadd.f32 %v1582, %v1568
      %v1584 = vadd.f32 %v1583, %v1569
      %v1585 = vadd.f32 %v1584, %v1570
      %v1586 = vadd.f32 %v1585, %v1571
      %v1587 = vrot.slane %v1586, 4
      %v1588 = vadd.f32 %v1586, %v1587
      %v1589 = vrot.slane %v1588, 2
      %v1590 = vadd.f32 %v1588, %v1589
      %v1591 = vrot.slane %v1590, 1
      %v1592 = vadd.f32 %v1590, %v1591
      %vm1593 = vcmask 1040384
      %v1594 = vsel %vm1593, %v1555, %v1592
      %1595 = vst [vmem:[%s230] sm:$0x3] %v1594
      %1596 = vst [vmem:[%s221] sm:$0xff] %v1473
      %1597 = vst [vmem:[%s221 + $0x8] sm:$0xff] %v1476
      %1598 = vst [vmem:[%s221 + $0x10] sm:$0xff] %v1481
      %1599 = vst [vmem:[%s221 + $0x18] sm:$0xff] %v1484
      %1600 = vst [vmem:[%s221 + $0x20] sm:$0xff] %v1489
      %1601 = vst [vmem:[%s221 + $0x28] sm:$0xff] %v1492
      %1602 = vst [vmem:[%s221 + $0x30] sm:$0xff] %v1497
      %1603 = vst [vmem:[%s221 + $0x38] sm:$0xff] %v1500
      %1604 = vst [vmem:[%s221 + $0x40] sm:$0xff] %v1505
      %1605 = vst [vmem:[%s221 + $0x48] sm:$0xff] %v1508
      %1606 = vst [vmem:[%s221 + $0x50] sm:$0xff] %v1513
      %1607 = vst [vmem:[%s221 + $0x58] sm:$0xff] %v1516
      %1608 = vst [vmem:[%s221 + $0x60] sm:$0xff] %v1521
      %1609 = vst [vmem:[%s221 + $0x68] sm:$0xff] %v1524
      %1610 = vst [vmem:[%s221 + $0x70] sm:$0xff] %v1529
      %1611 = vst [vmem:[%s221 + $0x78] sm:$0xff] %v1532
      %s1612 = smul.u32 8, %s20
      %p1613 = scmp.lt.s32.totalorder %s19, 1
      %s1614 = scalar_select %p1613, %s19, 1
      %p1615 = scmp.lt.s32.totalorder %s1612, 15
      %s1616 = scalar_select %p1615, %s1612, 15
      %s1617 = smul.addr %s1616, 2
      %s1618 = smul.addr %s1614, 32
      %s1619 = sadd.s32 %s1617, %s1618
      %s1620 = smul.addr %s1619, 8
      %s1621 = scalar_lea.vmem %s2, %s1620
      %p1622 = scmp.lt.s32.totalorder %s19, 1
      %s1623 = scalar_select %p1622, %s19, 1
      %p1624 = scmp.lt.s32.totalorder %s20, 1
      %s1625 = scalar_select %p1624, %s20, 1
      %s1626 = smul.addr %s1623, 2
      %s1627 = sadd.s32 %s1625, %s1626
      %s1628 = smul.addr %s1627, 2
      %s1629 = scalar_lea.vmem %s3, %s1628
      // Predicated region
      $region29: #{conv_block_forward.3} parent=27 // pred_check
        %p1630 = pneg %p96
      $region30: #{conv_block_forward.3} parent=27 // pred_check_branch
        %1632 = sbr.rel (%p1630) target = $region32
      $region31: #{conv_block_forward.3} parent=27 // pred_region
        %s1633 = smul.u32 8, %s20
      $region32: #{conv_block_forward.3} parent=27 // pred_fallthru
        _
      // Predicated region
      $region33: #{conv_block_forward.3} parent=27 // pred_check
        %p1634 = pneg %p124
      $region34: #{conv_block_forward.3} parent=27 // pred_check_branch
        %1636 = sbr.rel (%p1634) target = $region36
      $region35: #{conv_block_forward.3} parent=27 // pred_region
        _
      $region36: #{conv_block_forward.3} parent=27 // pred_fallthru
        _
    $region28: #{conv_block_forward.3} parent=5 // pred_fallthru
      _
    %p1637 = scmp.le.s32.totalorder 2, %s10
    // Predicated region
    $region37: #{conv_block_forward.3} parent=5 // pred_check
      %p1638 = pneg %p1637
    $region38: #{conv_block_forward.3} parent=5 // pred_check_branch
      %1640 = sbr.rel (%p1638) target = $region40
    $region39: #{conv_block_forward.3} parent=5 // pred_region
      %s1641 = ssub.s32 %s10, 2
      // Predicated region
      $region41: #{conv_block_forward.3} parent=39 // pred_check
        %p1642 = pneg %p102
      $region42: #{conv_block_forward.3} parent=39 // pred_check_branch
        %1644 = sbr.rel (%p1642) target = $region44
      $region43: #{conv_block_forward.3} parent=39 // pred_region
        %s1645 = smul.u32 8, %s22
        %p1646 = scmp.lt.s32.totalorder %s21, 1
        %s1647 = scalar_select %p1646, %s21, 1
        %p1648 = scmp.lt.s32.totalorder %s1645, 15
        %s1649 = scalar_select %p1648, %s1645, 15
        %s1650 = smul.addr %s1649, 2
        %s1651 = smul.addr %s1647, 32
        %s1652 = sadd.s32 %s1650, %s1651
        %s1653 = smul.addr %s1652, 8
        %s1654 = scalar_lea.vmem %s2, %s1653
      $region44: #{conv_block_forward.3} parent=39 // pred_fallthru
        _
      // Predicated region
      $region45: #{conv_block_forward.3} parent=39 // pred_check
        %p1655 = pneg %p130
      $region46: #{conv_block_forward.3} parent=39 // pred_check_branch
        %1657 = sbr.rel (%p1655) target = $region48
      $region47: #{conv_block_forward.3} parent=39 // pred_region
        %p1658 = scmp.lt.s32.totalorder %s21, 1
        %s1659 = scalar_select %p1658, %s21, 1
        %p1660 = scmp.lt.s32.totalorder %s22, 1
        %s1661 = scalar_select %p1660, %s22, 1
        %s1662 = smul.addr %s1659, 2
        %s1663 = sadd.s32 %s1661, %s1662
        %s1664 = smul.addr %s1663, 2
        %s1665 = scalar_lea.vmem %s3, %s1664
      $region48: #{conv_block_forward.3} parent=39 // pred_fallthru
        _
    $region40: #{conv_block_forward.3} parent=5 // pred_fallthru
      _
  $region6: #{conv_block_forward.3} parent=0 // loop_footer
    %s14 = sadd.s32 1, %s10
  $region7: #{conv_block_forward.3} parent=0 // loop_footer_branch
    %9 = sbr.rel target = $region3
  $region8: #{conv_block_forward.3} parent=0 // loop_exit
    _

// kernel: conv_block_forward.4
$region0: #{conv_block_forward.4}
  #allocation0 [shape = 'u32[]', space=smem, size = 0x4, offset = 0x4, fixed_abs, tag = 'smem constant byte address 0x4 - core index']
  #allocation1 [shape = 'u32[144,128]{1,0:T(1,128)}', space=vmem, size = 0x12000, scoped, tag = 'internal scratch']
  %s0 = inlined_call_operand.vmem [shape: f32[2,2,10,18,128], index: 0, kind: input, shape index: {}]
  %s1 = inlined_call_operand.vmem [shape: bf16[1152,128], index: 1, kind: input, shape index: {}]
  %s2 = inlined_call_operand.vmem [shape: f32[1,128], index: 2, kind: input, shape index: {}]
  %s3 = inlined_call_operand.vmem [shape: f32[1,128], index: 3, kind: input, shape index: {}]
  %s4 = inlined_call_operand.vmem [shape: f32[2,16,16,128], index: 4, kind: output, shape index: {0}]
  %s5 = inlined_call_operand.vmem [shape: f32[2,2,2,128], index: 5, kind: output, shape index: {1}]
  %6 = xla_tuple %s4, %s5
  %s7 = sld [smem:[#allocation0]]
  $region57: #{conv_block_forward.4} parent=0
    _
  %s9 = ssub.s32 1, %s7
  %s10 = scalar_select 0, %s9, %s7
  loop: start=0, step=1, limit=6
  $region2: #{conv_block_forward.4} parent=0 // loop_pre_header
    _
  $region3: #{conv_block_forward.4} parent=0 // loop_header
    %s12 = sphi 0, %s16
    %p13 = scmp.ge.s32.totalorder %s12, 6
    %s19 = sphi 0, %s31
    %s20 = sphi 0, %s27
    %s21 = sphi 0, %s19
    %s22 = sphi 0, %s20
    %s23 = sphi 0, %s21
    %s24 = sphi 0, %s22
    %s36 = sphi 0, %s38
    %s39 = sphi 0, %s36
    %s40 = sphi 0, %s39
    %s56 = sphi 0, %s40
    %s60 = sphi 0, %s60
    %s62 = sphi 0, %s60
    %s63 = sphi 0, %s62
    %s77 = sphi 0, %s63
    %s81 = sphi 0, %s81
    %s83 = sphi 0, %s81
    %s84 = sphi 0, %s83
    %s98 = sphi 0, %s84
    %s102 = sphi 0, %s102
    %s104 = sphi 0, %s102
    %s105 = sphi 0, %s104
    %s119 = sphi 0, %s105
    %s127 = sphi 0, %s129
    %s130 = sphi 0, %s127
    %s131 = sphi 0, %s130
    %s147 = sphi 0, %s131
    %s155 = sphi 0, %s157
    %s158 = sphi 0, %s155
    %s159 = sphi 0, %s158
    %s175 = sphi 0, %s159
  $region4: #{conv_block_forward.4} parent=0 // loop_header_branch
    %15 = sbr.rel (%p13) target = $region8
  $region5: #{conv_block_forward.4} parent=0 // loop_body
    %s17 = ssub.s32 %s12, 1
    %s18 = ssub.s32 %s12, 2
    %s25 = sadd.s32 1, %s20
    %p26 = scmp.ge.s32.totalorder %s25, 2
    %s27 = scalar_select %p26, 0, %s25
    %s28 = sadd.s32 1, %s19
    %s29 = scalar_select %p26, %s28, %s19
    %p30 = scmp.ge.s32.totalorder %s29, 2
    %s31 = scalar_select %p30, 0, %s29
    %s32 = ssub.s32 %s19, %s31
    %s33 = ssub.s32 %s20, %s27
    %s34 = sor.u32 %s32, %s33
    %p35 = scmp.eq.s32.totalorder %s34, 0
    %s37 = sadd.s32 %s36, 1
    %s38 = scalar_select %p35, %s36, %s37
    %p41 = pneg %p35
    %p42 = scmp.eq.s32.totalorder %s12, 3
    %p43 = por %p41, %p42
    %p44 = scmp.ne.s32.totalorder %s36, %s39
    %p45 = scmp.eq.s32.totalorder %s12, 0
    %p46 = por %p44, %p45
    %p47 = scmp.ne.s32.totalorder %s36, %s39
    %p48 = scmp.eq.s32.totalorder %s17, 3
    %p49 = por %p47, %p48
    %p50 = scmp.ne.s32.totalorder %s39, %s40
    %p51 = scmp.eq.s32.totalorder %s17, 0
    %p52 = por %p50, %p51
    %p53 = scmp.ne.s32.totalorder %s39, %s40
    %p54 = scmp.eq.s32.totalorder %s18, 3
    %p55 = por %p53, %p54
    %p57 = scmp.ne.s32.totalorder %s40, %s56
    %p58 = scmp.eq.s32.totalorder %s18, 0
    %p59 = por %p57, %p58
    %s61 = sadd.s32 %s60, 1
    %p64 = scmp.eq.s32.totalorder %s12, 3
    %p65 = scmp.ne.s32.totalorder %s60, %s62
    %p66 = scmp.eq.s32.totalorder %s12, 0
    %p67 = por %p65, %p66
    %p68 = scmp.ne.s32.totalorder %s60, %s62
    %p69 = scmp.eq.s32.totalorder %s17, 3
    %p70 = por %p68, %p69
    %p71 = scmp.ne.s32.totalorder %s62, %s63
    %p72 = scmp.eq.s32.totalorder %s17, 0
    %p73 = por %p71, %p72
    %p74 = scmp.ne.s32.totalorder %s62, %s63
    %p75 = scmp.eq.s32.totalorder %s18, 3
    %p76 = por %p74, %p75
    %p78 = scmp.ne.s32.totalorder %s63, %s77
    %p79 = scmp.eq.s32.totalorder %s18, 0
    %p80 = por %p78, %p79
    %s82 = sadd.s32 %s81, 1
    %p85 = scmp.eq.s32.totalorder %s12, 3
    %p86 = scmp.ne.s32.totalorder %s81, %s83
    %p87 = scmp.eq.s32.totalorder %s12, 0
    %p88 = por %p86, %p87
    %p89 = scmp.ne.s32.totalorder %s81, %s83
    %p90 = scmp.eq.s32.totalorder %s17, 3
    %p91 = por %p89, %p90
    %p92 = scmp.ne.s32.totalorder %s83, %s84
    %p93 = scmp.eq.s32.totalorder %s17, 0
    %p94 = por %p92, %p93
    %p95 = scmp.ne.s32.totalorder %s83, %s84
    %p96 = scmp.eq.s32.totalorder %s18, 3
    %p97 = por %p95, %p96
    %p99 = scmp.ne.s32.totalorder %s84, %s98
    %p100 = scmp.eq.s32.totalorder %s18, 0
    %p101 = por %p99, %p100
    %s103 = sadd.s32 %s102, 1
    %p106 = scmp.eq.s32.totalorder %s12, 3
    %p107 = scmp.ne.s32.totalorder %s102, %s104
    %p108 = scmp.eq.s32.totalorder %s12, 0
    %p109 = por %p107, %p108
    %p110 = scmp.ne.s32.totalorder %s102, %s104
    %p111 = scmp.eq.s32.totalorder %s17, 3
    %p112 = por %p110, %p111
    %p113 = scmp.ne.s32.totalorder %s104, %s105
    %p114 = scmp.eq.s32.totalorder %s17, 0
    %p115 = por %p113, %p114
    %p116 = scmp.ne.s32.totalorder %s104, %s105
    %p117 = scmp.eq.s32.totalorder %s18, 3
    %p118 = por %p116, %p117
    %p120 = scmp.ne.s32.totalorder %s105, %s119
    %p121 = scmp.eq.s32.totalorder %s18, 0
    %p122 = por %p120, %p121
    %s123 = ssub.s32 %s19, %s31
    %s124 = ssub.s32 %s20, %s27
    %s125 = sor.u32 %s123, %s124
    %p126 = scmp.eq.s32.totalorder %s125, 0
    %s128 = sadd.s32 %s127, 1
    %s129 = scalar_select %p126, %s127, %s128
    %p132 = pneg %p126
    %p133 = scmp.eq.s32.totalorder %s12, 3
    %p134 = por %p132, %p133
    %p135 = scmp.ne.s32.totalorder %s127, %s130
    %p136 = scmp.eq.s32.totalorder %s12, 0
    %p137 = por %p135, %p136
    %p138 = scmp.ne.s32.totalorder %s127, %s130
    %p139 = scmp.eq.s32.totalorder %s17, 3
    %p140 = por %p138, %p139
    %p141 = scmp.ne.s32.totalorder %s130, %s131
    %p142 = scmp.eq.s32.totalorder %s17, 0
    %p143 = por %p141, %p142
    %p144 = scmp.ne.s32.totalorder %s130, %s131
    %p145 = scmp.eq.s32.totalorder %s18, 3
    %p146 = por %p144, %p145
    %p148 = scmp.ne.s32.totalorder %s131, %s147
    %p149 = scmp.eq.s32.totalorder %s18, 0
    %p150 = por %p148, %p149
    %s151 = ssub.s32 %s19, %s31
    %s152 = ssub.s32 %s20, %s27
    %s153 = sor.u32 %s151, %s152
    %p154 = scmp.eq.s32.totalorder %s153, 0
    %s156 = sadd.s32 %s155, 1
    %s157 = scalar_select %p154, %s155, %s156
    %p160 = pneg %p154
    %p161 = scmp.eq.s32.totalorder %s12, 3
    %p162 = por %p160, %p161
    %p163 = scmp.ne.s32.totalorder %s155, %s158
    %p164 = scmp.eq.s32.totalorder %s12, 0
    %p165 = por %p163, %p164
    %p166 = scmp.ne.s32.totalorder %s155, %s158
    %p167 = scmp.eq.s32.totalorder %s17, 3
    %p168 = por %p166, %p167
    %p169 = scmp.ne.s32.totalorder %s158, %s159
    %p170 = scmp.eq.s32.totalorder %s17, 0
    %p171 = por %p169, %p170
    %p172 = scmp.ne.s32.totalorder %s158, %s159
    %p173 = scmp.eq.s32.totalorder %s18, 3
    %p174 = por %p172, %p173
    %p176 = scmp.ne.s32.totalorder %s159, %s175
    %p177 = scmp.eq.s32.totalorder %s18, 0
    %p178 = por %p176, %p177
    %p179 = scmp.le.s32.totalorder 1, %s12
    %p180 = scmp.lt.s32.totalorder %s12, 5
    %p181 = pnand %p179, %p180
    %p182 = pneg %p181
    // Predicated region
    $region9: #{conv_block_forward.4} parent=5 // pred_check
      _
    $region10: #{conv_block_forward.4} parent=5 // pred_check_branch
      %184 = sbr.rel (%p181) target = $region12
    $region11: #{conv_block_forward.4} parent=5 // pred_region
      %s185 = ssub.s32 %s12, 1
      // Predicated region
      $region13: #{conv_block_forward.4} parent=11 // pred_check
        %p186 = pneg %p73
      $region14: #{conv_block_forward.4} parent=11 // pred_check_branch
        %188 = sbr.rel (%p186) target = $region16
      $region15: #{conv_block_forward.4} parent=11 // pred_region
        _
      $region16: #{conv_block_forward.4} parent=11 // pred_fallthru
        _
      // Predicated region
      $region17: #{conv_block_forward.4} parent=11 // pred_check
        %p189 = pneg %p94
      $region18: #{conv_block_forward.4} parent=11 // pred_check_branch
        %191 = sbr.rel (%p189) target = $region20
      $region19: #{conv_block_forward.4} parent=11 // pred_region
        _
      $region20: #{conv_block_forward.4} parent=11 // pred_fallthru
        _
      // Predicated region
      $region21: #{conv_block_forward.4} parent=11 // pred_check
        %p192 = pneg %p115
      $region22: #{conv_block_forward.4} parent=11 // pred_check_branch
        %194 = sbr.rel (%p192) target = $region24
      $region23: #{conv_block_forward.4} parent=11 // pred_region
        _
      $region24: #{conv_block_forward.4} parent=11 // pred_fallthru
        _
    $region12: #{conv_block_forward.4} parent=5 // pred_fallthru
      _
    %p195 = scmp.lt.s32.totalorder %s12, 4
    // Predicated region
    $region25: #{conv_block_forward.4} parent=5 // pred_check
      %p196 = pneg %p195
    $region26: #{conv_block_forward.4} parent=5 // pred_check_branch
      %198 = sbr.rel (%p196) target = $region28
    $region27: #{conv_block_forward.4} parent=5 // pred_region
      // Predicated region
      $region29: #{conv_block_forward.4} parent=27 // pred_check
        %p199 = pneg %p46
      $region30: #{conv_block_forward.4} parent=27 // pred_check_branch
        %201 = sbr.rel (%p199) target = $region32
      $region31: #{conv_block_forward.4} parent=27 // pred_region
        %p202 = scmp.lt.s32.totalorder %s19, 1
        %s203 = scalar_select %p202, %s19, 1
        %p204 = scmp.lt.s32.totalorder %s20, 1
        %s205 = scalar_select %p204, %s20, 1
        %s206 = smul.addr %s205, 30
        %s207 = smul.addr %s203, 60
        %s208 = sadd.s32 %s206, %s207
        %s209 = smul.addr %s208, 8
        %s210 = scalar_lea.vmem %s0, %s209
      $region32: #{conv_block_forward.4} parent=27 // pred_fallthru
        _
    $region28: #{conv_block_forward.4} parent=5 // pred_fallthru
      _
    %p211 = scmp.le.s32.totalorder 1, %s12
    %p212 = scmp.lt.s32.totalorder %s12, 5
    %p213 = pnand %p211, %p212
    %p214 = pneg %p213
    // Predicated region
    $region33: #{conv_block_forward.4} parent=5 // pred_check
      _
    $region34: #{conv_block_forward.4} parent=5 // pred_check_branch
      %216 = sbr.rel (%p213) target = $region36
    $region35: #{conv_block_forward.4} parent=5 // pred_region
      %s217 = ssub.s32 %s12, 1
      %p218 = scmp.lt.s32.totalorder %s21, 1
      %s219 = scalar_select %p218, %s21, 1
      %p220 = scmp.lt.s32.totalorder %s22, 1
      %s221 = scalar_select %p220, %s22, 1
      %s222 = smul.addr %s221, 30
      %s223 = smul.addr %s219, 60
      %s224 = sadd.s32 %s222, %s223
      %s225 = smul.addr %s224, 8
      %s226 = scalar_lea.vmem %s0, %s225
      %p227 = pneg %p52
      %p228 = pneg %p49
      %p229 = pneg %p73
      %p230 = pneg %p70
      %p231 = pneg %p94
      %p232 = pneg %p91
      %p233 = pneg %p115
      %p234 = pneg %p112
      %p235 = pneg %p143
      %p236 = pneg %p140
      %s237 = smul.u32 8, %s22
      %p238 = scmp.lt.s32.totalorder %s21, 1
      %s239 = scalar_select %p238, %s21, 1
      %p240 = scmp.lt.s32.totalorder %s237, 15
      %s241 = scalar_select %p240, %s237, 15
      %s242 = smul.addr %s241, 2
      %s243 = smul.addr %s239, 32
      %s244 = sadd.s32 %s242, %s243
      %s245 = smul.addr %s244, 8
      %s246 = scalar_lea.vmem %s4, %s245
      %p247 = pneg %p171
      %p248 = pneg %p168
      %p249 = scmp.lt.s32.totalorder %s21, 1
      %s250 = scalar_select %p249, %s21, 1
      %p251 = scmp.lt.s32.totalorder %s22, 1
      %s252 = scalar_select %p251, %s22, 1
      %s253 = smul.addr %s250, 2
      %s254 = sadd.s32 %s252, %s253
      %s255 = smul.addr %s254, 2
      %s256 = scalar_lea.vmem %s5, %s255
      %p257 = scmp.lt.s32.totalorder %s21, 1
      %s258 = scalar_select %p257, %s21, 1
      %p259 = scmp.lt.s32.totalorder %s22, 1
      %s260 = scalar_select %p259, %s22, 1
      %s261 = smul.addr %s260, 30
      %s262 = smul.addr %s258, 60
      %s263 = sadd.s32 %s261, %s262
      %s264 = smul.addr %s263, 8
      %s265 = scalar_lea.vmem %s0, %s264
      %s266 = smul.u32 8, %s22
      %p267 = scmp.lt.s32.totalorder %s21, 1
      %s268 = scalar_select %p267, %s21, 1
      %p269 = scmp.lt.s32.totalorder %s266, 15
      %s270 = scalar_select %p269, %s266, 15
      %s271 = smul.addr %s270, 2
      %s272 = smul.addr %s268, 32
      %s273 = sadd.s32 %s271, %s272
      %s274 = smul.addr %s273, 8
      %s275 = scalar_lea.vmem %s4, %s274
      %s276 = smul.u32 8, %s22
      %p277 = scmp.lt.s32.totalorder %s21, 1
      %s278 = scalar_select %p277, %s21, 1
      %p279 = scmp.lt.s32.totalorder %s22, 1
      %s280 = scalar_select %p279, %s22, 1
      %s281 = smul.addr %s278, 2
      %s282 = sadd.s32 %s280, %s281
      %s283 = smul.addr %s282, 2
      %s284 = scalar_lea.vmem %s5, %s283
      %v286 = vld [vmem:[%s265] sm:$0xff]
      %v287 = vld [vmem:[%s265 + $0x8] sm:$0xff]
      %v288 = vld [vmem:[%s265 + $0x10] sm:$0x3]
      %v289 = vld [vmem:[%s265 + $0x18] sm:$0xff]
      %v290 = vld [vmem:[%s265 + $0x20] sm:$0xff]
      %v291 = vld [vmem:[%s265 + $0x28] sm:$0x3]
      %v292 = vld [vmem:[%s265 + $0x30] sm:$0xff]
      %v293 = vld [vmem:[%s265 + $0x38] sm:$0xff]
      %v294 = vld [vmem:[%s265 + $0x40] sm:$0x3]
      %v295 = vld [vmem:[%s265 + $0x48] sm:$0xff]
      %v296 = vld [vmem:[%s265 + $0x50] sm:$0xff]
      %v297 = vld [vmem:[%s265 + $0x58] sm:$0x3]
      %v298 = vld [vmem:[%s265 + $0x60] sm:$0xff]
      %v299 = vld [vmem:[%s265 + $0x68] sm:$0xff]
      %v300 = vld [vmem:[%s265 + $0x70] sm:$0x3]
      %v301 = vld [vmem:[%s265 + $0x78] sm:$0xff]
      %v302 = vld [vmem:[%s265 + $0x80] sm:$0xff]
      %v303 = vld [vmem:[%s265 + $0x88] sm:$0x3]
      %v304 = vld [vmem:[%s265 + $0x90] sm:$0xff]
      %v305 = vld [vmem:[%s265 + $0x98] sm:$0xff]
      %v306 = vld [vmem:[%s265 + $0xa0] sm:$0x3]
      %v307 = vld [vmem:[%s265 + $0xa8] sm:$0xff]
      %v308 = vld [vmem:[%s265 + $0xb0] sm:$0xff]
      %v309 = vld [vmem:[%s265 + $0xb8] sm:$0x3]
      %v310 = vld [vmem:[%s265 + $0xc0] sm:$0xff]
      %v311 = vld [vmem:[%s265 + $0xc8] sm:$0xff]
      %v312 = vld [vmem:[%s265 + $0xd0] sm:$0x3]
      %v313 = vld [vmem:[%s265 + $0xd8] sm:$0xff]
      %v314 = vld [vmem:[%s265 + $0xe0] sm:$0xff]
      %v315 = vld [vmem:[%s265 + $0xe8] sm:$0x3]
      %v316 = vld [vmem:[%s2] sm:$0x1]
      %v318 = vlaneseq
      %v319 = vshrl.u32 %v318, 7
      %v320 = vsub.s32 0, %v319
      %v321 = vrot.slane %v316, %v320
      %v323 = vmul.f32 %v286, %v321
      %v324 = vmul.f32 %v287, %v321
      %v325 = vmul.f32 %v288, %v321
      %v326 = vmul.f32 %v289, %v321
      %v327 = vmul.f32 %v290, %v321
      %v328 = vmul.f32 %v291, %v321
      %v329 = vmul.f32 %v292, %v321
      %v330 = vmul.f32 %v293, %v321
      %v331 = vmul.f32 %v294, %v321
      %v332 = vmul.f32 %v295, %v321
      %v333 = vmul.f32 %v296, %v321
      %v334 = vmul.f32 %v297, %v321
      %v335 = vmul.f32 %v298, %v321
      %v336 = vmul.f32 %v299, %v321
      %v337 = vmul.f32 %v300, %v321
      %v338 = vmul.f32 %v301, %v321
      %v339 = vmul.f32 %v302, %v321
      %v340 = vmul.f32 %v303, %v321
      %v341 = vmul.f32 %v304, %v321
      %v342 = vmul.f32 %v305, %v321
      %v343 = vmul.f32 %v306, %v321
      %v344 = vmul.f32 %v307, %v321
      %v345 = vmul.f32 %v308, %v321
      %v346 = vmul.f32 %v309, %v321
      %v347 = vmul.f32 %v310, %v321
      %v348 = vmul.f32 %v311, %v321
      %v349 = vmul.f32 %v312, %v321
      %v350 = vmul.f32 %v313, %v321
      %v351 = vmul.f32 %v314, %v321
      %v352 = vmul.f32 %v315, %v321
      %v353 = vld [vmem:[%s3] sm:$0x1]
      %v355 = vlaneseq
      %v356 = vshrl.u32 %v355, 7
      %v357 = vsub.s32 0, %v356
      %v358 = vrot.slane %v353, %v357
      %v360 = vadd.f32 %v323, %v358
      %v361 = vadd.f32 %v324, %v358
      %v362 = vadd.f32 %v325, %v358
      %v363 = vadd.f32 %v326, %v358
      %v364 = vadd.f32 %v327, %v358
      %v365 = vadd.f32 %v328, %v358
      %v366 = vadd.f32 %v329, %v358
      %v367 = vadd.f32 %v330, %v358
      %v368 = vadd.f32 %v331, %v358
      %v369 = vadd.f32 %v332, %v358
      %v370 = vadd.f32 %v333, %v358
      %v371 = vadd.f32 %v334, %v358
      %v372 = vadd.f32 %v335, %v358
      %v373 = vadd.f32 %v336, %v358
      %v374 = vadd.f32 %v337, %v358
      %v375 = vadd.f32 %v338, %v358
      %v376 = vadd.f32 %v339, %v358
      %v377 = vadd.f32 %v340, %v358
      %v378 = vadd.f32 %v341, %v358
      %v379 = vadd.f32 %v342, %v358
      %v380 = vadd.f32 %v343, %v358
      %v381 = vadd.f32 %v344, %v358
      %v382 = vadd.f32 %v345, %v358
      %v383 = vadd.f32 %v346, %v358
      %v384 = vadd.f32 %v347, %v358
      %v385 = vadd.f32 %v348, %v358
      %v386 = vadd.f32 %v349, %v358
      %v387 = vadd.f32 %v350, %v358
      %v388 = vadd.f32 %v351, %v358
      %v389 = vadd.f32 %v352, %v358
      %v390 = vmax.f32 %v360, 0.0
      %v391 = vmax.f32 %v361, 0.0
      %v392 = vmax.f32 %v362, 0.0
      %v393 = vmax.f32 %v363, 0.0
      %v394 = vmax.f32 %v364, 0.0
      %v395 = vmax.f32 %v365, 0.0
      %v396 = vmax.f32 %v366, 0.0
      %v397 = vmax.f32 %v367, 0.0
      %v398 = vmax.f32 %v368, 0.0
      %v399 = vmax.f32 %v369, 0.0
      %v400 = vmax.f32 %v370, 0.0
      %v401 = vmax.f32 %v371, 0.0
      %v402 = vmax.f32 %v372, 0.0
      %v403 = vmax.f32 %v373, 0.0
      %v404 = vmax.f32 %v374, 0.0
      %v405 = vmax.f32 %v375, 0.0
      %v406 = vmax.f32 %v376, 0.0
      %v407 = vmax.f32 %v377, 0.0
      %v408 = vmax.f32 %v378, 0.0
      %v409 = vmax.f32 %v379, 0.0
      %v410 = vmax.f32 %v380, 0.0
      %v411 = vmax.f32 %v381, 0.0
      %v412 = vmax.f32 %v382, 0.0
      %v413 = vmax.f32 %v383, 0.0
      %v414 = vmax.f32 %v384, 0.0
      %v415 = vmax.f32 %v385, 0.0
      %v416 = vmax.f32 %v386, 0.0
      %v417 = vmax.f32 %v387, 0.0
      %v418 = vmax.f32 %v388, 0.0
      %v419 = vmax.f32 %v389, 0.0
      %v420 = vpack.c.bf16 %v391, %v390
      %v421 = vpack.c.bf16 %v392, %v392
      %v422 = vpack.c.bf16 %v394, %v393
      %v423 = vpack.c.bf16 %v395, %v395
      %v424 = vpack.c.bf16 %v397, %v396
      %v425 = vpack.c.bf16 %v398, %v398
      %v426 = vpack.c.bf16 %v400, %v399
      %v427 = vpack.c.bf16 %v401, %v401
      %v428 = vpack.c.bf16 %v403, %v402
      %v429 = vpack.c.bf16 %v404, %v404
      %v430 = vpack.c.bf16 %v406, %v405
      %v431 = vpack.c.bf16 %v407, %v407
      %v432 = vpack.c.bf16 %v409, %v408
      %v433 = vpack.c.bf16 %v410, %v410
      %v434 = vpack.c.bf16 %v412, %v411
      %v435 = vpack.c.bf16 %v413, %v413
      %v436 = vpack.c.bf16 %v415, %v414
      %v437 = vpack.c.bf16 %v416, %v416
      %v438 = vpack.c.bf16 %v418, %v417
      %v439 = vpack.c.bf16 %v419, %v419
      %vm440 = vsmask.f32 7424
      %v442 = vshrl.u32 %v420, 16
      %v444 = vshll.u32 %v420, 16
      %v446 = vrot.slane %v444, 1
      %v447 = vor.u32 %v442, %v446
      %v449 = vshll.u32 %v421, 16
      %v451 = vrot.slane %v449, 1
      %v452 = vsel %vm440, %v447, %v451
      %v454 = vshrl.u32 %v422, 16
      %v456 = vshll.u32 %v422, 16
      %v458 = vrot.slane %v456, 1
      %v459 = vor.u32 %v454, %v458
      %v461 = vshll.u32 %v423, 16
      %v463 = vrot.slane %v461, 1
      %v464 = vsel %vm440, %v459, %v463
      %v466 = vshrl.u32 %v424, 16
      %v468 = vshll.u32 %v424, 16
      %v470 = vrot.slane %v468, 1
      %v471 = vor.u32 %v466, %v470
      %v473 = vshll.u32 %v425, 16
      %v475 = vrot.slane %v473, 1
      %v476 = vsel %vm440, %v471, %v475
      %v478 = vshrl.u32 %v426, 16
      %v480 = vshll.u32 %v426, 16
      %v482 = vrot.slane %v480, 1
      %v483 = vor.u32 %v478, %v482
      %v485 = vshll.u32 %v427, 16
      %v487 = vrot.slane %v485, 1
      %v488 = vsel %vm440, %v483, %v487
      %v490 = vshrl.u32 %v428, 16
      %v492 = vshll.u32 %v428, 16
      %v494 = vrot.slane %v492, 1
      %v495 = vor.u32 %v490, %v494
      %v497 = vshll.u32 %v429, 16
      %v499 = vrot.slane %v497, 1
      %v500 = vsel %vm440, %v495, %v499
      %v502 = vshrl.u32 %v430, 16
      %v504 = vshll.u32 %v430, 16
      %v506 = vrot.slane %v504, 1
      %v507 = vor.u32 %v502, %v506
      %v509 = vshll.u32 %v431, 16
      %v511 = vrot.slane %v509, 1
      %v512 = vsel %vm440, %v507, %v511
      %v514 = vshrl.u32 %v432, 16
      %v516 = vshll.u32 %v432, 16
      %v518 = vrot.slane %v516, 1
      %v519 = vor.u32 %v514, %v518
      %v521 = vshll.u32 %v433, 16
      %v523 = vrot.slane %v521, 1
      %v524 = vsel %vm440, %v519, %v523
      %v526 = vshrl.u32 %v434, 16
      %v528 = vshll.u32 %v434, 16
      %v530 = vrot.slane %v528, 1
      %v531 = vor.u32 %v526, %v530
      %v533 = vshll.u32 %v435, 16
      %v535 = vrot.slane %v533, 1
      %v536 = vsel %vm440, %v531, %v535
      %vm561 = vcmask 1046528
      %v562 = vrot.slane %v420, 1
      %v563 = vrot.slane %v421, 1
      %v564 = vsel %vm561, %v562, %v563
      %v565 = vrot.slane %v422, 1
      %v566 = vrot.slane %v423, 1
      %v567 = vsel %vm561, %v565, %v566
      %v568 = vrot.slane %v424, 1
      %v569 = vrot.slane %v425, 1
      %v570 = vsel %vm561, %v568, %v569
      %v571 = vrot.slane %v426, 1
      %v572 = vrot.slane %v427, 1
      %v573 = vsel %vm561, %v571, %v572
      %v574 = vrot.slane %v428, 1
      %v575 = vrot.slane %v429, 1
      %v576 = vsel %vm561, %v574, %v575
      %v577 = vrot.slane %v430, 1
      %v578 = vrot.slane %v431, 1
      %v579 = vsel %vm561, %v577, %v578
      %v580 = vrot.slane %v432, 1
      %v581 = vrot.slane %v433, 1
      %v582 = vsel %vm561, %v580, %v581
      %v583 = vrot.slane %v434, 1
      %v584 = vrot.slane %v435, 1
      %v585 = vsel %vm561, %v583, %v584
      %v595 = vshrl.u32 %v436, 16
      %v597 = vshll.u32 %v436, 16
      %v599 = vrot.slane %v597, 1
      %v600 = vor.u32 %v595, %v599
      %v602 = vshll.u32 %v437, 16
      %v604 = vrot.slane %v602, 1
      %v605 = vsel %vm440, %v600, %v604
      %v609 = vrot.slane %v436, 1
      %v610 = vrot.slane %v437, 1
      %v611 = vsel %vm561, %v609, %v610
      %v614 = vshrl.u32 %v438, 16
      %v616 = vshll.u32 %v438, 16
      %v618 = vrot.slane %v616, 1
      %v619 = vor.u32 %v614, %v618
      %v621 = vshll.u32 %v439, 16
      %v623 = vrot.slane %v621, 1
      %v624 = vsel %vm440, %v619, %v623
      %v628 = vrot.slane %v438, 1
      %v629 = vrot.slane %v439, 1
      %v630 = vsel %vm561, %v628, %v629
      %v632 = vld [vmem:[%s1] sm:$0xf]
      %v633 = vld [vmem:[%s1 + $0x4] sm:$0xf]
      %v634 = vld [vmem:[%s1 + $0x8] sm:$0xf]
      %v635 = vld [vmem:[%s1 + $0xc] sm:$0xf]
      %v636 = vld [vmem:[%s1 + $0x10] sm:$0xf]
      %v637 = vld [vmem:[%s1 + $0x14] sm:$0xf]
      %v638 = vld [vmem:[%s1 + $0x18] sm:$0xf]
      %v639 = vld [vmem:[%s1 + $0x1c] sm:$0xf]
      %v640 = vld [vmem:[%s1 + $0x20] sm:$0xf]
      %v641 = vld [vmem:[%s1 + $0x24] sm:$0xf]
      %v642 = vld [vmem:[%s1 + $0x28] sm:$0xf]
      %v643 = vld [vmem:[%s1 + $0x2c] sm:$0xf]
      %v644 = vld [vmem:[%s1 + $0x30] sm:$0xf]
      %v645 = vld [vmem:[%s1 + $0x34] sm:$0xf]
      %v646 = vld [vmem:[%s1 + $0x38] sm:$0xf]
      %v647 = vld [vmem:[%s1 + $0x3c] sm:$0xf]
      %v648 = vld [vmem:[%s1 + $0x40] sm:$0xf]
      %v649 = vld [vmem:[%s1 + $0x44] sm:$0xf]
      %v650 = vld [vmem:[%s1 + $0x48] sm:$0xf]
      %v651 = vld [vmem:[%s1 + $0x4c] sm:$0xf]
      %v652 = vld [vmem:[%s1 + $0x50] sm:$0xf]
      %v653 = vld [vmem:[%s1 + $0x54] sm:$0xf]
      %v654 = vld [vmem:[%s1 + $0x58] sm:$0xf]
      %v655 = vld [vmem:[%s1 + $0x5c] sm:$0xf]
      %v656 = vld [vmem:[%s1 + $0x60] sm:$0xf]
      %v657 = vld [vmem:[%s1 + $0x64] sm:$0xf]
      %v658 = vld [vmem:[%s1 + $0x68] sm:$0xf]
      %v659 = vld [vmem:[%s1 + $0x6c] sm:$0xf]
      %v660 = vld [vmem:[%s1 + $0x70] sm:$0xf]
      %v661 = vld [vmem:[%s1 + $0x74] sm:$0xf]
      %v662 = vld [vmem:[%s1 + $0x78] sm:$0xf]
      %v663 = vld [vmem:[%s1 + $0x7c] sm:$0xf]
      %v664 = vld [vmem:[%s1 + $0x80] sm:$0xf]
      %v665 = vld [vmem:[%s1 + $0x84] sm:$0xf]
      %v666 = vld [vmem:[%s1 + $0x88] sm:$0xf]
      %v667 = vld [vmem:[%s1 + $0x8c] sm:$0xf]
      %v668 = vld [vmem:[%s1 + $0x90] sm:$0xf]
      %v669 = vld [vmem:[%s1 + $0x94] sm:$0xf]
      %v670 = vld [vmem:[%s1 + $0x98] sm:$0xf]
      %v671 = vld [vmem:[%s1 + $0x9c] sm:$0xf]
      %v672 = vld [vmem:[%s1 + $0xa0] sm:$0xf]
      %v673 = vld [vmem:[%s1 + $0xa4] sm:$0xf]
      %v674 = vld [vmem:[%s1 + $0xa8] sm:$0xf]
      %v675 = vld [vmem:[%s1 + $0xac] sm:$0xf]
      %v676 = vld [vmem:[%s1 + $0xb0] sm:$0xf]
      %v677 = vld [vmem:[%s1 + $0xb4] sm:$0xf]
      %v678 = vld [vmem:[%s1 + $0xb8] sm:$0xf]
      %v679 = vld [vmem:[%s1 + $0xbc] sm:$0xf]
      %v680 = vld [vmem:[%s1 + $0xc0] sm:$0xf]
      %v681 = vld [vmem:[%s1 + $0xc4] sm:$0xf]
      %v682 = vld [vmem:[%s1 + $0xc8] sm:$0xf]
      %v683 = vld [vmem:[%s1 + $0xcc] sm:$0xf]
      %v684 = vld [vmem:[%s1 + $0xd0] sm:$0xf]
      %v685 = vld [vmem:[%s1 + $0xd4] sm:$0xf]
      %v686 = vld [vmem:[%s1 + $0xd8] sm:$0xf]
      %v687 = vld [vmem:[%s1 + $0xdc] sm:$0xf]
      %v688 = vld [vmem:[%s1 + $0xe0] sm:$0xf]
      %v689 = vld [vmem:[%s1 + $0xe4] sm:$0xf]
      %v690 = vld [vmem:[%s1 + $0xe8] sm:$0xf]
      %v691 = vld [vmem:[%s1 + $0xec] sm:$0xf]
      %v692 = vld [vmem:[%s1 + $0xf0] sm:$0xf]
      %v693 = vld [vmem:[%s1 + $0xf4] sm:$0xf]
      %v694 = vld [vmem:[%s1 + $0xf8] sm:$0xf]
      %v695 = vld [vmem:[%s1 + $0xfc] sm:$0xf]
      %v696 = vld [vmem:[%s1 + $0x100] sm:$0xf]
      %v697 = vld [vmem:[%s1 + $0x104] sm:$0xf]
      %v698 = vld [vmem:[%s1 + $0x108] sm:$0xf]
      %v699 = vld [vmem:[%s1 + $0x10c] sm:$0xf]
      %v700 = vld [vmem:[%s1 + $0x110] sm:$0xf]
      %v701 = vld [vmem:[%s1 + $0x114] sm:$0xf]
      %v702 = vld [vmem:[%s1 + $0x118] sm:$0xf]
      %v703 = vld [vmem:[%s1 + $0x11c] sm:$0xf]
      %v704 = vld [vmem:[%s1 + $0x120] sm:$0xf]
      %v705 = vld [vmem:[%s1 + $0x124] sm:$0xf]
      %v706 = vld [vmem:[%s1 + $0x128] sm:$0xf]
      %v707 = vld [vmem:[%s1 + $0x12c] sm:$0xf]
      %v708 = vld [vmem:[%s1 + $0x130] sm:$0xf]
      %v709 = vld [vmem:[%s1 + $0x134] sm:$0xf]
      %v710 = vld [vmem:[%s1 + $0x138] sm:$0xf]
      %v711 = vld [vmem:[%s1 + $0x13c] sm:$0xf]
      %v712 = vld [vmem:[%s1 + $0x140] sm:$0xf]
      %v713 = vld [vmem:[%s1 + $0x144] sm:$0xf]
      %v714 = vld [vmem:[%s1 + $0x148] sm:$0xf]
      %v715 = vld [vmem:[%s1 + $0x14c] sm:$0xf]
      %v716 = vld [vmem:[%s1 + $0x150] sm:$0xf]
      %v717 = vld [vmem:[%s1 + $0x154] sm:$0xf]
      %v718 = vld [vmem:[%s1 + $0x158] sm:$0xf]
      %v719 = vld [vmem:[%s1 + $0x15c] sm:$0xf]
      %v720 = vld [vmem:[%s1 + $0x160] sm:$0xf]
      %v721 = vld [vmem:[%s1 + $0x164] sm:$0xf]
      %v722 = vld [vmem:[%s1 + $0x168] sm:$0xf]
      %v723 = vld [vmem:[%s1 + $0x16c] sm:$0xf]
      %v724 = vld [vmem:[%s1 + $0x170] sm:$0xf]
      %v725 = vld [vmem:[%s1 + $0x174] sm:$0xf]
      %v726 = vld [vmem:[%s1 + $0x178] sm:$0xf]
      %v727 = vld [vmem:[%s1 + $0x17c] sm:$0xf]
      %v728 = vld [vmem:[%s1 + $0x180] sm:$0xf]
      %v729 = vld [vmem:[%s1 + $0x184] sm:$0xf]
      %v730 = vld [vmem:[%s1 + $0x188] sm:$0xf]
      %v731 = vld [vmem:[%s1 + $0x18c] sm:$0xf]
      %v732 = vld [vmem:[%s1 + $0x190] sm:$0xf]
      %v733 = vld [vmem:[%s1 + $0x194] sm:$0xf]
      %v734 = vld [vmem:[%s1 + $0x198] sm:$0xf]
      %v735 = vld [vmem:[%s1 + $0x19c] sm:$0xf]
      %v736 = vld [vmem:[%s1 + $0x1a0] sm:$0xf]
      %v737 = vld [vmem:[%s1 + $0x1a4] sm:$0xf]
      %v738 = vld [vmem:[%s1 + $0x1a8] sm:$0xf]
      %v739 = vld [vmem:[%s1 + $0x1ac] sm:$0xf]
      %v740 = vld [vmem:[%s1 + $0x1b0] sm:$0xf]
      %v741 = vld [vmem:[%s1 + $0x1b4] sm:$0xf]
      %v742 = vld [vmem:[%s1 + $0x1b8] sm:$0xf]
      %v743 = vld [vmem:[%s1 + $0x1bc] sm:$0xf]
      %v744 = vld [vmem:[%s1 + $0x1c0] sm:$0xf]
      %v745 = vld [vmem:[%s1 + $0x1c4] sm:$0xf]
      %v746 = vld [vmem:[%s1 + $0x1c8] sm:$0xf]
      %v747 = vld [vmem:[%s1 + $0x1cc] sm:$0xf]
      %v748 = vld [vmem:[%s1 + $0x1d0] sm:$0xf]
      %v749 = vld [vmem:[%s1 + $0x1d4] sm:$0xf]
      %v750 = vld [vmem:[%s1 + $0x1d8] sm:$0xf]
      %v751 = vld [vmem:[%s1 + $0x1dc] sm:$0xf]
      %v752 = vld [vmem:[%s1 + $0x1e0] sm:$0xf]
      %v753 = vld [vmem:[%s1 + $0x1e4] sm:$0xf]
      %v754 = vld [vmem:[%s1 + $0x1e8] sm:$0xf]
      %v755 = vld [vmem:[%s1 + $0x1ec] sm:$0xf]
      %v756 = vld [vmem:[%s1 + $0x1f0] sm:$0xf]
      %v757 = vld [vmem:[%s1 + $0x1f4] sm:$0xf]
      %v758 = vld [vmem:[%s1 + $0x1f8] sm:$0xf]
      %v759 = vld [vmem:[%s1 + $0x1fc] sm:$0xf]
      %v760 = vld [vmem:[%s1 + $0x200] sm:$0xf]
      %v761 = vld [vmem:[%s1 + $0x204] sm:$0xf]
      %v762 = vld [vmem:[%s1 + $0x208] sm:$0xf]
      %v763 = vld [vmem:[%s1 + $0x20c] sm:$0xf]
      %v764 = vld [vmem:[%s1 + $0x210] sm:$0xf]
      %v765 = vld [vmem:[%s1 + $0x214] sm:$0xf]
      %v766 = vld [vmem:[%s1 + $0x218] sm:$0xf]
      %v767 = vld [vmem:[%s1 + $0x21c] sm:$0xf]
      %v768 = vld [vmem:[%s1 + $0x220] sm:$0xf]
      %v769 = vld [vmem:[%s1 + $0x224] sm:$0xf]
      %v770 = vld [vmem:[%s1 + $0x228] sm:$0xf]
      %v771 = vld [vmem:[%s1 + $0x22c] sm:$0xf]
      %v772 = vld [vmem:[%s1 + $0x230] sm:$0xf]
      %v773 = vld [vmem:[%s1 + $0x234] sm:$0xf]
      %v774 = vld [vmem:[%s1 + $0x238] sm:$0xf]
      %v775 = vld [vmem:[%s1 + $0x23c] sm:$0xf]
      %v920 = vunpack.c.l.b16 %v632
      %v921 = vunpack.c.l.b16 %v633
      %v922 = vunpack.c.l.b16 %v634
      %v923 = vunpack.c.l.b16 %v635
      %v924 = vunpack.c.l.b16 %v636
      %v925 = vunpack.c.l.b16 %v637
      %v926 = vunpack.c.l.b16 %v638
      %v927 = vunpack.c.l.b16 %v639
      %v928 = vunpack.c.l.b16 %v640
      %v929 = vunpack.c.l.b16 %v641
      %v930 = vunpack.c.l.b16 %v642
      %v931 = vunpack.c.l.b16 %v643
      %v932 = vunpack.c.l.b16 %v644
      %v933 = vunpack.c.l.b16 %v645
      %v934 = vunpack.c.l.b16 %v646
      %v935 = vunpack.c.l.b16 %v647
      %v936 = vunpack.c.l.b16 %v648
      %v937 = vunpack.c.l.b16 %v649
      %v938 = vunpack.c.l.b16 %v650
      %v939 = vunpack.c.l.b16 %v651
      %v940 = vunpack.c.l.b16 %v652
      %v941 = vunpack.c.l.b16 %v653
      %v942 = vunpack.c.l.b16 %v654
      %v943 = vunpack.c.l.b16 %v655
      %v944 = vunpack.c.l.b16 %v656
      %v945 = vunpack.c.l.b16 %v657
      %v946 = vunpack.c.l.b16 %v658
      %v947 = vunpack.c.l.b16 %v659
      %v948 = vunpack.c.l.b16 %v660
      %v949 = vunpack.c.l.b16 %v661
      %v950 = vunpack.c.l.b16 %v662
      %v951 = vunpack.c.l.b16 %v663
      %v952 = vunpack.c.l.b16 %v664
      %v953 = vunpack.c.l.b16 %v665
      %v954 = vunpack.c.l.b16 %v666
      %v955 = vunpack.c.l.b16 %v667
      %v956 = vunpack.c.l.b16 %v668
      %v957 = vunpack.c.l.b16 %v669
      %v958 = vunpack.c.l.b16 %v670
      %v959 = vunpack.c.l.b16 %v671
      %v960 = vunpack.c.l.b16 %v672
      %v961 = vunpack.c.l.b16 %v673
      %v962 = vunpack.c.l.b16 %v674
      %v963 = vunpack.c.l.b16 %v675
      %v964 = vunpack.c.l.b16 %v676
      %v965 = vunpack.c.l.b16 %v677
      %v966 = vunpack.c.l.b16 %v678
      %v967 = vunpack.c.l.b16 %v679
      %v968 = vunpack.c.l.b16 %v680
      %v969 = vunpack.c.l.b16 %v681
      %v970 = vunpack.c.l.b16 %v682
      %v971 = vunpack.c.l.b16 %v683
      %v972 = vunpack.c.l.b16 %v684
      %v973 = vunpack.c.l.b16 %v685
      %v974 = vunpack.c.l.b16 %v686
      %v975 = vunpack.c.l.b16 %v687
      %v976 = vunpack.c.l.b16 %v688
      %v977 = vunpack.c.l.b16 %v689
      %v978 = vunpack.c.l.b16 %v690
      %v979 = vunpack.c.l.b16 %v691
      %v980 = vunpack.c.l.b16 %v692
      %v981 = vunpack.c.l.b16 %v693
      %v982 = vunpack.c.l.b16 %v694
      %v983 = vunpack.c.l.b16 %v695
      %v984 = vunpack.c.l.b16 %v696
      %v985 = vunpack.c.l.b16 %v697
      %v986 = vunpack.c.l.b16 %v698
      %v987 = vunpack.c.l.b16 %v699
      %v988 = vunpack.c.l.b16 %v700
      %v989 = vunpack.c.l.b16 %v701
      %v990 = vunpack.c.l.b16 %v702
      %v991 = vunpack.c.l.b16 %v703
      %v992 = vunpack.c.l.b16 %v704
      %v993 = vunpack.c.l.b16 %v705
      %v994 = vunpack.c.l.b16 %v706
      %v995 = vunpack.c.l.b16 %v707
      %v996 = vunpack.c.l.b16 %v708
      %v997 = vunpack.c.l.b16 %v709
      %v998 = vunpack.c.l.b16 %v710
      %v999 = vunpack.c.l.b16 %v711
      %v1000 = vunpack.c.l.b16 %v712
      %v1001 = vunpack.c.l.b16 %v713
      %v1002 = vunpack.c.l.b16 %v714
      %v1003 = vunpack.c.l.b16 %v715
      %v1004 = vunpack.c.l.b16 %v716
      %v1005 = vunpack.c.l.b16 %v717
      %v1006 = vunpack.c.l.b16 %v718
      %v1007 = vunpack.c.l.b16 %v719
      %v1008 = vunpack.c.l.b16 %v720
      %v1009 = vunpack.c.l.b16 %v721
      %v1010 = vunpack.c.l.b16 %v722
      %v1011 = vunpack.c.l.b16 %v723
      %v1012 = vunpack.c.l.b16 %v724
      %v1013 = vunpack.c.l.b16 %v725
      %v1014 = vunpack.c.l.b16 %v726
      %v1015 = vunpack.c.l.b16 %v727
      %v1016 = vunpack.c.l.b16 %v728
      %v1017 = vunpack.c.l.b16 %v729
      %v1018 = vunpack.c.l.b16 %v730
      %v1019 = vunpack.c.l.b16 %v731
      %v1020 = vunpack.c.l.b16 %v732
      %v1021 = vunpack.c.l.b16 %v733
      %v1022 = vunpack.c.l.b16 %v734
      %v1023 = vunpack.c.l.b16 %v735
      %v1024 = vunpack.c.l.b16 %v736
      %v1025 = vunpack.c.l.b16 %v737
      %v1026 = vunpack.c.l.b16 %v738
      %v1027 = vunpack.c.l.b16 %v739
      %v1028 = vunpack.c.l.b16 %v740
      %v1029 = vunpack.c.l.b16 %v741
      %v1030 = vunpack.c.l.b16 %v742
      %v1031 = vunpack.c.l.b16 %v743
      %v1032 = vunpack.c.l.b16 %v744
      %v1033 = vunpack.c.l.b16 %v745
      %v1034 = vunpack.c.l.b16 %v746
      %v1035 = vunpack.c.l.b16 %v747
      %v1036 = vunpack.c.l.b16 %v748
      %v1037 = vunpack.c.l.b16 %v749
      %v1038 = vunpack.c.l.b16 %v750
      %v1039 = vunpack.c.l.b16 %v751
      %v1040 = vunpack.c.l.b16 %v752
      %v1041 = vunpack.c.l.b16 %v753
      %v1042 = vunpack.c.l.b16 %v754
      %v1043 = vunpack.c.l.b16 %v755
      %v1044 = vunpack.c.l.b16 %v756
      %v1045 = vunpack.c.l.b16 %v757
      %v1046 = vunpack.c.l.b16 %v758
      %v1047 = vunpack.c.l.b16 %v759
      %v1048 = vunpack.c.l.b16 %v760
      %v1049 = vunpack.c.l.b16 %v761
      %v1050 = vunpack.c.l.b16 %v762
      %v1051 = vunpack.c.l.b16 %v763
      %v1052 = vunpack.c.l.b16 %v764
      %v1053 = vunpack.c.l.b16 %v765
      %v1054 = vunpack.c.l.b16 %v766
      %v1055 = vunpack.c.l.b16 %v767
      %v1056 = vunpack.c.l.b16 %v768
      %v1057 = vunpack.c.l.b16 %v769
      %v1058 = vunpack.c.l.b16 %v770
      %v1059 = vunpack.c.l.b16 %v771
      %v1060 = vunpack.c.l.b16 %v772
      %v1061 = vunpack.c.l.b16 %v773
      %v1062 = vunpack.c.l.b16 %v774
      %v1063 = vunpack.c.l.b16 %v775
      %v1064 = vpack.c.b16 %v921, %v920
      %v1065 = vpack.c.b16 %v923, %v922
      %v1066 = vpack.c.b16 %v925, %v924
      %v1067 = vpack.c.b16 %v927, %v926
      %v1068 = vpack.c.b16 %v929, %v928
      %v1069 = vpack.c.b16 %v931, %v930
      %v1070 = vpack.c.b16 %v933, %v932
      %v1071 = vpack.c.b16 %v935, %v934
      %v1072 = vpack.c.b16 %v937, %v936
      %v1073 = vpack.c.b16 %v939, %v938
      %v1074 = vpack.c.b16 %v941, %v940
      %v1075 = vpack.c.b16 %v943, %v942
      %v1076 = vpack.c.b16 %v945, %v944
      %v1077 = vpack.c.b16 %v947, %v946
      %v1078 = vpack.c.b16 %v949, %v948
      %v1079 = vpack.c.b16 %v951, %v950
      %v1080 = vpack.c.b16 %v953, %v952
      %v1081 = vpack.c.b16 %v955, %v954
      %v1082 = vpack.c.b16 %v957, %v956
      %v1083 = vpack.c.b16 %v959, %v958
      %v1084 = vpack.c.b16 %v961, %v960
      %v1085 = vpack.c.b16 %v963, %v962
      %v1086 = vpack.c.b16 %v965, %v964
      %v1087 = vpack.c.b16 %v967, %v966
      %v1088 = vpack.c.b16 %v969, %v968
      %v1089 = vpack.c.b16 %v971, %v970
      %v1090 = vpack.c.b16 %v973, %v972
      %v1091 = vpack.c.b16 %v975, %v974
      %v1092 = vpack.c.b16 %v977, %v976
      %v1093 = vpack.c.b16 %v979, %v978
      %v1094 = vpack.c.b16 %v981, %v980
      %v1095 = vpack.c.b16 %v983, %v982
      %v1096 = vpack.c.b16 %v985, %v984
      %v1097 = vpack.c.b16 %v987, %v986
      %v1098 = vpack.c.b16 %v989, %v988
      %v1099 = vpack.c.b16 %v991, %v990
      %v1100 = vpack.c.b16 %v993, %v992
      %v1101 = vpack.c.b16 %v995, %v994
      %v1102 = vpack.c.b16 %v997, %v996
      %v1103 = vpack.c.b16 %v999, %v998
      %v1104 = vpack.c.b16 %v1001, %v1000
      %v1105 = vpack.c.b16 %v1003, %v1002
      %v1106 = vpack.c.b16 %v1005, %v1004
      %v1107 = vpack.c.b16 %v1007, %v1006
      %v1108 = vpack.c.b16 %v1009, %v1008
      %v1109 = vpack.c.b16 %v1011, %v1010
      %v1110 = vpack.c.b16 %v1013, %v1012
      %v1111 = vpack.c.b16 %v1015, %v1014
      %v1112 = vpack.c.b16 %v1017, %v1016
      %v1113 = vpack.c.b16 %v1019, %v1018
      %v1114 = vpack.c.b16 %v1021, %v1020
      %v1115 = vpack.c.b16 %v1023, %v1022
      %v1116 = vpack.c.b16 %v1025, %v1024
      %v1117 = vpack.c.b16 %v1027, %v1026
      %v1118 = vpack.c.b16 %v1029, %v1028
      %v1119 = vpack.c.b16 %v1031, %v1030
      %v1120 = vpack.c.b16 %v1033, %v1032
      %v1121 = vpack.c.b16 %v1035, %v1034
      %v1122 = vpack.c.b16 %v1037, %v1036
      %v1123 = vpack.c.b16 %v1039, %v1038
      %v1124 = vpack.c.b16 %v1041, %v1040
      %v1125 = vpack.c.b16 %v1043, %v1042
      %v1126 = vpack.c.b16 %v1045, %v1044
      %v1127 = vpack.c.b16 %v1047, %v1046
      %v1128 = vpack.c.b16 %v1049, %v1048
      %v1129 = vpack.c.b16 %v1051, %v1050
      %v1130 = vpack.c.b16 %v1053, %v1052
      %v1131 = vpack.c.b16 %v1055, %v1054
      %v1132 = vpack.c.b16 %v1057, %v1056
      %v1133 = vpack.c.b16 %v1059, %v1058
      %v1134 = vpack.c.b16 %v1061, %v1060
      %v1135 = vpack.c.b16 %v1063, %v1062
      %1208 = vmatprep.subr.bf16.mxu0 0
      %1209 = vmatpush1.bf16.msra.mxu0 %v1064
      %1210 = vmatprep.subr.bf16.mxu0 0
      %1211 = vmatpush1.bf16.msra.mxu0 %v1065
      %1212 = vmatprep.subr.bf16.mxu0 0
      %1213 = vmatpush1.bf16.msra.mxu0 %v1066
      %1214 = vmatprep.subr.bf16.mxu0 0
      %1215 = vmatpush1.bf16.msra.mxu0 %v1067
      %1216 = vmatprep.subr.bf16.mxu0 0
      %1217 = vmatpush1.bf16.msra.mxu0 %v1068
      %1218 = vmatprep.subr.bf16.mxu0 0
      %1219 = vmatpush1.bf16.msra.mxu0 %v1069
      %1220 = vmatprep.subr.bf16.mxu0 0
      %1221 = vmatpush1.bf16.msra.mxu0 %v1070
      %1222 = vmatprep.subr.bf16.mxu0 0
      %1223 = vmatpush1.bf16.msra.mxu0 %v1071
      %1224 = vmatprep.subr.bf16.mxu0 0
      %1225 = vmatpush1.bf16.msra.mxu0 %v1072
      %1226 = vmatprep.subr.bf16.mxu0 0
      %1227 = vmatpush1.bf16.msra.mxu0 %v1073
      %1228 = vmatprep.subr.bf16.mxu0 0
      %1229 = vmatpush1.bf16.msra.mxu0 %v1074
      %1230 = vmatprep.subr.bf16.mxu0 0
      %1231 = vmatpush1.bf16.msra.mxu0 %v1075
      %1232 = vmatprep.subr.bf16.mxu0 0
      %1233 = vmatpush1.bf16.msra.mxu0 %v1076
      %1234 = vmatprep.subr.bf16.mxu0 0
      %1235 = vmatpush1.bf16.msra.mxu0 %v1077
      %1236 = vmatprep.subr.bf16.mxu0 0
      %1237 = vmatpush1.bf16.msra.mxu0 %v1078
      %1238 = vmatprep.subr.bf16.mxu0 0
      %1239 = vmatpush1.bf16.msra.mxu0 %v1079
      %1240 = vmatprep.mubr.bf16.mxu0 %v452
      %1241 = vmatmul.mubr.bf16.gmra.mrb[0].mxu0 %v420
      %v1242 = vpop.f32.mrb[0].mxu0
      %v1243 = vadd.f32 0.0, %v1242
      %v1244 = vpop.f32.mrb[0].mxu0
      %v1245 = vpop.f32.mrb[0].mxu0
      %v1246 = vadd.f32 0.0, %v1245
      %v1247 = vpop.f32.mrb[0].mxu0
      %1248 = vmatprep.mubr.bf16.mxu0 %v464
      %1249 = vmatmul.mubr.bf16.gmra.mrb[0].mxu0 %v422
      %v1250 = vpop.f32.mrb[0].mxu0
      %v1251 = vadd.f32 0.0, %v1250
      %v1252 = vpop.f32.mrb[0].mxu0
      %v1253 = vpop.f32.mrb[0].mxu0
      %v1254 = vadd.f32 0.0, %v1253
      %v1255 = vpop.f32.mrb[0].mxu0
      %1256 = vmatprep.mubr.bf16.mxu0 %v476
      %1257 = vmatmul.mubr.bf16.gmra.mrb[0].mxu0 %v424
      %v1258 = vpop.f32.mrb[0].mxu0
      %v1259 = vadd.f32 0.0, %v1258
      %v1260 = vpop.f32.mrb[0].mxu0
      %v1261 = vpop.f32.mrb[0].mxu0
      %v1262 = vadd.f32 0.0, %v1261
      %v1263 = vpop.f32.mrb[0].mxu0
      %1264 = vmatprep.mubr.bf16.mxu0 %v488
      %1265 = vmatmul.mubr.bf16.gmra.mrb[0].mxu0 %v426
      %v1266 = vpop.f32.mrb[0].mxu0
      %v1267 = vadd.f32 0.0, %v1266
      %v1268 = vpop.f32.mrb[0].mxu0
      %v1269 = vpop.f32.mrb[0].mxu0
      %v1270 = vadd.f32 0.0, %v1269
      %v1271 = vpop.f32.mrb[0].mxu0
      %1272 = vmatprep.mubr.bf16.mxu0 %v500
      %1273 = vmatmul.mubr.bf16.gmra.mrb[0].mxu0 %v428
      %v1274 = vpop.f32.mrb[0].mxu0
      %v1275 = vadd.f32 0.0, %v1274
      %v1276 = vpop.f32.mrb[0].mxu0
      %v1277 = vpop.f32.mrb[0].mxu0
      %v1278 = vadd.f32 0.0, %v1277
      %v1279 = vpop.f32.mrb[0].mxu0
      %1280 = vmatprep.mubr.bf16.mxu0 %v512
      %1281 = vmatmul.mubr.bf16.gmra.mrb[0].mxu0 %v430
      %v1282 = vpop.f32.mrb[0].mxu0
      %v1283 = vadd.f32 0.0, %v1282
      %v1284 = vpop.f32.mrb[0].mxu0
      %v1285 = vpop.f32.mrb[0].mxu0
      %v1286 = vadd.f32 0.0, %v1285
      %v1287 = vpop.f32.mrb[0].mxu0
      %1288 = vmatprep.mubr.bf16.mxu0 %v524
      %1289 = vmatmul.mubr.bf16.gmra.mrb[0].mxu0 %v432
      %v1290 = vpop.f32.mrb[0].mxu0
      %v1291 = vadd.f32 0.0, %v1290
      %v1292 = vpop.f32.mrb[0].mxu0
      %v1293 = vpop.f32.mrb[0].mxu0
      %v1294 = vadd.f32 0.0, %v1293
      %v1295 = vpop.f32.mrb[0].mxu0
      %1296 = vmatprep.mubr.bf16.mxu0 %v536
      %1297 = vmatmul.mubr.bf16.gmra.mrb[0].mxu0 %v434
      %v1298 = vpop.f32.mrb[0].mxu0
      %v1299 = vadd.f32 0.0, %v1298
      %v1300 = vpop.f32.mrb[0].mxu0
      %v1301 = vpop.f32.mrb[0].mxu0
      %v1302 = vadd.f32 0.0, %v1301
      %v1303 = vpop.f32.mrb[0].mxu0
      %1304 = vdwg.mxu0
      %1305 = vmatprep.subr.bf16.mxu0 0
      %1306 = vmatpush1.bf16.msra.mxu0 %v1080
      %1307 = vmatprep.subr.bf16.mxu0 0
      %1308 = vmatpush1.bf16.msra.mxu0 %v1081
      %1309 = vmatprep.subr.bf16.mxu0 0
      %1310 = vmatpush1.bf16.msra.mxu0 %v1082
      %1311 = vmatprep.subr.bf16.mxu0 0
      %1312 = vmatpush1.bf16.msra.mxu0 %v1083
      %1313 = vmatprep.subr.bf16.mxu0 0
      %1314 = vmatpush1.bf16.msra.mxu0 %v1084
      %1315 = vmatprep.subr.bf16.mxu0 0
      %1316 = vmatpush1.bf16.msra.mxu0 %v1085
      %1317 = vmatprep.subr.bf16.mxu0 0
      %1318 = vmatpush1.bf16.msra.mxu0 %v1086
      %1319 = vmatprep.subr.bf16.mxu0 0
      %1320 = vmatpush1.bf16.msra.mxu0 %v1087
      %1321 = vmatprep.subr.bf16.mxu0 0
      %1322 = vmatpush1.bf16.msra.mxu0 %v1088
      %1323 = vmatprep.subr.bf16.mxu0 0
      %1324 = vmatpush1.bf16.msra.mxu0 %v1089
      %1325 = vmatprep.subr.bf16.mxu0 0
      %1326 = vmatpush1.bf16.msra.mxu0 %v1090
      %1327 = vmatprep.subr.bf16.mxu0 0
      %1328 = vmatpush1.bf16.msra.mxu0 %v1091
      %1329 = vmatprep.subr.bf16.mxu0 0
      %1330 = vmatpush1.bf16.msra.mxu0 %v1092
      %1331 = vmatprep.subr.bf16.mxu0 0
      %1332 = vmatpush1.bf16.msra.mxu0 %v1093
      %1333 = vmatprep.subr.bf16.mxu0 0
      %1334 = vmatpush1.bf16.msra.mxu0 %v1094
      %1335 = vmatprep.subr.bf16.mxu0 0
      %1336 = vmatpush1.bf16.msra.mxu0 %v1095
      %1337 = vmatprep.mubr.bf16.mxu0 %v422
      %1338 = vmatmul.mubr.bf16.gmra.mrb[0].mxu0 %v564
      %v1339 = vpop.f32.mrb[0].mxu0
      %v1340 = vadd.f32 %v1243, %v1339
      %v1341 = vpop.f32.mrb[0].mxu0
      %v1342 = vpop.f32.mrb[0].mxu0
      %v1343 = vadd.f32 %v1246, %v1342
      %v1344 = vpop.f32.mrb[0].mxu0
      %1345 = vmatprep.mubr.bf16.mxu0 %v424
      %1346 = vmatmul.mubr.bf16.gmra.mrb[0].mxu0 %v567
      %v1347 = vpop.f32.mrb[0].mxu0
      %v1348 = vadd.f32 %v1251, %v1347
      %v1349 = vpop.f32.mrb[0].mxu0
      %v1350 = vpop.f32.mrb[0].mxu0
      %v1351 = vadd.f32 %v1254, %v1350
      %v1352 = vpop.f32.mrb[0].mxu0
      %1353 = vmatprep.mubr.bf16.mxu0 %v426
      %1354 = vmatmul.mubr.bf16.gmra.mrb[0].mxu0 %v570
      %v1355 = vpop.f32.mrb[0].mxu0
      %v1356 = vadd.f32 %v1259, %v1355
      %v1357 = vpop.f32.mrb[0].mxu0
      %v1358 = vpop.f32.mrb[0].mxu0
      %v1359 = vadd.f32 %v1262, %v1358
      %v1360 = vpop.f32.mrb[0].mxu0
      %1361 = vmatprep.mubr.bf16.mxu0 %v428
      %1362 = vmatmul.mubr.bf16.gmra.mrb[0].mxu0 %v573
      %v1363 = vpop.f32.mrb[0].mxu0
      %v1364 = vadd.f32 %v1267, %v1363
      %v1365 = vpop.f32.mrb[0].mxu0
      %v1366 = vpop.f32.mrb[0].mxu0
      %v1367 = vadd.f32 %v1270, %v1366
      %v1368 = vpop.f32.mrb[0].mxu0
      %1369 = vmatprep.mubr.bf16.mxu0 %v430
      %1370 = vmatmul.mubr.bf16.gmra.mrb[0].mxu0 %v576
      %v1371 = vpop.f32.mrb[0].mxu0
      %v1372 = vadd.f32 %v1275, %v1371
      %v1373 = vpop.f32.mrb[0].mxu0
      %v1374 = vpop.f32.mrb[0].mxu0
      %v1375 = vadd.f32 %v1278, %v1374
      %v1376 = vpop.f32.mrb[0].mxu0
      %1377 = vmatprep.mubr.bf16.mxu0 %v432
      %1378 = vmatmul.mubr.bf16.gmra.mrb[0].mxu0 %v579
      %v1379 = vpop.f32.mrb[0].mxu0
      %v1380 = vadd.f32 %v1283, %v1379
      %v1381 = vpop.f32.mrb[0].mxu0
      %v1382 = vpop.f32.mrb[0].mxu0
      %v1383 = vadd.f32 %v1286, %v1382
      %v1384 = vpop.f32.mrb[0].mxu0
      %1385 = vmatprep.mubr.bf16.mxu0 %v434
      %1386 = vmatmul.mubr.bf16.gmra.mrb[0].mxu0 %v582
      %v1387 = vpop.f32.mrb[0].mxu0
      %v1388 = vadd.f32 %v1291, %v1387
      %v1389 = vpop.f32.mrb[0].mxu0
      %v1390 = vpop.f32.mrb[0].mxu0
      %v1391 = vadd.f32 %v1294, %v1390
      %v1392 = vpop.f32.mrb[0].mxu0
      %1393 = vmatprep.mubr.bf16.mxu0 %v436
      %1394 = vmatmul.mubr.bf16.gmra.mrb[0].mxu0 %v585
      %v1395 = vpop.f32.mrb[0].mxu0
      %v1396 = vadd.f32 %v1299, %v1395
      %v1397 = vpop.f32.mrb[0].mxu0
      %v1398 = vpop.f32.mrb[0].mxu0
      %v1399 = vadd.f32 %v1302, %v1398
      %v1400 = vpop.f32.mrb[0].mxu0
      %1401 = vdwg.mxu0
      %1402 = vmatprep.subr.bf16.mxu0 0
      %1403 = vmatpush1.bf16.msra.mxu0 %v1096
      %1404 = vmatprep.subr.bf16.mxu0 0
      %1405 = vmatpush1.bf16.msra.mxu0 %v1097
      %1406 = vmatprep.subr.bf16.mxu0 0
      %1407 = vmatpush1.bf16.msra.mxu0 %v1098
      %1408 = vmatprep.subr.bf16.mxu0 0
      %1409 = vmatpush1.bf16.msra.mxu0 %v1099
      %1410 = vmatprep.subr.bf16.mxu0 0
      %1411 = vmatpush1.bf16.msra.mxu0 %v1100
      %1412 = vmatprep.subr.bf16.mxu0 0
      %1413 = vmatpush1.bf16.msra.mxu0 %v1101
      %1414 = vmatprep.subr.bf16.mxu0 0
      %1415 = vmatpush1.bf16.msra.mxu0 %v1102
      %1416 = vmatprep.subr.bf16.mxu0 0
      %1417 = vmatpush1.bf16.msra.mxu0 %v1103
      %1418 = vmatprep.subr.bf16.mxu0 0
      %1419 = vmatpush1.bf16.msra.mxu0 %v1104
      %1420 = vmatprep.subr.bf16.mxu0 0
      %1421 = vmatpush1.bf16.msra.mxu0 %v1105
      %1422 = vmatprep.subr.bf16.mxu0 0
      %1423 = vmatpush1.bf16.msra.mxu0 %v1106
      %1424 = vmatprep.subr.bf16.mxu0 0
      %1425 = vmatpush1.bf16.msra.mxu0 %v1107
      %1426 = vmatprep.subr.bf16.mxu0 0
      %1427 = vmatpush1.bf16.msra.mxu0 %v1108
      %1428 = vmatprep.subr.bf16.mxu0 0
      %1429 = vmatpush1.bf16.msra.mxu0 %v1109
      %1430 = vmatprep.subr.bf16.mxu0 0
      %1431 = vmatpush1.bf16.msra.mxu0 %v1110
      %1432 = vmatprep.subr.bf16.mxu0 0
      %1433 = vmatpush1.bf16.msra.mxu0 %v1111
      %1434 = vmatprep.mubr.bf16.mxu0 %v567
      %1435 = vmatmul.mubr.bf16.gmra.mrb[0].mxu0 %v464
      %v1436 = vpop.f32.mrb[0].mxu0
      %v1437 = vadd.f32 %v1340, %v1436
      %v1438 = vpop.f32.mrb[0].mxu0
      %v1439 = vpop.f32.mrb[0].mxu0
      %v1440 = vadd.f32 %v1343, %v1439
      %v1441 = vpop.f32.mrb[0].mxu0
      %1442 = vmatprep.mubr.bf16.mxu0 %v570
      %1443 = vmatmul.mubr.bf16.gmra.mrb[0].mxu0 %v476
      %v1444 = vpop.f32.mrb[0].mxu0
      %v1445 = vadd.f32 %v1348, %v1444
      %v1446 = vpop.f32.mrb[0].mxu0
      %v1447 = vpop.f32.mrb[0].mxu0
      %v1448 = vadd.f32 %v1351, %v1447
      %v1449 = vpop.f32.mrb[0].mxu0
      %1450 = vmatprep.mubr.bf16.mxu0 %v573
      %1451 = vmatmul.mubr.bf16.gmra.mrb[0].mxu0 %v488
      %v1452 = vpop.f32.mrb[0].mxu0
      %v1453 = vadd.f32 %v1356, %v1452
      %v1454 = vpop.f32.mrb[0].mxu0
      %v1455 = vpop.f32.mrb[0].mxu0
      %v1456 = vadd.f32 %v1359, %v1455
      %v1457 = vpop.f32.mrb[0].mxu0
      %1458 = vmatprep.mubr.bf16.mxu0 %v576
      %1459 = vmatmul.mubr.bf16.gmra.mrb[0].mxu0 %v500
      %v1460 = vpop.f32.mrb[0].mxu0
      %v1461 = vadd.f32 %v1364, %v1460
      %v1462 = vpop.f32.mrb[0].mxu0
      %v1463 = vpop.f32.mrb[0].mxu0
      %v1464 = vadd.f32 %v1367, %v1463
      %v1465 = vpop.f32.mrb[0].mxu0
      %1466 = vmatprep.mubr.bf16.mxu0 %v579
      %1467 = vmatmul.mubr.bf16.gmra.mrb[0].mxu0 %v512
      %v1468 = vpop.f32.mrb[0].mxu0
      %v1469 = vadd.f32 %v1372, %v1468
      %v1470 = vpop.f32.mrb[0].mxu0
      %v1471 = vpop.f32.mrb[0].mxu0
      %v1472 = vadd.f32 %v1375, %v1471
      %v1473 = vpop.f32.mrb[0].mxu0
      %1474 = vmatprep.mubr.bf16.mxu0 %v582
      %1475 = vmatmul.mubr.bf16.gmra.mrb[0].mxu0 %v524
      %v1476 = vpop.f32.mrb[0].mxu0
      %v1477 = vadd.f32 %v1380, %v1476
      %v1478 = vpop.f32.mrb[0].mxu0
      %v1479 = vpop.f32.mrb[0].mxu0
      %v1480 = vadd.f32 %v1383, %v1479
      %v1481 = vpop.f32.mrb[0].mxu0
      %1482 = vmatprep.mubr.bf16.mxu0 %v585
      %1483 = vmatmul.mubr.bf16.gmra.mrb[0].mxu0 %v536
      %v1484 = vpop.f32.mrb[0].mxu0
      %v1485 = vadd.f32 %v1388, %v1484
      %v1486 = vpop.f32.mrb[0].mxu0
      %v1487 = vpop.f32.mrb[0].mxu0
      %v1488 = vadd.f32 %v1391, %v1487
      %v1489 = vpop.f32.mrb[0].mxu0
      %1490 = vmatprep.mubr.bf16.mxu0 %v611
      %1491 = vmatmul.mubr.bf16.gmra.mrb[0].mxu0 %v605
      %v1492 = vpop.f32.mrb[0].mxu0
      %v1493 = vadd.f32 %v1396, %v1492
      %v1494 = vpop.f32.mrb[0].mxu0
      %v1495 = vpop.f32.mrb[0].mxu0
      %v1496 = vadd.f32 %v1399, %v1495
      %v1497 = vpop.f32.mrb[0].mxu0
      %1498 = vdwg.mxu0
      %1499 = vmatprep.subr.bf16.mxu0 0
      %1500 = vmatpush1.bf16.msra.mxu0 %v1112
      %1501 = vmatprep.subr.bf16.mxu0 0
      %1502 = vmatpush1.bf16.msra.mxu0 %v1113
      %1503 = vmatprep.subr.bf16.mxu0 0
      %1504 = vmatpush1.bf16.msra.mxu0 %v1114
      %1505 = vmatprep.subr.bf16.mxu0 0
      %1506 = vmatpush1.bf16.msra.mxu0 %v1115
      %1507 = vmatprep.subr.bf16.mxu0 0
      %1508 = vmatpush1.bf16.msra.mxu0 %v1116
      %1509 = vmatprep.subr.bf16.mxu0 0
      %1510 = vmatpush1.bf16.msra.mxu0 %v1117
      %1511 = vmatprep.subr.bf16.mxu0 0
      %1512 = vmatpush1.bf16.msra.mxu0 %v1118
      %1513 = vmatprep.subr.bf16.mxu0 0
      %1514 = vmatpush1.bf16.msra.mxu0 %v1119
      %1515 = vmatprep.subr.bf16.mxu0 0
      %1516 = vmatpush1.bf16.msra.mxu0 %v1120
      %1517 = vmatprep.subr.bf16.mxu0 0
      %1518 = vmatpush1.bf16.msra.mxu0 %v1121
      %1519 = vmatprep.subr.bf16.mxu0 0
      %1520 = vmatpush1.bf16.msra.mxu0 %v1122
      %1521 = vmatprep.subr.bf16.mxu0 0
      %1522 = vmatpush1.bf16.msra.mxu0 %v1123
      %1523 = vmatprep.subr.bf16.mxu0 0
      %1524 = vmatpush1.bf16.msra.mxu0 %v1124
      %1525 = vmatprep.subr.bf16.mxu0 0
      %1526 = vmatpush1.bf16.msra.mxu0 %v1125
      %1527 = vmatprep.subr.bf16.mxu0 0
      %1528 = vmatpush1.bf16.msra.mxu0 %v1126
      %1529 = vmatprep.subr.bf16.mxu0 0
      %1530 = vmatpush1.bf16.msra.mxu0 %v1127
      %1531 = vmatprep.mubr.bf16.mxu0 %v476
      %1532 = vmatmul.mubr.bf16.gmra.mrb[0].mxu0 %v424
      %v1533 = vpop.f32.mrb[0].mxu0
      %v1534 = vadd.f32 %v1437, %v1533
      %v1535 = vpop.f32.mrb[0].mxu0
      %v1536 = vpop.f32.mrb[0].mxu0
      %v1537 = vadd.f32 %v1440, %v1536
      %v1538 = vpop.f32.mrb[0].mxu0
      %1539 = vmatprep.mubr.bf16.mxu0 %v488
      %1540 = vmatmul.mubr.bf16.gmra.mrb[0].mxu0 %v426
      %v1541 = vpop.f32.mrb[0].mxu0
      %v1542 = vadd.f32 %v1445, %v1541
      %v1543 = vpop.f32.mrb[0].mxu0
      %v1544 = vpop.f32.mrb[0].mxu0
      %v1545 = vadd.f32 %v1448, %v1544
      %v1546 = vpop.f32.mrb[0].mxu0
      %1547 = vmatprep.mubr.bf16.mxu0 %v500
      %1548 = vmatmul.mubr.bf16.gmra.mrb[0].mxu0 %v428
      %v1549 = vpop.f32.mrb[0].mxu0
      %v1550 = vadd.f32 %v1453, %v1549
      %v1551 = vpop.f32.mrb[0].mxu0
      %v1552 = vpop.f32.mrb[0].mxu0
      %v1553 = vadd.f32 %v1456, %v1552
      %v1554 = vpop.f32.mrb[0].mxu0
      %1555 = vmatprep.mubr.bf16.mxu0 %v512
      %1556 = vmatmul.mubr.bf16.gmra.mrb[0].mxu0 %v430
      %v1557 = vpop.f32.mrb[0].mxu0
      %v1558 = vadd.f32 %v1461, %v1557
      %v1559 = vpop.f32.mrb[0].mxu0
      %v1560 = vpop.f32.mrb[0].mxu0
      %v1561 = vadd.f32 %v1464, %v1560
      %v1562 = vpop.f32.mrb[0].mxu0
      %1563 = vmatprep.mubr.bf16.mxu0 %v524
      %1564 = vmatmul.mubr.bf16.gmra.mrb[0].mxu0 %v432
      %v1565 = vpop.f32.mrb[0].mxu0
      %v1566 = vadd.f32 %v1469, %v1565
      %v1567 = vpop.f32.mrb[0].mxu0
      %v1568 = vpop.f32.mrb[0].mxu0
      %v1569 = vadd.f32 %v1472, %v1568
      %v1570 = vpop.f32.mrb[0].mxu0
      %1571 = vmatprep.mubr.bf16.mxu0 %v536
      %1572 = vmatmul.mubr.bf16.gmra.mrb[0].mxu0 %v434
      %v1573 = vpop.f32.mrb[0].mxu0
      %v1574 = vadd.f32 %v1477, %v1573
      %v1575 = vpop.f32.mrb[0].mxu0
      %v1576 = vpop.f32.mrb[0].mxu0
      %v1577 = vadd.f32 %v1480, %v1576
      %v1578 = vpop.f32.mrb[0].mxu0
      %1579 = vmatprep.mubr.bf16.mxu0 %v605
      %1580 = vmatmul.mubr.bf16.gmra.mrb[0].mxu0 %v436
      %v1581 = vpop.f32.mrb[0].mxu0
      %v1582 = vadd.f32 %v1485, %v1581
      %v1583 = vpop.f32.mrb[0].mxu0
      %v1584 = vpop.f32.mrb[0].mxu0
      %v1585 = vadd.f32 %v1488, %v1584
      %v1586 = vpop.f32.mrb[0].mxu0
      %1587 = vmatprep.mubr.bf16.mxu0 %v624
      %1588 = vmatmul.mubr.bf16.gmra.mrb[0].mxu0 %v438
      %v1589 = vpop.f32.mrb[0].mxu0
      %v1590 = vadd.f32 %v1493, %v1589
      %v1591 = vpop.f32.mrb[0].mxu0
      %v1592 = vpop.f32.mrb[0].mxu0
      %v1593 = vadd.f32 %v1496, %v1592
      %v1594 = vpop.f32.mrb[0].mxu0
      %1595 = vdwg.mxu0
      %1596 = vmatprep.subr.bf16.mxu0 0
      %1597 = vmatpush1.bf16.msra.mxu0 %v1128
      %1598 = vmatprep.subr.bf16.mxu0 0
      %1599 = vmatpush1.bf16.msra.mxu0 %v1129
      %1600 = vmatprep.subr.bf16.mxu0 0
      %1601 = vmatpush1.bf16.msra.mxu0 %v1130
      %1602 = vmatprep.subr.bf16.mxu0 0
      %1603 = vmatpush1.bf16.msra.mxu0 %v1131
      %1604 = vmatprep.subr.bf16.mxu0 0
      %1605 = vmatpush1.bf16.msra.mxu0 %v1132
      %1606 = vmatprep.subr.bf16.mxu0 0
      %1607 = vmatpush1.bf16.msra.mxu0 %v1133
      %1608 = vmatprep.subr.bf16.mxu0 0
      %1609 = vmatpush1.bf16.msra.mxu0 %v1134
      %1610 = vmatprep.subr.bf16.mxu0 0
      %1611 = vmatpush1.bf16.msra.mxu0 %v1135
      %1612 = vmatprep.subr.bf16.mxu0 0
      %1613 = vmatpush1.bf16.msra.mxu0 0
      %1614 = vmatprep.subr.bf16.mxu0 0
      %1615 = vmatpush1.bf16.msra.mxu0 0
      %1616 = vmatprep.subr.bf16.mxu0 0
      %1617 = vmatpush1.bf16.msra.mxu0 0
      %1618 = vmatprep.subr.bf16.mxu0 0
      %1619 = vmatpush1.bf16.msra.mxu0 0
      %1620 = vmatprep.subr.bf16.mxu0 0
      %1621 = vmatpush1.bf16.msra.mxu0 0
      %1622 = vmatprep.subr.bf16.mxu0 0
      %1623 = vmatpush1.bf16.msra.mxu0 0
      %1624 = vmatprep.subr.bf16.mxu0 0
      %1625 = vmatpush1.bf16.msra.mxu0 0
      %1626 = vmatprep.subr.bf16.mxu0 0
      %1627 = vmatpush1.bf16.msra.mxu0 0
      %1628 = vmatprep.mubr.bf16.mxu0 0
      %1629 = vmatmul.mubr.bf16.gmra.mrb[0].mxu0 %v570
      %v1630 = vpop.f32.mrb[0].mxu0
      %v1631 = vadd.f32 %v1534, %v1630
      %v1632 = vpop.f32.mrb[0].mxu0
      %v1633 = vpop.f32.mrb[0].mxu0
      %v1634 = vadd.f32 %v1537, %v1633
      %v1635 = vpop.f32.mrb[0].mxu0
      %1636 = vmatprep.mubr.bf16.mxu0 0
      %1637 = vmatmul.mubr.bf16.gmra.mrb[0].mxu0 %v573
      %v1638 = vpop.f32.mrb[0].mxu0
      %v1639 = vadd.f32 %v1542, %v1638
      %v1640 = vpop.f32.mrb[0].mxu0
      %v1641 = vpop.f32.mrb[0].mxu0
      %v1642 = vadd.f32 %v1545, %v1641
      %v1643 = vpop.f32.mrb[0].mxu0
      %1644 = vmatprep.mubr.bf16.mxu0 0
      %1645 = vmatmul.mubr.bf16.gmra.mrb[0].mxu0 %v576
      %v1646 = vpop.f32.mrb[0].mxu0
      %v1647 = vadd.f32 %v1550, %v1646
      %v1648 = vpop.f32.mrb[0].mxu0
      %v1649 = vpop.f32.mrb[0].mxu0
      %v1650 = vadd.f32 %v1553, %v1649
      %v1651 = vpop.f32.mrb[0].mxu0
      %1652 = vmatprep.mubr.bf16.mxu0 0
      %1653 = vmatmul.mubr.bf16.gmra.mrb[0].mxu0 %v579
      %v1654 = vpop.f32.mrb[0].mxu0
      %v1655 = vadd.f32 %v1558, %v1654
      %v1656 = vpop.f32.mrb[0].mxu0
      %v1657 = vpop.f32.mrb[0].mxu0
      %v1658 = vadd.f32 %v1561, %v1657
      %v1659 = vpop.f32.mrb[0].mxu0
      %1660 = vmatprep.mubr.bf16.mxu0 0
      %1661 = vmatmul.mubr.bf16.gmra.mrb[0].mxu0 %v582
      %v1662 = vpop.f32.mrb[0].mxu0
      %v1663 = vadd.f32 %v1566, %v1662
      %v1664 = vpop.f32.mrb[0].mxu0
      %v1665 = vpop.f32.mrb[0].mxu0
      %v1666 = vadd.f32 %v1569, %v1665
      %v1667 = vpop.f32.mrb[0].mxu0
      %1668 = vmatprep.mubr.bf16.mxu0 0
      %1669 = vmatmul.mubr.bf16.gmra.mrb[0].mxu0 %v585
      %v1670 = vpop.f32.mrb[0].mxu0
      %v1671 = vadd.f32 %v1574, %v1670
      %v1672 = vpop.f32.mrb[0].mxu0
      %v1673 = vpop.f32.mrb[0].mxu0
      %v1674 = vadd.f32 %v1577, %v1673
      %v1675 = vpop.f32.mrb[0].mxu0
      %1676 = vmatprep.mubr.bf16.mxu0 0
      %1677 = vmatmul.mubr.bf16.gmra.mrb[0].mxu0 %v611
      %v1678 = vpop.f32.mrb[0].mxu0
      %v1679 = vadd.f32 %v1582, %v1678
      %v1680 = vpop.f32.mrb[0].mxu0
      %v1681 = vpop.f32.mrb[0].mxu0
      %v1682 = vadd.f32 %v1585, %v1681
      %v1683 = vpop.f32.mrb[0].mxu0
      %1684 = vmatprep.mubr.bf16.mxu0 0
      %1685 = vmatmul.mubr.bf16.gmra.mrb[0].mxu0 %v630
      %v1686 = vpop.f32.mrb[0].mxu0
      %v1687 = vadd.f32 %v1590, %v1686
      %v1688 = vpop.f32.mrb[0].mxu0
      %v1689 = vpop.f32.mrb[0].mxu0
      %v1690 = vadd.f32 %v1593, %v1689
      %v1691 = vpop.f32.mrb[0].mxu0
      %1692 = vdwg.mxu0
      %v1693 = vadd.f32 %v1631, %v1634
      %v1694 = vadd.f32 %v1693, %v1639
      %v1695 = vadd.f32 %v1694, %v1642
      %v1696 = vadd.f32 %v1695, %v1647
      %v1697 = vadd.f32 %v1696, %v1650
      %v1698 = vadd.f32 %v1697, %v1655
      %v1699 = vadd.f32 %v1698, %v1658
      %v1700 = vadd.f32 %v1699, %v1663
      %v1701 = vadd.f32 %v1700, %v1666
      %v1702 = vadd.f32 %v1701, %v1671
      %v1703 = vadd.f32 %v1702, %v1674
      %v1704 = vadd.f32 %v1703, %v1679
      %v1705 = vadd.f32 %v1704, %v1682
      %v1706 = vadd.f32 %v1705, %v1687
      %v1707 = vadd.f32 %v1706, %v1690
      %v1708 = vrot.slane %v1707, 4
      %v1709 = vadd.f32 %v1707, %v1708
      %v1710 = vrot.slane %v1709, 2
      %v1711 = vadd.f32 %v1709, %v1710
      %v1712 = vrot.slane %v1711, 1
      %v1713 = vadd.f32 %v1711, %v1712
      %v1714 = vmul.f32 %v1631, %v1631
      %v1715 = vmul.f32 %v1634, %v1634
      %v1716 = vmul.f32 %v1639, %v1639
      %v1717 = vmul.f32 %v1642, %v1642
      %v1718 = vmul.f32 %v1647, %v1647
      %v1719 = vmul.f32 %v1650, %v1650
      %v1720 = vmul.f32 %v1655, %v1655
      %v1721 = vmul.f32 %v1658, %v1658
      %v1722 = vmul.f32 %v1663, %v1663
      %v1723 = vmul.f32 %v1666, %v1666
      %v1724 = vmul.f32 %v1671, %v1671
      %v1725 = vmul.f32 %v1674, %v1674
      %v1726 = vmul.f32 %v1679, %v1679
      %v1727 = vmul.f32 %v1682, %v1682
      %v1728 = vmul.f32 %v1687, %v1687
      %v1729 = vmul.f32 %v1690, %v1690
      %v1730 = vadd.f32 %v1714, %v1715
      %v1731 = vadd.f32 %v1730, %v1716
      %v1732 = vadd.f32 %v1731, %v1717
      %v1733 = vadd.f32 %v1732, %v1718
      %v1734 = vadd.f32 %v1733, %v1719
      %v1735 = vadd.f32 %v1734, %v1720
      %v1736 = vadd.f32 %v1735, %v1721
      %v1737 = vadd.f32 %v1736, %v1722
      %v1738 = vadd.f32 %v1737, %v1723
      %v1739 = vadd.f32 %v1738, %v1724
      %v1740 = vadd.f32 %v1739, %v1725
      %v1741 = vadd.f32 %v1740, %v1726
      %v1742 = vadd.f32 %v1741, %v1727
      %v1743 = vadd.f32 %v1742, %v1728
      %v1744 = vadd.f32 %v1743, %v1729
      %v1745 = vrot.slane %v1744, 4
      %v1746 = vadd.f32 %v1744, %v1745
      %v1747 = vrot.slane %v1746, 2
      %v1748 = vadd.f32 %v1746, %v1747
      %v1749 = vrot.slane %v1748, 1
      %v1750 = vadd.f32 %v1748, %v1749
      %vm1751 = vcmask 1040384
      %v1752 = vsel %vm1751, %v1713, %v1750
      %1753 = vst [vmem:[%s284] sm:$0x3] %v1752
      %1754 = vst [vmem:[%s275] sm:$0xff] %v1631
      %1755 = vst [vmem:[%s275 + $0x8] sm:$0xff] %v1634
      %1756 = vst [vmem:[%s275 + $0x10] sm:$0xff] %v1639
      %1757 = vst [vmem:[%s275 + $0x18] sm:$0xff] %v1642
      %1758 = vst [vmem:[%s275 + $0x20] sm:$0xff] %v1647
      %1759 = vst [vmem:[%s275 + $0x28] sm:$0xff] %v1650
      %1760 = vst [vmem:[%s275 + $0x30] sm:$0xff] %v1655
      %1761 = vst [vmem:[%s275 + $0x38] sm:$0xff] %v1658
      %1762 = vst [vmem:[%s275 + $0x40] sm:$0xff] %v1663
      %1763 = vst [vmem:[%s275 + $0x48] sm:$0xff] %v1666
      %1764 = vst [vmem:[%s275 + $0x50] sm:$0xff] %v1671
      %1765 = vst [vmem:[%s275 + $0x58] sm:$0xff] %v1674
      %1766 = vst [vmem:[%s275 + $0x60] sm:$0xff] %v1679
      %1767 = vst [vmem:[%s275 + $0x68] sm:$0xff] %v1682
      %1768 = vst [vmem:[%s275 + $0x70] sm:$0xff] %v1687
      %1769 = vst [vmem:[%s275 + $0x78] sm:$0xff] %v1690
      %s1770 = smul.u32 8, %s22
      %p1771 = scmp.lt.s32.totalorder %s21, 1
      %s1772 = scalar_select %p1771, %s21, 1
      %p1773 = scmp.lt.s32.totalorder %s1770, 15
      %s1774 = scalar_select %p1773, %s1770, 15
      %s1775 = smul.addr %s1774, 2
      %s1776 = smul.addr %s1772, 32
      %s1777 = sadd.s32 %s1775, %s1776
      %s1778 = smul.addr %s1777, 8
      %s1779 = scalar_lea.vmem %s4, %s1778
      %p1780 = scmp.lt.s32.totalorder %s21, 1
      %s1781 = scalar_select %p1780, %s21, 1
      %p1782 = scmp.lt.s32.totalorder %s22, 1
      %s1783 = scalar_select %p1782, %s22, 1
      %s1784 = smul.addr %s1781, 2
      %s1785 = sadd.s32 %s1783, %s1784
      %s1786 = smul.addr %s1785, 2
      %s1787 = scalar_lea.vmem %s5, %s1786
      // Predicated region
      $region37: #{conv_block_forward.4} parent=35 // pred_check
        %p1788 = pneg %p140
      $region38: #{conv_block_forward.4} parent=35 // pred_check_branch
        %1790 = sbr.rel (%p1788) target = $region40
      $region39: #{conv_block_forward.4} parent=35 // pred_region
        %s1791 = smul.u32 8, %s22
      $region40: #{conv_block_forward.4} parent=35 // pred_fallthru
        _
      // Predicated region
      $region41: #{conv_block_forward.4} parent=35 // pred_check
        %p1792 = pneg %p168
      $region42: #{conv_block_forward.4} parent=35 // pred_check_branch
        %1794 = sbr.rel (%p1792) target = $region44
      $region43: #{conv_block_forward.4} parent=35 // pred_region
        _
      $region44: #{conv_block_forward.4} parent=35 // pred_fallthru
        _
    $region36: #{conv_block_forward.4} parent=5 // pred_fallthru
      _
    %p1795 = scmp.le.s32.totalorder 2, %s12
    // Predicated region
    $region45: #{conv_block_forward.4} parent=5 // pred_check
      %p1796 = pneg %p1795
    $region46: #{conv_block_forward.4} parent=5 // pred_check_branch
      %1798 = sbr.rel (%p1796) target = $region48
    $region47: #{conv_block_forward.4} parent=5 // pred_region
      %s1799 = ssub.s32 %s12, 2
      // Predicated region
      $region49: #{conv_block_forward.4} parent=47 // pred_check
        %p1800 = pneg %p146
      $region50: #{conv_block_forward.4} parent=47 // pred_check_branch
        %1802 = sbr.rel (%p1800) target = $region52
      $region51: #{conv_block_forward.4} parent=47 // pred_region
        %s1803 = smul.u32 8, %s24
        %p1804 = scmp.lt.s32.totalorder %s23, 1
        %s1805 = scalar_select %p1804, %s23, 1
        %p1806 = scmp.lt.s32.totalorder %s1803, 15
        %s1807 = scalar_select %p1806, %s1803, 15
        %s1808 = smul.addr %s1807, 2
        %s1809 = smul.addr %s1805, 32
        %s1810 = sadd.s32 %s1808, %s1809
        %s1811 = smul.addr %s1810, 8
        %s1812 = scalar_lea.vmem %s4, %s1811
      $region52: #{conv_block_forward.4} parent=47 // pred_fallthru
        _
      // Predicated region
      $region53: #{conv_block_forward.4} parent=47 // pred_check
        %p1813 = pneg %p174
      $region54: #{conv_block_forward.4} parent=47 // pred_check_branch
        %1815 = sbr.rel (%p1813) target = $region56
      $region55: #{conv_block_forward.4} parent=47 // pred_region
        %p1816 = scmp.lt.s32.totalorder %s23, 1
        %s1817 = scalar_select %p1816, %s23, 1
        %p1818 = scmp.lt.s32.totalorder %s24, 1
        %s1819 = scalar_select %p1818, %s24, 1
        %s1820 = smul.addr %s1817, 2
        %s1821 = sadd.s32 %s1819, %s1820
        %s1822 = smul.addr %s1821, 2
        %s1823 = scalar_lea.vmem %s5, %s1822
      $region56: #{conv_block_forward.4} parent=47 // pred_fallthru
        _
    $region48: #{conv_block_forward.4} parent=5 // pred_fallthru
      _
  $region6: #{conv_block_forward.4} parent=0 // loop_footer
    %s16 = sadd.s32 1, %s12
  $region7: #{conv_block_forward.4} parent=0 // loop_footer_branch
    %11 = sbr.rel target = $region3
  $region8: #{conv_block_forward.4} parent=0 // loop_exit
    _

// kernel: conv_block_forward.5
$region0: #{conv_block_forward.5}
  #allocation0 [shape = 'u32[]', space=smem, size = 0x4, offset = 0x4, fixed_abs, tag = 'smem constant byte address 0x4 - core index']
  #allocation1 [shape = 'u32[144,128]{1,0:T(1,128)}', space=vmem, size = 0x12000, scoped, tag = 'internal scratch']
  %s0 = inlined_call_operand.vmem [shape: f32[2,16,16,128], index: 0, kind: input, shape index: {}]
  %s1 = inlined_call_operand.vmem [shape: f32[1,128], index: 1, kind: input, shape index: {}]
  %s2 = inlined_call_operand.vmem [shape: f32[1,128], index: 2, kind: input, shape index: {}]
  %s3 = inlined_call_operand.vmem [shape: f32[2,16,16,128], index: 3, kind: output, shape index: {}]
  %s4 = sld [smem:[#allocation0]]
  $region45: #{conv_block_forward.5} parent=0
    _
  %s6 = ssub.s32 1, %s4
  %s7 = scalar_select 0, %s6, %s4
  loop: start=0, step=1, limit=6
  $region2: #{conv_block_forward.5} parent=0 // loop_pre_header
    _
  $region3: #{conv_block_forward.5} parent=0 // loop_header
    %s9 = sphi 0, %s13
    %p10 = scmp.ge.s32.totalorder %s9, 6
    %s16 = sphi 0, %s28
    %s17 = sphi 0, %s24
    %s18 = sphi 0, %s16
    %s19 = sphi 0, %s17
    %s20 = sphi 0, %s18
    %s21 = sphi 0, %s19
    %s33 = sphi 0, %s35
    %s36 = sphi 0, %s33
    %s37 = sphi 0, %s36
    %s53 = sphi 0, %s37
    %s57 = sphi 0, %s57
    %s59 = sphi 0, %s57
    %s60 = sphi 0, %s59
    %s74 = sphi 0, %s60
    %s78 = sphi 0, %s78
    %s80 = sphi 0, %s78
    %s81 = sphi 0, %s80
    %s95 = sphi 0, %s81
    %s103 = sphi 0, %s105
    %s106 = sphi 0, %s103
    %s107 = sphi 0, %s106
    %s123 = sphi 0, %s107
  $region4: #{conv_block_forward.5} parent=0 // loop_header_branch
    %12 = sbr.rel (%p10) target = $region8
  $region5: #{conv_block_forward.5} parent=0 // loop_body
    %s14 = ssub.s32 %s9, 1
    %s15 = ssub.s32 %s9, 2
    %s22 = sadd.s32 1, %s17
    %p23 = scmp.ge.s32.totalorder %s22, 2
    %s24 = scalar_select %p23, 0, %s22
    %s25 = sadd.s32 1, %s16
    %s26 = scalar_select %p23, %s25, %s16
    %p27 = scmp.ge.s32.totalorder %s26, 2
    %s28 = scalar_select %p27, 0, %s26
    %s29 = ssub.s32 %s16, %s28
    %s30 = ssub.s32 %s17, %s24
    %s31 = sor.u32 %s29, %s30
    %p32 = scmp.eq.s32.totalorder %s31, 0
    %s34 = sadd.s32 %s33, 1
    %s35 = scalar_select %p32, %s33, %s34
    %p38 = pneg %p32
    %p39 = scmp.eq.s32.totalorder %s9, 3
    %p40 = por %p38, %p39
    %p41 = scmp.ne.s32.totalorder %s33, %s36
    %p42 = scmp.eq.s32.totalorder %s9, 0
    %p43 = por %p41, %p42
    %p44 = scmp.ne.s32.totalorder %s33, %s36
    %p45 = scmp.eq.s32.totalorder %s14, 3
    %p46 = por %p44, %p45
    %p47 = scmp.ne.s32.totalorder %s36, %s37
    %p48 = scmp.eq.s32.totalorder %s14, 0
    %p49 = por %p47, %p48
    %p50 = scmp.ne.s32.totalorder %s36, %s37
    %p51 = scmp.eq.s32.totalorder %s15, 3
    %p52 = por %p50, %p51
    %p54 = scmp.ne.s32.totalorder %s37, %s53
    %p55 = scmp.eq.s32.totalorder %s15, 0
    %p56 = por %p54, %p55
    %s58 = sadd.s32 %s57, 1
    %p61 = scmp.eq.s32.totalorder %s9, 3
    %p62 = scmp.ne.s32.totalorder %s57, %s59
    %p63 = scmp.eq.s32.totalorder %s9, 0
    %p64 = por %p62, %p63
    %p65 = scmp.ne.s32.totalorder %s57, %s59
    %p66 = scmp.eq.s32.totalorder %s14, 3
    %p67 = por %p65, %p66
    %p68 = scmp.ne.s32.totalorder %s59, %s60
    %p69 = scmp.eq.s32.totalorder %s14, 0
    %p70 = por %p68, %p69
    %p71 = scmp.ne.s32.totalorder %s59, %s60
    %p72 = scmp.eq.s32.totalorder %s15, 3
    %p73 = por %p71, %p72
    %p75 = scmp.ne.s32.totalorder %s60, %s74
    %p76 = scmp.eq.s32.totalorder %s15, 0
    %p77 = por %p75, %p76
    %s79 = sadd.s32 %s78, 1
    %p82 = scmp.eq.s32.totalorder %s9, 3
    %p83 = scmp.ne.s32.totalorder %s78, %s80
    %p84 = scmp.eq.s32.totalorder %s9, 0
    %p85 = por %p83, %p84
    %p86 = scmp.ne.s32.totalorder %s78, %s80
    %p87 = scmp.eq.s32.totalorder %s14, 3
    %p88 = por %p86, %p87
    %p89 = scmp.ne.s32.totalorder %s80, %s81
    %p90 = scmp.eq.s32.totalorder %s14, 0
    %p91 = por %p89, %p90
    %p92 = scmp.ne.s32.totalorder %s80, %s81
    %p93 = scmp.eq.s32.totalorder %s15, 3
    %p94 = por %p92, %p93
    %p96 = scmp.ne.s32.totalorder %s81, %s95
    %p97 = scmp.eq.s32.totalorder %s15, 0
    %p98 = por %p96, %p97
    %s99 = ssub.s32 %s16, %s28
    %s100 = ssub.s32 %s17, %s24
    %s101 = sor.u32 %s99, %s100
    %p102 = scmp.eq.s32.totalorder %s101, 0
    %s104 = sadd.s32 %s103, 1
    %s105 = scalar_select %p102, %s103, %s104
    %p108 = pneg %p102
    %p109 = scmp.eq.s32.totalorder %s9, 3
    %p110 = por %p108, %p109
    %p111 = scmp.ne.s32.totalorder %s103, %s106
    %p112 = scmp.eq.s32.totalorder %s9, 0
    %p113 = por %p111, %p112
    %p114 = scmp.ne.s32.totalorder %s103, %s106
    %p115 = scmp.eq.s32.totalorder %s14, 3
    %p116 = por %p114, %p115
    %p117 = scmp.ne.s32.totalorder %s106, %s107
    %p118 = scmp.eq.s32.totalorder %s14, 0
    %p119 = por %p117, %p118
    %p120 = scmp.ne.s32.totalorder %s106, %s107
    %p121 = scmp.eq.s32.totalorder %s15, 3
    %p122 = por %p120, %p121
    %p124 = scmp.ne.s32.totalorder %s107, %s123
    %p125 = scmp.eq.s32.totalorder %s15, 0
    %p126 = por %p124, %p125
    %p127 = scmp.le.s32.totalorder 1, %s9
    %p128 = scmp.lt.s32.totalorder %s9, 5
    %p129 = pnand %p127, %p128
    %p130 = pneg %p129
    // Predicated region
    $region9: #{conv_block_forward.5} parent=5 // pred_check
      _
    $region10: #{conv_block_forward.5} parent=5 // pred_check_branch
      %132 = sbr.rel (%p129) target = $region12
    $region11: #{conv_block_forward.5} parent=5 // pred_region
      %s133 = ssub.s32 %s9, 1
      // Predicated region
      $region13: #{conv_block_forward.5} parent=11 // pred_check
        %p134 = pneg %p70
      $region14: #{conv_block_forward.5} parent=11 // pred_check_branch
        %136 = sbr.rel (%p134) target = $region16
      $region15: #{conv_block_forward.5} parent=11 // pred_region
        _
      $region16: #{conv_block_forward.5} parent=11 // pred_fallthru
        _
      // Predicated region
      $region17: #{conv_block_forward.5} parent=11 // pred_check
        %p137 = pneg %p91
      $region18: #{conv_block_forward.5} parent=11 // pred_check_branch
        %139 = sbr.rel (%p137) target = $region20
      $region19: #{conv_block_forward.5} parent=11 // pred_region
        _
      $region20: #{conv_block_forward.5} parent=11 // pred_fallthru
        _
    $region12: #{conv_block_forward.5} parent=5 // pred_fallthru
      _
    %p140 = scmp.lt.s32.totalorder %s9, 4
    // Predicated region
    $region21: #{conv_block_forward.5} parent=5 // pred_check
      %p141 = pneg %p140
    $region22: #{conv_block_forward.5} parent=5 // pred_check_branch
      %143 = sbr.rel (%p141) target = $region24
    $region23: #{conv_block_forward.5} parent=5 // pred_region
      // Predicated region
      $region25: #{conv_block_forward.5} parent=23 // pred_check
        %p144 = pneg %p43
      $region26: #{conv_block_forward.5} parent=23 // pred_check_branch
        %146 = sbr.rel (%p144) target = $region28
      $region27: #{conv_block_forward.5} parent=23 // pred_region
        %s147 = smul.u32 8, %s17
        %p148 = scmp.lt.s32.totalorder %s16, 1
        %s149 = scalar_select %p148, %s16, 1
        %p150 = scmp.lt.s32.totalorder %s147, 15
        %s151 = scalar_select %p150, %s147, 15
        %s152 = smul.addr %s151, 2
        %s153 = smul.addr %s149, 32
        %s154 = sadd.s32 %s152, %s153
        %s155 = smul.addr %s154, 8
        %s156 = scalar_lea.vmem %s0, %s155
        %s157 = smul.u32 8, %s17
      $region28: #{conv_block_forward.5} parent=23 // pred_fallthru
        _
    $region24: #{conv_block_forward.5} parent=5 // pred_fallthru
      _
    %p158 = scmp.le.s32.totalorder 1, %s9
    %p159 = scmp.lt.s32.totalorder %s9, 5
    %p160 = pnand %p158, %p159
    %p161 = pneg %p160
    // Predicated region
    $region29: #{conv_block_forward.5} parent=5 // pred_check
      _
    $region30: #{conv_block_forward.5} parent=5 // pred_check_branch
      %163 = sbr.rel (%p160) target = $region32
    $region31: #{conv_block_forward.5} parent=5 // pred_region
      %s164 = ssub.s32 %s9, 1
      %s165 = smul.u32 8, %s19
      %p166 = scmp.lt.s32.totalorder %s18, 1
      %s167 = scalar_select %p166, %s18, 1
      %p168 = scmp.lt.s32.totalorder %s165, 15
      %s169 = scalar_select %p168, %s165, 15
      %s170 = smul.addr %s169, 2
      %s171 = smul.addr %s167, 32
      %s172 = sadd.s32 %s170, %s171
      %s173 = smul.addr %s172, 8
      %s174 = scalar_lea.vmem %s0, %s173
      %p175 = pneg %p49
      %p176 = pneg %p46
      %p177 = pneg %p70
      %p178 = pneg %p67
      %p179 = pneg %p91
      %p180 = pneg %p88
      %p181 = pneg %p119
      %p182 = pneg %p116
      %s183 = smul.u32 8, %s19
      %p184 = scmp.lt.s32.totalorder %s18, 1
      %s185 = scalar_select %p184, %s18, 1
      %p186 = scmp.lt.s32.totalorder %s183, 15
      %s187 = scalar_select %p186, %s183, 15
      %s188 = smul.addr %s187, 2
      %s189 = smul.addr %s185, 32
      %s190 = sadd.s32 %s188, %s189
      %s191 = smul.addr %s190, 8
      %s192 = scalar_lea.vmem %s3, %s191
      %s193 = smul.u32 8, %s19
      %p194 = scmp.lt.s32.totalorder %s18, 1
      %s195 = scalar_select %p194, %s18, 1
      %p196 = scmp.lt.s32.totalorder %s193, 15
      %s197 = scalar_select %p196, %s193, 15
      %s198 = smul.addr %s197, 2
      %s199 = smul.addr %s195, 32
      %s200 = sadd.s32 %s198, %s199
      %s201 = smul.addr %s200, 8
      %s202 = scalar_lea.vmem %s0, %s201
      %s203 = smul.u32 8, %s19
      %s204 = smul.u32 8, %s19
      %p205 = scmp.lt.s32.totalorder %s18, 1
      %s206 = scalar_select %p205, %s18, 1
      %p207 = scmp.lt.s32.totalorder %s204, 15
      %s208 = scalar_select %p207, %s204, 15
      %s209 = smul.addr %s208, 2
      %s210 = smul.addr %s206, 32
      %s211 = sadd.s32 %s209, %s210
      %s212 = smul.addr %s211, 8
      %s213 = scalar_lea.vmem %s3, %s212
      %s214 = smul.u32 8, %s19
      %v215 = vld [vmem:[%s202] sm:$0xff]
      %v216 = vld [vmem:[%s202 + $0x8] sm:$0xff]
      %v217 = vld [vmem:[%s202 + $0x10] sm:$0xff]
      %v218 = vld [vmem:[%s202 + $0x18] sm:$0xff]
      %v219 = vld [vmem:[%s202 + $0x20] sm:$0xff]
      %v220 = vld [vmem:[%s202 + $0x28] sm:$0xff]
      %v221 = vld [vmem:[%s202 + $0x30] sm:$0xff]
      %v222 = vld [vmem:[%s202 + $0x38] sm:$0xff]
      %v223 = vld [vmem:[%s202 + $0x40] sm:$0xff]
      %v224 = vld [vmem:[%s202 + $0x48] sm:$0xff]
      %v225 = vld [vmem:[%s202 + $0x50] sm:$0xff]
      %v226 = vld [vmem:[%s202 + $0x58] sm:$0xff]
      %v227 = vld [vmem:[%s202 + $0x60] sm:$0xff]
      %v228 = vld [vmem:[%s202 + $0x68] sm:$0xff]
      %v229 = vld [vmem:[%s202 + $0x70] sm:$0xff]
      %v230 = vld [vmem:[%s202 + $0x78] sm:$0xff]
      %v231 = vld [vmem:[%s1] sm:$0x1]
      %v233 = vlaneseq
      %v234 = vshrl.u32 %v233, 7
      %v235 = vsub.s32 0, %v234
      %v236 = vrot.slane %v231, %v235
      %v238 = vmul.f32 %v215, %v236
      %v239 = vmul.f32 %v216, %v236
      %v240 = vmul.f32 %v217, %v236
      %v241 = vmul.f32 %v218, %v236
      %v242 = vmul.f32 %v219, %v236
      %v243 = vmul.f32 %v220, %v236
      %v244 = vmul.f32 %v221, %v236
      %v245 = vmul.f32 %v222, %v236
      %v246 = vmul.f32 %v223, %v236
      %v247 = vmul.f32 %v224, %v236
      %v248 = vmul.f32 %v225, %v236
      %v249 = vmul.f32 %v226, %v236
      %v250 = vmul.f32 %v227, %v236
      %v251 = vmul.f32 %v228, %v236
      %v252 = vmul.f32 %v229, %v236
      %v253 = vmul.f32 %v230, %v236
      %v254 = vld [vmem:[%s2] sm:$0x1]
      %v256 = vlaneseq
      %v257 = vshrl.u32 %v256, 7
      %v258 = vsub.s32 0, %v257
      %v259 = vrot.slane %v254, %v258
      %v261 = vadd.f32 %v238, %v259
      %v262 = vadd.f32 %v239, %v259
      %v263 = vadd.f32 %v240, %v259
      %v264 = vadd.f32 %v241, %v259
      %v265 = vadd.f32 %v242, %v259
      %v266 = vadd.f32 %v243, %v259
      %v267 = vadd.f32 %v244, %v259
      %v268 = vadd.f32 %v245, %v259
      %v269 = vadd.f32 %v246, %v259
      %v270 = vadd.f32 %v247, %v259
      %v271 = vadd.f32 %v248, %v259
      %v272 = vadd.f32 %v249, %v259
      %v273 = vadd.f32 %v250, %v259
      %v274 = vadd.f32 %v251, %v259
      %v275 = vadd.f32 %v252, %v259
      %v276 = vadd.f32 %v253, %v259
      %v277 = vmax.f32 %v261, 0.0
      %v278 = vmax.f32 %v262, 0.0
      %v279 = vmax.f32 %v263, 0.0
      %v280 = vmax.f32 %v264, 0.0
      %v281 = vmax.f32 %v265, 0.0
      %v282 = vmax.f32 %v266, 0.0
      %v283 = vmax.f32 %v267, 0.0
      %v284 = vmax.f32 %v268, 0.0
      %v285 = vmax.f32 %v269, 0.0
      %v286 = vmax.f32 %v270, 0.0
      %v287 = vmax.f32 %v271, 0.0
      %v288 = vmax.f32 %v272, 0.0
      %v289 = vmax.f32 %v273, 0.0
      %v290 = vmax.f32 %v274, 0.0
      %v291 = vmax.f32 %v275, 0.0
      %v292 = vmax.f32 %v276, 0.0
      %293 = vst [vmem:[%s213] sm:$0xff] %v277
      %294 = vst [vmem:[%s213 + $0x8] sm:$0xff] %v278
      %295 = vst [vmem:[%s213 + $0x10] sm:$0xff] %v279
      %296 = vst [vmem:[%s213 + $0x18] sm:$0xff] %v280
      %297 = vst [vmem:[%s213 + $0x20] sm:$0xff] %v281
      %298 = vst [vmem:[%s213 + $0x28] sm:$0xff] %v282
      %299 = vst [vmem:[%s213 + $0x30] sm:$0xff] %v283
      %300 = vst [vmem:[%s213 + $0x38] sm:$0xff] %v284
      %301 = vst [vmem:[%s213 + $0x40] sm:$0xff] %v285
      %302 = vst [vmem:[%s213 + $0x48] sm:$0xff] %v286
      %303 = vst [vmem:[%s213 + $0x50] sm:$0xff] %v287
      %304 = vst [vmem:[%s213 + $0x58] sm:$0xff] %v288
      %305 = vst [vmem:[%s213 + $0x60] sm:$0xff] %v289
      %306 = vst [vmem:[%s213 + $0x68] sm:$0xff] %v290
      %307 = vst [vmem:[%s213 + $0x70] sm:$0xff] %v291
      %308 = vst [vmem:[%s213 + $0x78] sm:$0xff] %v292
      %s309 = smul.u32 8, %s19
      %p310 = scmp.lt.s32.totalorder %s18, 1
      %s311 = scalar_select %p310, %s18, 1
      %p312 = scmp.lt.s32.totalorder %s309, 15
      %s313 = scalar_select %p312, %s309, 15
      %s314 = smul.addr %s313, 2
      %s315 = smul.addr %s311, 32
      %s316 = sadd.s32 %s314, %s315
      %s317 = smul.addr %s316, 8
      %s318 = scalar_lea.vmem %s3, %s317
      // Predicated region
      $region33: #{conv_block_forward.5} parent=31 // pred_check
        %p319 = pneg %p116
      $region34: #{conv_block_forward.5} parent=31 // pred_check_branch
        %321 = sbr.rel (%p319) target = $region36
      $region35: #{conv_block_forward.5} parent=31 // pred_region
        %s322 = smul.u32 8, %s19
      $region36: #{conv_block_forward.5} parent=31 // pred_fallthru
        _
    $region32: #{conv_block_forward.5} parent=5 // pred_fallthru
      _
    %p323 = scmp.le.s32.totalorder 2, %s9
    // Predicated region
    $region37: #{conv_block_forward.5} parent=5 // pred_check
      %p324 = pneg %p323
    $region38: #{conv_block_forward.5} parent=5 // pred_check_branch
      %326 = sbr.rel (%p324) target = $region40
    $region39: #{conv_block_forward.5} parent=5 // pred_region
      %s327 = ssub.s32 %s9, 2
      // Predicated region
      $region41: #{conv_block_forward.5} parent=39 // pred_check
        %p328 = pneg %p122
      $region42: #{conv_block_forward.5} parent=39 // pred_check_branch
        %330 = sbr.rel (%p328) target = $region44
      $region43: #{conv_block_forward.5} parent=39 // pred_region
        %s331 = smul.u32 8, %s21
        %p332 = scmp.lt.s32.totalorder %s20, 1
        %s333 = scalar_select %p332, %s20, 1
        %p334 = scmp.lt.s32.totalorder %s331, 15
        %s335 = scalar_select %p334, %s331, 15
        %s336 = smul.addr %s335, 2
        %s337 = smul.addr %s333, 32
        %s338 = sadd.s32 %s336, %s337
        %s339 = smul.addr %s338, 8
        %s340 = scalar_lea.vmem %s3, %s339
      $region44: #{conv_block_forward.5} parent=39 // pred_fallthru
        _
    $region40: #{conv_block_forward.5} parent=5 // pred_fallthru
      _
  $region6: #{conv_block_forward.5} parent=0 // loop_footer
    %s13 = sadd.s32 1, %s9
  $region7: #{conv_block_forward.5} parent=0 // loop_footer_branch
    %8 = sbr.rel target = $region3
  $region8: #{conv_block_forward.5} parent=0 // loop_exit
    _

</llo_original>
